<compile_context>
chip_gen: v7x
topology: tpu7x:2x2x1
jax: 0.10.0
libtpu: 0.0.40
codegen_flags: <defaults>
</compile_context>

<pallas_src>
import numpy as np
import jax
import jax.numpy as jnp
from jax.experimental import pallas as pl
from jax.experimental.pallas import tpu as pltpu

N_NODES = 8
N_EDGES = 16
HIDDEN = 32
EDGE_IN_D = 8
NODE_IN_D = 8
ATT_HEADS = 4
N_SCALES = 15      # coord2radialplus: scale = list(range(15))
N_ORDERS = 3       # coord2nforce: order = [2, 3, 4]
OUT_WIDTH = 128    # lane-dense output slab width

PARAM_ORDER = [
    # Ch_Pos_GCL
    'W_ch1_hr', 'W_ch1_hc', 'W_ch1_e', 'b_ch1', 'W_ch2', 'b_ch2',
    'W_pos1_np', 'W_pos1_rad', 'W_pos1_e', 'b_pos1', 'W_pos2', 'b_pos2',
    'W_sh1', 'b_sh1', 'W_sh2', 'b_sh2',
    'W_att', 'b_att',
    # Transformer_GCL (heads fused)
    'Wq_cat', 'Wk_cat', 'Wv_stack', 'W_to1', 'b_to1', 'W_to2', 'b_to2',
    # PTA_EGNN heads
    'W_pu1', 'b_pu1', 'W_pu2', 'b_pu2',
    'W_px1', 'b_px1', 'W_px2', 'b_px2',
    'W_ph1_h', 'W_ph1_na', 'W_ph1_m', 'b_ph1', 'W_ph2', 'b_ph2',
]

GRAPH_INPUTS = ['h', 'coord', 'init_coord', 'node_attr', 'edge_attr',
                'row_oh', 'col_oh', 'row_oh_t', 'row_oh_rep']
CONST_INPUTS = ['radial_scales', 'G3', 'G3T', 'G_att', 'head_expand',
                'tile_h', 'put3', 'put_h', 'put_c']
INPUT_ORDER = GRAPH_INPUTS + CONST_INPUTS + PARAM_ORDER


def _build_constants(n_nodes):
    """Tiny 0/1 selection / placement matrices (data movement done on the MXU)."""
    H, heads, W = HIDDEN, ATT_HEADS, OUT_WIDTH
    lane4h = np.arange(heads * H)
    segs = np.arange(n_nodes * heads)
    # head-sum: (q*k) @ G_att -> per-(node,head) replicated attention logits
    G_att = (lane4h[:, None] // H == segs[None, :] % heads).astype(np.float32)        # (4H, N*heads)
    # replicate per-(node,head) softmax weights back to 4H lanes
    head_expand = (segs[:, None] % heads == lane4h[None, :] // H).astype(np.float32)  # (N*heads, 4H)
    # tile z (E,H) -> (E,4H)
    tile_h = (lane4h[None, :] % H == np.arange(H)[:, None]).astype(np.float32)        # (H, 4H)

    l9 = np.arange(N_ORDERS * 3)
    G3 = (l9[:, None] // 3 == np.arange(N_ORDERS)[None, :]).astype(np.float32)        # (9, 3)
    G3T = np.ascontiguousarray(G3.T)                                                  # (3, 9)
    put3 = np.zeros((N_ORDERS, 3, N_ORDERS * 3), np.float32)                          # place (E,3) into order slot
    for a in range(N_ORDERS):
        for s in range(3):
            put3[a, s, a * 3 + s] = 1.0

    put_h = np.zeros((H, W), np.float32)
    put_h[np.arange(H), np.arange(H)] = 1.0                                           # h -> lanes [0, H)
    put_c = np.zeros((3, W), np.float32)
    put_c[np.arange(3), H + np.arange(3)] = 1.0                                       # coord -> lanes [H, H+3)

    radial_scales = np.array([-0.5 / (2.25 ** s) for s in range(N_SCALES)],
                             np.float32).reshape(1, N_SCALES)
    return dict(radial_scales=radial_scales, G3=G3, G3T=G3T, G_att=G_att,
                head_expand=head_expand, tile_h=tile_h, put3=put3,
                put_h=put_h, put_c=put_c)


def pta_egnn_kernel(*refs):
    r = dict(zip(INPUT_ORDER, refs))
    out_ref = refs[len(INPUT_ORDER)]

    f32 = jnp.float32
    H = HIDDEN
    silu = jax.nn.silu

    def mm(a, b):
        return jnp.dot(a, b, preferred_element_type=f32)

    h = r['h'][...]                     # (N, H)
    coord = r['coord'][...]             # (N, 3)
    init_coord = r['init_coord'][...]   # (N, 3)
    node_attr = r['node_attr'][...]     # (N, Dn)
    edge_attr = r['edge_attr'][...]     # (E, De)
    row_oh = r['row_oh'][...]           # (E, N)
    col_oh = r['col_oh'][...]           # (E, N)
    row_oh_t = r['row_oh_t'][...]       # (N, E)
    row_oh_rep = r['row_oh_rep'][...]   # (E, N*heads)
    radial_scales = r['radial_scales'][...]   # (1, 15)
    G3 = r['G3'][...]                   # (9, 3)
    G3T = r['G3T'][...]                 # (3, 9)
    G_att = r['G_att'][...]             # (4H, N*heads)
    head_expand = r['head_expand'][...] # (N*heads, 4H)
    tile_h = r['tile_h'][...]           # (H, 4H)
    put_h = r['put_h'][...]             # (H, OUT_WIDTH)
    put_c = r['put_c'][...]             # (3, OUT_WIDTH)

    # per-node in-edge counts, clamped (unsorted_segment_mean semantics)
    cnt = jnp.maximum(jnp.sum(row_oh_t, axis=1, keepdims=True), 1.0)   # (N, 1)
    inv_cnt = 1.0 / cnt

    # ---------------- geometry: coord2radialplus + coord2nforce + vec2product
    coord_row = mm(row_oh, coord)                       # (E, 3)
    coord_col = mm(col_oh, coord)                       # (E, 3)
    cdiff = coord_row - coord_col                       # raw coord diff
    r2 = jnp.sum(cdiff * cdiff, axis=1, keepdims=True)  # (E, 1)
    radial = jnp.exp(r2 * radial_scales)                # (E, 15)
    rnorm = jnp.sqrt(r2)                                # (E, 1)
    coord_diff = cdiff / (rnorm + 1e-8)                 # normalized (returned by coord2radialplus)

    inv_r = 1.0 / rnorm                                 # self-loops would be inf, as in torch
    p3 = inv_r * inv_r * inv_r                          # ||d||^-3  (alpha=2)
    p4 = p3 * inv_r                                     # ||d||^-4  (alpha=3)
    p5 = p4 * inv_r                                     # ||d||^-5  (alpha=4)
    ordered_all = (mm(cdiff * p3, r['put3'][0])
                   + mm(cdiff * p4, r['put3'][1])
                   + mm(cdiff * p5, r['put3'][2]))      # (E, 9) all 3 orders fused
    nforce = mm(row_oh_t, ordered_all) * inv_cnt        # (N, 9) segment mean
    nf_norm = jnp.sqrt(mm(nforce * nforce, G3)) + 1e-8  # (N, 3) per-order norms
    nvecs = nforce / mm(nf_norm, G3T)                   # (N, 9) normalized per order
    nprod = mm(mm(row_oh, nvecs) * mm(col_oh, nvecs), G3)   # (E, 3)

    # ---------------- Ch_Pos_GCL
    h_row = mm(row_oh, h)                               # (E, H)
    h_col = mm(col_oh, h)                               # (E, H)
    chem = silu(mm(h_row, r['W_ch1_hr'][...]) + mm(h_col, r['W_ch1_hc'][...])
                + mm(edge_attr, r['W_ch1_e'][...]) + r['b_ch1'][...])
    chem = mm(chem, r['W_ch2'][...]) + r['b_ch2'][...]                 # (E, H)

    pos = silu(mm(nprod, r['W_pos1_np'][...]) + mm(radial, r['W_pos1_rad'][...])
               + mm(edge_attr, r['W_pos1_e'][...]) + r['b_pos1'][...])
    pos = mm(pos, r['W_pos2'][...]) + r['b_pos2'][...]                 # (E, H)

    shallow = silu(mm(chem, r['W_sh1'][...]) + r['b_sh1'][...])
    shallow = mm(shallow, r['W_sh2'][...]) + r['b_sh2'][...]
    z = shallow * pos                                                  # (E, H)
    att_val = jax.nn.sigmoid(mm(z, r['W_att'][...]) + r['b_att'][...]) # (E, 1)
    z = z * att_val

    # ---------------- Transformer_GCL (all 4 heads fused, vectorized softmax)
    scale = 1.0 / float(np.sqrt(HIDDEN))
    q_all = mm(z, r['Wq_cat'][...])                     # (E, 4H)
    k_all = mm(z, r['Wk_cat'][...])                     # (E, 4H)
    qk = q_all * k_all * scale                          # (E, 4H)
    att_rep = mm(qk, G_att)                             # (E, N*heads): att[e,h] per (node,head) col
    mask = row_oh_rep > 0.0
    masked = jnp.where(mask, att_rep, -1e30)
    seg_max = jnp.max(masked, axis=0, keepdims=True)                   # (1, N*heads)
    e_w = jnp.where(mask, jnp.exp(att_rep - seg_max), 0.0)             # (E, N*heads)
    seg_den = jnp.maximum(jnp.sum(e_w, axis=0, keepdims=True), 1.0)    # (1, N*heads)
    w_flat = e_w / seg_den                                             # scatter_softmax weights
    w_rep = mm(w_flat, head_expand)                                    # (E, 4H)
    z_rep = mm(z, tile_h)                                              # (E, 4H) = [z|z|z|z]
    z_update = mm(z_rep * w_rep, r['Wv_stack'][...])                   # (E, H) = sum_h w_h*(z@Wv_h)
    m_e = silu(mm(z_update, r['W_to1'][...]) + r['b_to1'][...])
    m_e = mm(m_e, r['W_to2'][...]) + r['b_to2'][...]                   # (E, H)

    # ---------------- coordinate update
    pu = silu(mm(chem, r['W_pu1'][...]) + r['b_pu1'][...])
    pu = mm(pu, r['W_pu2'][...]) + r['b_pu2'][...]                     # (E, 1)
    px = silu(mm(pos, r['W_px1'][...]) + r['b_px1'][...])
    px = mm(px, r['W_px2'][...]) + r['b_px2'][...]                     # (E, 1)
    x_trans = coord_diff * (pu * px)                                   # (E, 3)
    x_agg = mm(row_oh_t, x_trans) * inv_cnt                            # (N, 3)
    ita = 0.2
    coord_new = ita * init_coord + (1.0 - ita) * coord + x_agg         # (N, 3)

    # ---------------- node feature update
    m_agg = mm(row_oh_t, m_e) * inv_cnt                                # (N, H)
    ph = silu(mm(h, r['W_ph1_h'][...]) + mm(node_attr, r['W_ph1_na'][...])
              + mm(m_agg, r['W_ph1_m'][...]) + r['b_ph1'][...])
    ph = mm(ph, r['W_ph2'][...]) + r['b_ph2'][...]                     # (N, H)
    beta = 0.2
    h_new = beta * h + (1.0 - beta) * ph                               # (N, H)

    # single lane-dense (N, 128) output slab: [h_new | coord_new | zero pad]
    out_ref[...] = mm(h_new, put_h) + mm(coord_new, put_c)


@jax.jit
def pta_egnn_forward(params, h, coord, edges, edge_attr, node_attr, init_coord):
    N = h.shape[0]
    row, col = edges[0], edges[1]
    row_oh = jax.nn.one_hot(row, N, dtype=jnp.float32)        # (E, N)
    col_oh = jax.nn.one_hot(col, N, dtype=jnp.float32)        # (E, N)
    row_oh_t = row_oh.T                                       # (N, E)
    row_oh_rep = jnp.repeat(row_oh, ATT_HEADS, axis=1)        # (E, N*heads)

    consts = {k: jnp.asarray(v) for k, v in _build_constants(N).items()}
    tensors = dict(h=h, coord=coord, init_coord=init_coord, node_attr=node_attr,
                   edge_attr=edge_attr, row_oh=row_oh, col_oh=col_oh,
                   row_oh_t=row_oh_t, row_oh_rep=row_oh_rep, **consts, **params)
    inputs = tuple(tensors[k] for k in INPUT_ORDER)

    slab = pl.pallas_call(
        pta_egnn_kernel,
        out_shape=jax.ShapeDtypeStruct((N, OUT_WIDTH), jnp.float32),
        in_specs=[pl.BlockSpec(memory_space=pltpu.MemorySpace.VMEM) for _ in inputs],
        out_specs=pl.BlockSpec(memory_space=pltpu.MemorySpace.VMEM),
    )(*inputs)
    return slab[:, :HIDDEN], slab[:, HIDDEN:HIDDEN + 3]


def init_params(key):
    H, De, Dn, heads = HIDDEN, EDGE_IN_D, NODE_IN_D, ATT_HEADS
    keys = iter(jax.random.split(key, 48))

    def w(shape, scale=0.1):
        return (scale * jax.random.normal(next(keys), shape)).astype(jnp.float32)

    return {
        'W_ch1_hr': w((H, H)), 'W_ch1_hc': w((H, H)), 'W_ch1_e': w((De, H)), 'b_ch1': w((1, H)),
        'W_ch2': w((H, H)), 'b_ch2': w((1, H)),
        'W_pos1_np': w((3, H)), 'W_pos1_rad': w((N_SCALES, H)), 'W_pos1_e': w((De, H)),
        'b_pos1': w((1, H)), 'W_pos2': w((H, H)), 'b_pos2': w((1, H)),
        'W_sh1': w((H, H)), 'b_sh1': w((1, H)), 'W_sh2': w((H, H)), 'b_sh2': w((1, H)),
        'W_att': w((H, 1)), 'b_att': w((1, 1)),
        'Wq_cat': w((H, heads * H)), 'Wk_cat': w((H, heads * H)), 'Wv_stack': w((heads * H, H)),
        'W_to1': w((H, H)), 'b_to1': w((1, H)), 'W_to2': w((H, H)), 'b_to2': w((1, H)),
        'W_pu1': w((H, H)), 'b_pu1': w((1, H)), 'W_pu2': w((H, 1)), 'b_pu2': w((1, 1)),
        'W_px1': w((H, H)), 'b_px1': w((1, H)), 'W_px2': w((H, 1)), 'b_px2': w((1, 1)),
        'W_ph1_h': w((H, H)), 'W_ph1_na': w((Dn, H)), 'W_ph1_m': w((H, H)), 'b_ph1': w((1, H)),
        'W_ph2': w((H, H)), 'b_ph2': w((1, H)),
    }


def _segment_mean(data, seg, n):
    s = jax.ops.segment_sum(data, seg, num_segments=n)
    c = jax.ops.segment_sum(jnp.ones_like(data), seg, num_segments=n)
    return s / jnp.maximum(c, 1.0)


def pta_egnn_reference(params, h, coord, edges, edge_attr, node_attr, init_coord):
    """Pure-JAX reference mirroring the PyTorch forward (eval mode)."""
    p = params
    H = HIDDEN
    N = h.shape[0]
    silu = jax.nn.silu
    row, col = edges[0], edges[1]

    # coord2radialplus
    cdiff = coord[row] - coord[col]
    r2 = jnp.sum(cdiff ** 2, axis=1, keepdims=True)
    radial = jnp.concatenate([jnp.exp(-0.5 / 2.25 ** s * r2) for s in range(N_SCALES)], axis=-1)
    norm = jnp.linalg.norm(cdiff, axis=-1, keepdims=True) + 1e-8
    coord_diff = cdiff / norm

    # coord2nforce
    nvecs = []
    for alpha in (2, 3, 4):
        onorm = jnp.linalg.norm(cdiff, axis=-1, keepdims=True) ** (-1.0 - alpha)
        nforce = _segment_mean(onorm * cdiff, row, N)
        nforce = nforce / (jnp.linalg.norm(nforce, axis=-1, keepdims=True) + 1e-8)
        nvecs.append(nforce)
    nvecs = jnp.stack(nvecs, axis=1)                       # (N, 3, 3)
    nprod = jnp.sum(nvecs[row] * nvecs[col], axis=-1)      # (E, 3)

    # Ch_Pos_GCL
    W_ch1 = jnp.concatenate([p['W_ch1_hr'], p['W_ch1_hc'], p['W_ch1_e']], axis=0)
    chem_in = jnp.concatenate([h[row], h[col], edge_attr], axis=1)
    chem = silu(chem_in @ W_ch1 + p['b_ch1']) @ p['W_ch2'] + p['b_ch2']
    W_pos1 = jnp.concatenate([p['W_pos1_np'], p['W_pos1_rad'], p['W_pos1_e']], axis=0)
    pos_in = jnp.concatenate([nprod, radial, edge_attr], axis=1)
    pos = silu(pos_in @ W_pos1 + p['b_pos1']) @ p['W_pos2'] + p['b_pos2']
    shallow = silu(chem @ p['W_sh1'] + p['b_sh1']) @ p['W_sh2'] + p['b_sh2']
    z = shallow * pos
    z = z * jax.nn.sigmoid(z @ p['W_att'] + p['b_att'])

    # Transformer_GCL
    z_update = jnp.zeros_like(z)
    scale = 1.0 / np.sqrt(H)
    for hh in range(ATT_HEADS):
        Wq = p['Wq_cat'][:, hh * H:(hh + 1) * H]
        Wk = p['Wk_cat'][:, hh * H:(hh + 1) * H]
        Wv = p['Wv_stack'][hh * H:(hh + 1) * H, :]
        q, k, v = z @ Wq, z @ Wk, z @ Wv
        att = jnp.sum(q * k, axis=1) * scale
        seg_max = jax.ops.segment_max(att, row, num_segments=N)
        e = jnp.exp(att - seg_max[row])
        den = jax.ops.segment_sum(e, row, num_segments=N)
        z_update = z_update + (e / den[row])[:, None] * v
    m = silu(z_update @ p['W_to1'] + p['b_to1']) @ p['W_to2'] + p['b_to2']

    # PTA_EGNN update
    pu = silu(chem @ p['W_pu1'] + p['b_pu1']) @ p['W_pu2'] + p['b_pu2']
    px = silu(pos @ p['W_px1'] + p['b_px1']) @ p['W_px2'] + p['b_px2']
    x_agg = _segment_mean(coord_diff * (pu * px), row, N)
    ita = 0.2
    coord_out = ita * init_coord + (1 - ita) * coord + x_agg

    m_agg = _segment_mean(m, row, N)
    W_ph1 = jnp.concatenate([p['W_ph1_h'], p['W_ph1_na'], p['W_ph1_m']], axis=0)
    m_all = jnp.concatenate([h, node_attr, m_agg], axis=-1)
    ph = silu(m_all @ W_ph1 + p['b_ph1']) @ p['W_ph2'] + p['b_ph2']
    beta = 0.2
    return beta * h + (1 - beta) * ph, coord_out


if __name__ == "__main__":
    key = jax.random.PRNGKey(0)
    k_h, k_c, k_r, k_o, k_ea, k_na, k_ic, k_p = jax.random.split(key, 8)

    h = jax.random.normal(k_h, (N_NODES, HIDDEN), jnp.float32)
    coord = jax.random.normal(k_c, (N_NODES, 3), jnp.float32)
    # edges without self-loops (self-loops would divide by zero in coord2nforce,
    # exactly as in the torch module)
    row = jax.random.randint(k_r, (N_EDGES,), 0, N_NODES, dtype=jnp.int32)
    off = jax.random.randint(k_o, (N_EDGES,), 1, N_NODES, dtype=jnp.int32)
    col = (row + off) % N_NODES
    edges = jnp.stack([row, col], axis=0)
    edge_attr = jax.random.normal(k_ea, (N_EDGES, EDGE_IN_D), jnp.float32)
    node_attr = jax.random.normal(k_na, (N_NODES, NODE_IN_D), jnp.float32)
    init_coord = jax.random.normal(k_ic, (N_NODES, 3), jnp.float32)
    params = init_params(k_p)

    h_out, coord_out = pta_egnn_forward(params, h, coord, edges, edge_attr,
                                        node_attr, init_coord)
    jax.block_until_ready((h_out, coord_out))

    ref_h, ref_coord = pta_egnn_reference(params, h, coord, edges, edge_attr,
                                          node_attr, init_coord)
    assert h_out.shape == (N_NODES, HIDDEN)
    assert coord_out.shape == (N_NODES, 3)
    assert jnp.allclose(h_out, ref_h, rtol=2e-2, atol=2e-2), "h mismatch"
    assert jnp.allclose(coord_out, ref_coord, rtol=2e-2, atol=2e-2), "coord mismatch"
    print("KERNEL_OK")
</pallas_src>

<mosaic_0001>
module attributes {stable_mosaic.version = 11 : i64} {
  func.func @pta_egnn_kernel(%arg0: memref<8x32xf32, #tpu.memory_space<vmem>>, %arg1: memref<8x3xf32, #tpu.memory_space<vmem>>, %arg2: memref<8x3xf32, #tpu.memory_space<vmem>>, %arg3: memref<8x8xf32, #tpu.memory_space<vmem>>, %arg4: memref<16x8xf32, #tpu.memory_space<vmem>>, %arg5: memref<16x8xf32, #tpu.memory_space<vmem>>, %arg6: memref<16x8xf32, #tpu.memory_space<vmem>>, %arg7: memref<8x16xf32, #tpu.memory_space<vmem>>, %arg8: memref<16x32xf32, #tpu.memory_space<vmem>>, %arg9: memref<1x15xf32, #tpu.memory_space<vmem>>, %arg10: memref<9x3xf32, #tpu.memory_space<vmem>>, %arg11: memref<3x9xf32, #tpu.memory_space<vmem>>, %arg12: memref<128x32xf32, #tpu.memory_space<vmem>>, %arg13: memref<32x128xf32, #tpu.memory_space<vmem>>, %arg14: memref<32x128xf32, #tpu.memory_space<vmem>>, %arg15: memref<3x3x9xf32, #tpu.memory_space<vmem>>, %arg16: memref<32x128xf32, #tpu.memory_space<vmem>>, %arg17: memref<3x128xf32, #tpu.memory_space<vmem>>, %arg18: memref<32x32xf32, #tpu.memory_space<vmem>>, %arg19: memref<32x32xf32, #tpu.memory_space<vmem>>, %arg20: memref<8x32xf32, #tpu.memory_space<vmem>>, %arg21: memref<1x32xf32, #tpu.memory_space<vmem>>, %arg22: memref<32x32xf32, #tpu.memory_space<vmem>>, %arg23: memref<1x32xf32, #tpu.memory_space<vmem>>, %arg24: memref<3x32xf32, #tpu.memory_space<vmem>>, %arg25: memref<15x32xf32, #tpu.memory_space<vmem>>, %arg26: memref<8x32xf32, #tpu.memory_space<vmem>>, %arg27: memref<1x32xf32, #tpu.memory_space<vmem>>, %arg28: memref<32x32xf32, #tpu.memory_space<vmem>>, %arg29: memref<1x32xf32, #tpu.memory_space<vmem>>, %arg30: memref<32x32xf32, #tpu.memory_space<vmem>>, %arg31: memref<1x32xf32, #tpu.memory_space<vmem>>, %arg32: memref<32x32xf32, #tpu.memory_space<vmem>>, %arg33: memref<1x32xf32, #tpu.memory_space<vmem>>, %arg34: memref<32x1xf32, #tpu.memory_space<vmem>>, %arg35: memref<1x1xf32, #tpu.memory_space<vmem>>, %arg36: memref<32x128xf32, #tpu.memory_space<vmem>>, %arg37: memref<32x128xf32, #tpu.memory_space<vmem>>, %arg38: memref<128x32xf32, #tpu.memory_space<vmem>>, %arg39: memref<32x32xf32, #tpu.memory_space<vmem>>, %arg40: memref<1x32xf32, #tpu.memory_space<vmem>>, %arg41: memref<32x32xf32, #tpu.memory_space<vmem>>, %arg42: memref<1x32xf32, #tpu.memory_space<vmem>>, %arg43: memref<32x32xf32, #tpu.memory_space<vmem>>, %arg44: memref<1x32xf32, #tpu.memory_space<vmem>>, %arg45: memref<32x1xf32, #tpu.memory_space<vmem>>, %arg46: memref<1x1xf32, #tpu.memory_space<vmem>>, %arg47: memref<32x32xf32, #tpu.memory_space<vmem>>, %arg48: memref<1x32xf32, #tpu.memory_space<vmem>>, %arg49: memref<32x1xf32, #tpu.memory_space<vmem>>, %arg50: memref<1x1xf32, #tpu.memory_space<vmem>>, %arg51: memref<32x32xf32, #tpu.memory_space<vmem>>, %arg52: memref<8x32xf32, #tpu.memory_space<vmem>>, %arg53: memref<32x32xf32, #tpu.memory_space<vmem>>, %arg54: memref<1x32xf32, #tpu.memory_space<vmem>>, %arg55: memref<32x32xf32, #tpu.memory_space<vmem>>, %arg56: memref<1x32xf32, #tpu.memory_space<vmem>>, %arg57: memref<8x128xf32, #tpu.memory_space<vmem>>) attributes {dimension_semantics = [], scalar_prefetch = 0 : i64, scratch_operands = 0 : i64, tpu.core_type = #tpu.core_type<tc>} {
    %c0 = arith.constant 0 : index
    %c0_0 = arith.constant 0 : index
    %0 = vector.load %arg0[%c0, %c0_0] : memref<8x32xf32, #tpu.memory_space<vmem>>, vector<8x32xf32>
    %c0_1 = arith.constant 0 : index
    %c0_2 = arith.constant 0 : index
    %1 = vector.load %arg1[%c0_1, %c0_2] : memref<8x3xf32, #tpu.memory_space<vmem>>, vector<8x3xf32>
    %c0_3 = arith.constant 0 : index
    %c0_4 = arith.constant 0 : index
    %2 = vector.load %arg2[%c0_3, %c0_4] : memref<8x3xf32, #tpu.memory_space<vmem>>, vector<8x3xf32>
    %c0_5 = arith.constant 0 : index
    %c0_6 = arith.constant 0 : index
    %3 = vector.load %arg3[%c0_5, %c0_6] : memref<8x8xf32, #tpu.memory_space<vmem>>, vector<8x8xf32>
    %c0_7 = arith.constant 0 : index
    %c0_8 = arith.constant 0 : index
    %4 = vector.load %arg4[%c0_7, %c0_8] : memref<16x8xf32, #tpu.memory_space<vmem>>, vector<16x8xf32>
    %c0_9 = arith.constant 0 : index
    %c0_10 = arith.constant 0 : index
    %5 = vector.load %arg5[%c0_9, %c0_10] : memref<16x8xf32, #tpu.memory_space<vmem>>, vector<16x8xf32>
    %c0_11 = arith.constant 0 : index
    %c0_12 = arith.constant 0 : index
    %6 = vector.load %arg6[%c0_11, %c0_12] : memref<16x8xf32, #tpu.memory_space<vmem>>, vector<16x8xf32>
    %c0_13 = arith.constant 0 : index
    %c0_14 = arith.constant 0 : index
    %7 = vector.load %arg7[%c0_13, %c0_14] : memref<8x16xf32, #tpu.memory_space<vmem>>, vector<8x16xf32>
    %c0_15 = arith.constant 0 : index
    %c0_16 = arith.constant 0 : index
    %8 = vector.load %arg8[%c0_15, %c0_16] : memref<16x32xf32, #tpu.memory_space<vmem>>, vector<16x32xf32>
    %c0_17 = arith.constant 0 : index
    %c0_18 = arith.constant 0 : index
    %9 = vector.load %arg9[%c0_17, %c0_18] : memref<1x15xf32, #tpu.memory_space<vmem>>, vector<1x15xf32>
    %c0_19 = arith.constant 0 : index
    %c0_20 = arith.constant 0 : index
    %10 = vector.load %arg10[%c0_19, %c0_20] : memref<9x3xf32, #tpu.memory_space<vmem>>, vector<9x3xf32>
    %c0_21 = arith.constant 0 : index
    %c0_22 = arith.constant 0 : index
    %11 = vector.load %arg11[%c0_21, %c0_22] : memref<3x9xf32, #tpu.memory_space<vmem>>, vector<3x9xf32>
    %c0_23 = arith.constant 0 : index
    %c0_24 = arith.constant 0 : index
    %12 = vector.load %arg12[%c0_23, %c0_24] : memref<128x32xf32, #tpu.memory_space<vmem>>, vector<128x32xf32>
    %c0_25 = arith.constant 0 : index
    %c0_26 = arith.constant 0 : index
    %13 = vector.load %arg13[%c0_25, %c0_26] : memref<32x128xf32, #tpu.memory_space<vmem>>, vector<32x128xf32>
    %c0_27 = arith.constant 0 : index
    %c0_28 = arith.constant 0 : index
    %14 = vector.load %arg14[%c0_27, %c0_28] : memref<32x128xf32, #tpu.memory_space<vmem>>, vector<32x128xf32>
    %c0_29 = arith.constant 0 : index
    %c0_30 = arith.constant 0 : index
    %15 = vector.load %arg16[%c0_29, %c0_30] : memref<32x128xf32, #tpu.memory_space<vmem>>, vector<32x128xf32>
    %c0_31 = arith.constant 0 : index
    %c0_32 = arith.constant 0 : index
    %16 = vector.load %arg17[%c0_31, %c0_32] : memref<3x128xf32, #tpu.memory_space<vmem>>, vector<3x128xf32>
    %cst = arith.constant dense<0.000000e+00> : vector<8xf32>
    %17 = vector.multi_reduction <add>, %7, %cst [1] : vector<8x16xf32> to vector<8xf32>
    %18 = vector.shape_cast %17 : vector<8xf32> to vector<8x1xf32>
    %cst_33 = arith.constant 1.000000e+00 : f32
    %19 = vector.broadcast %cst_33 : f32 to vector<8x1xf32>
    %20 = arith.maximumf %18, %19 : vector<8x1xf32>
    %cst_34 = arith.constant 1.000000e+00 : f32
    %21 = vector.broadcast %cst_34 : f32 to vector<8x1xf32>
    %22 = arith.divf %21, %20 : vector<8x1xf32>
    %cst_35 = arith.constant dense<0.000000e+00> : vector<16x3xf32>
    %23 = tpu.matmul %5, %1, %cst_35 {dimension_numbers = #tpu.dot_dimension_numbers<[1], [0], [0], [1], [0, 0, 1, 1], [], []>} : vector<16x8xf32>, vector<8x3xf32>, vector<16x3xf32> -> vector<16x3xf32>
    %cst_36 = arith.constant dense<0.000000e+00> : vector<16x3xf32>
    %24 = tpu.matmul %6, %1, %cst_36 {dimension_numbers = #tpu.dot_dimension_numbers<[1], [0], [0], [1], [0, 0, 1, 1], [], []>} : vector<16x8xf32>, vector<8x3xf32>, vector<16x3xf32> -> vector<16x3xf32>
    %25 = arith.subf %23, %24 : vector<16x3xf32>
    %26 = arith.mulf %25, %25 : vector<16x3xf32>
    %cst_37 = arith.constant dense<0.000000e+00> : vector<16xf32>
    %27 = vector.multi_reduction <add>, %26, %cst_37 [1] : vector<16x3xf32> to vector<16xf32>
    %28 = vector.shape_cast %27 : vector<16xf32> to vector<16x1xf32>
    %29 = vector.broadcast %28 : vector<16x1xf32> to vector<16x15xf32>
    %30 = vector.broadcast %9 : vector<1x15xf32> to vector<16x15xf32>
    %31 = arith.mulf %29, %30 : vector<16x15xf32>
    %32 = math.exp %31 : vector<16x15xf32>
    %33 = math.sqrt %28 : vector<16x1xf32>
    %cst_38 = arith.constant 9.99999993E-9 : f32
    %34 = vector.broadcast %cst_38 : f32 to vector<16x1xf32>
    %35 = arith.addf %33, %34 : vector<16x1xf32>
    %36 = vector.broadcast %35 : vector<16x1xf32> to vector<16x3xf32>
    %37 = arith.divf %25, %36 : vector<16x3xf32>
    %cst_39 = arith.constant 1.000000e+00 : f32
    %38 = vector.broadcast %cst_39 : f32 to vector<16x1xf32>
    %39 = arith.divf %38, %33 : vector<16x1xf32>
    %40 = arith.mulf %39, %39 : vector<16x1xf32>
    %41 = arith.mulf %40, %39 : vector<16x1xf32>
    %42 = arith.mulf %41, %39 : vector<16x1xf32>
    %43 = arith.mulf %42, %39 : vector<16x1xf32>
    %44 = vector.broadcast %41 : vector<16x1xf32> to vector<16x3xf32>
    %45 = arith.mulf %25, %44 : vector<16x3xf32>
    %c0_40 = arith.constant 0 : index
    %c0_41 = arith.constant 0 : index
    %c0_42 = arith.constant 0 : index
    %46 = vector.load %arg15[%c0_40, %c0_41, %c0_42] : memref<3x3x9xf32, #tpu.memory_space<vmem>>, vector<1x3x9xf32>
    %47 = vector.shape_cast %46 : vector<1x3x9xf32> to vector<3x9xf32>
    %cst_43 = arith.constant dense<0.000000e+00> : vector<16x9xf32>
    %48 = tpu.matmul %45, %47, %cst_43 {dimension_numbers = #tpu.dot_dimension_numbers<[1], [0], [0], [1], [0, 0, 1, 1], [], []>} : vector<16x3xf32>, vector<3x9xf32>, vector<16x9xf32> -> vector<16x9xf32>
    %49 = vector.broadcast %42 : vector<16x1xf32> to vector<16x3xf32>
    %50 = arith.mulf %25, %49 : vector<16x3xf32>
    %c1 = arith.constant 1 : index
    %c0_44 = arith.constant 0 : index
    %c0_45 = arith.constant 0 : index
    %51 = vector.load %arg15[%c1, %c0_44, %c0_45] : memref<3x3x9xf32, #tpu.memory_space<vmem>>, vector<1x3x9xf32>
    %52 = vector.shape_cast %51 : vector<1x3x9xf32> to vector<3x9xf32>
    %cst_46 = arith.constant dense<0.000000e+00> : vector<16x9xf32>
    %53 = tpu.matmul %50, %52, %cst_46 {dimension_numbers = #tpu.dot_dimension_numbers<[1], [0], [0], [1], [0, 0, 1, 1], [], []>} : vector<16x3xf32>, vector<3x9xf32>, vector<16x9xf32> -> vector<16x9xf32>
    %54 = arith.addf %48, %53 : vector<16x9xf32>
    %55 = vector.broadcast %43 : vector<16x1xf32> to vector<16x3xf32>
    %56 = arith.mulf %25, %55 : vector<16x3xf32>
    %c2 = arith.constant 2 : index
    %c0_47 = arith.constant 0 : index
    %c0_48 = arith.constant 0 : index
    %57 = vector.load %arg15[%c2, %c0_47, %c0_48] : memref<3x3x9xf32, #tpu.memory_space<vmem>>, vector<1x3x9xf32>
    %58 = vector.shape_cast %57 : vector<1x3x9xf32> to vector<3x9xf32>
    %cst_49 = arith.constant dense<0.000000e+00> : vector<16x9xf32>
    %59 = tpu.matmul %56, %58, %cst_49 {dimension_numbers = #tpu.dot_dimension_numbers<[1], [0], [0], [1], [0, 0, 1, 1], [], []>} : vector<16x3xf32>, vector<3x9xf32>, vector<16x9xf32> -> vector<16x9xf32>
    %60 = arith.addf %54, %59 : vector<16x9xf32>
    %cst_50 = arith.constant dense<0.000000e+00> : vector<8x9xf32>
    %61 = tpu.matmul %7, %60, %cst_50 {dimension_numbers = #tpu.dot_dimension_numbers<[1], [0], [0], [1], [0, 0, 1, 1], [], []>} : vector<8x16xf32>, vector<16x9xf32>, vector<8x9xf32> -> vector<8x9xf32>
    %62 = vector.broadcast %22 : vector<8x1xf32> to vector<8x9xf32>
    %63 = arith.mulf %61, %62 : vector<8x9xf32>
    %64 = arith.mulf %63, %63 : vector<8x9xf32>
    %cst_51 = arith.constant dense<0.000000e+00> : vector<8x3xf32>
    %65 = tpu.matmul %64, %10, %cst_51 {dimension_numbers = #tpu.dot_dimension_numbers<[1], [0], [0], [1], [0, 0, 1, 1], [], []>} : vector<8x9xf32>, vector<9x3xf32>, vector<8x3xf32> -> vector<8x3xf32>
    %66 = math.sqrt %65 : vector<8x3xf32>
    %cst_52 = arith.constant 9.99999993E-9 : f32
    %67 = vector.broadcast %cst_52 : f32 to vector<8x3xf32>
    %68 = arith.addf %66, %67 : vector<8x3xf32>
    %cst_53 = arith.constant dense<0.000000e+00> : vector<8x9xf32>
    %69 = tpu.matmul %68, %11, %cst_53 {dimension_numbers = #tpu.dot_dimension_numbers<[1], [0], [0], [1], [0, 0, 1, 1], [], []>} : vector<8x3xf32>, vector<3x9xf32>, vector<8x9xf32> -> vector<8x9xf32>
    %70 = arith.divf %63, %69 : vector<8x9xf32>
    %cst_54 = arith.constant dense<0.000000e+00> : vector<16x9xf32>
    %71 = tpu.matmul %5, %70, %cst_54 {dimension_numbers = #tpu.dot_dimension_numbers<[1], [0], [0], [1], [0, 0, 1, 1], [], []>} : vector<16x8xf32>, vector<8x9xf32>, vector<16x9xf32> -> vector<16x9xf32>
    %cst_55 = arith.constant dense<0.000000e+00> : vector<16x9xf32>
    %72 = tpu.matmul %6, %70, %cst_55 {dimension_numbers = #tpu.dot_dimension_numbers<[1], [0], [0], [1], [0, 0, 1, 1], [], []>} : vector<16x8xf32>, vector<8x9xf32>, vector<16x9xf32> -> vector<16x9xf32>
    %73 = arith.mulf %71, %72 : vector<16x9xf32>
    %cst_56 = arith.constant dense<0.000000e+00> : vector<16x3xf32>
    %74 = tpu.matmul %73, %10, %cst_56 {dimension_numbers = #tpu.dot_dimension_numbers<[1], [0], [0], [1], [0, 0, 1, 1], [], []>} : vector<16x9xf32>, vector<9x3xf32>, vector<16x3xf32> -> vector<16x3xf32>
    %cst_57 = arith.constant dense<0.000000e+00> : vector<16x32xf32>
    %75 = tpu.matmul %5, %0, %cst_57 {dimension_numbers = #tpu.dot_dimension_numbers<[1], [0], [0], [1], [0, 0, 1, 1], [], []>} : vector<16x8xf32>, vector<8x32xf32>, vector<16x32xf32> -> vector<16x32xf32>
    %cst_58 = arith.constant dense<0.000000e+00> : vector<16x32xf32>
    %76 = tpu.matmul %6, %0, %cst_58 {dimension_numbers = #tpu.dot_dimension_numbers<[1], [0], [0], [1], [0, 0, 1, 1], [], []>} : vector<16x8xf32>, vector<8x32xf32>, vector<16x32xf32> -> vector<16x32xf32>
    %c0_59 = arith.constant 0 : index
    %c0_60 = arith.constant 0 : index
    %77 = vector.load %arg18[%c0_59, %c0_60] : memref<32x32xf32, #tpu.memory_space<vmem>>, vector<32x32xf32>
    %cst_61 = arith.constant dense<0.000000e+00> : vector<16x32xf32>
    %78 = tpu.matmul %75, %77, %cst_61 {dimension_numbers = #tpu.dot_dimension_numbers<[1], [0], [0], [1], [0, 0, 1, 1], [], []>} : vector<16x32xf32>, vector<32x32xf32>, vector<16x32xf32> -> vector<16x32xf32>
    %c0_62 = arith.constant 0 : index
    %c0_63 = arith.constant 0 : index
    %79 = vector.load %arg19[%c0_62, %c0_63] : memref<32x32xf32, #tpu.memory_space<vmem>>, vector<32x32xf32>
    %cst_64 = arith.constant dense<0.000000e+00> : vector<16x32xf32>
    %80 = tpu.matmul %76, %79, %cst_64 {dimension_numbers = #tpu.dot_dimension_numbers<[1], [0], [0], [1], [0, 0, 1, 1], [], []>} : vector<16x32xf32>, vector<32x32xf32>, vector<16x32xf32> -> vector<16x32xf32>
    %81 = arith.addf %78, %80 : vector<16x32xf32>
    %c0_65 = arith.constant 0 : index
    %c0_66 = arith.constant 0 : index
    %82 = vector.load %arg20[%c0_65, %c0_66] : memref<8x32xf32, #tpu.memory_space<vmem>>, vector<8x32xf32>
    %cst_67 = arith.constant dense<0.000000e+00> : vector<16x32xf32>
    %83 = tpu.matmul %4, %82, %cst_67 {dimension_numbers = #tpu.dot_dimension_numbers<[1], [0], [0], [1], [0, 0, 1, 1], [], []>} : vector<16x8xf32>, vector<8x32xf32>, vector<16x32xf32> -> vector<16x32xf32>
    %84 = arith.addf %81, %83 : vector<16x32xf32>
    %c0_68 = arith.constant 0 : index
    %c0_69 = arith.constant 0 : index
    %85 = vector.load %arg21[%c0_68, %c0_69] : memref<1x32xf32, #tpu.memory_space<vmem>>, vector<1x32xf32>
    %86 = vector.broadcast %85 : vector<1x32xf32> to vector<16x32xf32>
    %87 = arith.addf %84, %86 : vector<16x32xf32>
    %88 = arith.negf %87 : vector<16x32xf32>
    %89 = math.exp %88 : vector<16x32xf32>
    %cst_70 = arith.constant 1.000000e+00 : f32
    %90 = vector.broadcast %cst_70 : f32 to vector<16x32xf32>
    %91 = arith.addf %90, %89 : vector<16x32xf32>
    %92 = arith.divf %90, %91 : vector<16x32xf32>
    %93 = arith.mulf %87, %92 : vector<16x32xf32>
    %c0_71 = arith.constant 0 : index
    %c0_72 = arith.constant 0 : index
    %94 = vector.load %arg22[%c0_71, %c0_72] : memref<32x32xf32, #tpu.memory_space<vmem>>, vector<32x32xf32>
    %cst_73 = arith.constant dense<0.000000e+00> : vector<16x32xf32>
    %95 = tpu.matmul %93, %94, %cst_73 {dimension_numbers = #tpu.dot_dimension_numbers<[1], [0], [0], [1], [0, 0, 1, 1], [], []>} : vector<16x32xf32>, vector<32x32xf32>, vector<16x32xf32> -> vector<16x32xf32>
    %c0_74 = arith.constant 0 : index
    %c0_75 = arith.constant 0 : index
    %96 = vector.load %arg23[%c0_74, %c0_75] : memref<1x32xf32, #tpu.memory_space<vmem>>, vector<1x32xf32>
    %97 = vector.broadcast %96 : vector<1x32xf32> to vector<16x32xf32>
    %98 = arith.addf %95, %97 : vector<16x32xf32>
    %c0_76 = arith.constant 0 : index
    %c0_77 = arith.constant 0 : index
    %99 = vector.load %arg24[%c0_76, %c0_77] : memref<3x32xf32, #tpu.memory_space<vmem>>, vector<3x32xf32>
    %cst_78 = arith.constant dense<0.000000e+00> : vector<16x32xf32>
    %100 = tpu.matmul %74, %99, %cst_78 {dimension_numbers = #tpu.dot_dimension_numbers<[1], [0], [0], [1], [0, 0, 1, 1], [], []>} : vector<16x3xf32>, vector<3x32xf32>, vector<16x32xf32> -> vector<16x32xf32>
    %c0_79 = arith.constant 0 : index
    %c0_80 = arith.constant 0 : index
    %101 = vector.load %arg25[%c0_79, %c0_80] : memref<15x32xf32, #tpu.memory_space<vmem>>, vector<15x32xf32>
    %cst_81 = arith.constant dense<0.000000e+00> : vector<16x32xf32>
    %102 = tpu.matmul %32, %101, %cst_81 {dimension_numbers = #tpu.dot_dimension_numbers<[1], [0], [0], [1], [0, 0, 1, 1], [], []>} : vector<16x15xf32>, vector<15x32xf32>, vector<16x32xf32> -> vector<16x32xf32>
    %103 = arith.addf %100, %102 : vector<16x32xf32>
    %c0_82 = arith.constant 0 : index
    %c0_83 = arith.constant 0 : index
    %104 = vector.load %arg26[%c0_82, %c0_83] : memref<8x32xf32, #tpu.memory_space<vmem>>, vector<8x32xf32>
    %cst_84 = arith.constant dense<0.000000e+00> : vector<16x32xf32>
    %105 = tpu.matmul %4, %104, %cst_84 {dimension_numbers = #tpu.dot_dimension_numbers<[1], [0], [0], [1], [0, 0, 1, 1], [], []>} : vector<16x8xf32>, vector<8x32xf32>, vector<16x32xf32> -> vector<16x32xf32>
    %106 = arith.addf %103, %105 : vector<16x32xf32>
    %c0_85 = arith.constant 0 : index
    %c0_86 = arith.constant 0 : index
    %107 = vector.load %arg27[%c0_85, %c0_86] : memref<1x32xf32, #tpu.memory_space<vmem>>, vector<1x32xf32>
    %108 = vector.broadcast %107 : vector<1x32xf32> to vector<16x32xf32>
    %109 = arith.addf %106, %108 : vector<16x32xf32>
    %110 = arith.negf %109 : vector<16x32xf32>
    %111 = math.exp %110 : vector<16x32xf32>
    %cst_87 = arith.constant 1.000000e+00 : f32
    %112 = vector.broadcast %cst_87 : f32 to vector<16x32xf32>
    %113 = arith.addf %112, %111 : vector<16x32xf32>
    %114 = arith.divf %112, %113 : vector<16x32xf32>
    %115 = arith.mulf %109, %114 : vector<16x32xf32>
    %c0_88 = arith.constant 0 : index
    %c0_89 = arith.constant 0 : index
    %116 = vector.load %arg28[%c0_88, %c0_89] : memref<32x32xf32, #tpu.memory_space<vmem>>, vector<32x32xf32>
    %cst_90 = arith.constant dense<0.000000e+00> : vector<16x32xf32>
    %117 = tpu.matmul %115, %116, %cst_90 {dimension_numbers = #tpu.dot_dimension_numbers<[1], [0], [0], [1], [0, 0, 1, 1], [], []>} : vector<16x32xf32>, vector<32x32xf32>, vector<16x32xf32> -> vector<16x32xf32>
    %c0_91 = arith.constant 0 : index
    %c0_92 = arith.constant 0 : index
    %118 = vector.load %arg29[%c0_91, %c0_92] : memref<1x32xf32, #tpu.memory_space<vmem>>, vector<1x32xf32>
    %119 = vector.broadcast %118 : vector<1x32xf32> to vector<16x32xf32>
    %120 = arith.addf %117, %119 : vector<16x32xf32>
    %c0_93 = arith.constant 0 : index
    %c0_94 = arith.constant 0 : index
    %121 = vector.load %arg30[%c0_93, %c0_94] : memref<32x32xf32, #tpu.memory_space<vmem>>, vector<32x32xf32>
    %cst_95 = arith.constant dense<0.000000e+00> : vector<16x32xf32>
    %122 = tpu.matmul %98, %121, %cst_95 {dimension_numbers = #tpu.dot_dimension_numbers<[1], [0], [0], [1], [0, 0, 1, 1], [], []>} : vector<16x32xf32>, vector<32x32xf32>, vector<16x32xf32> -> vector<16x32xf32>
    %c0_96 = arith.constant 0 : index
    %c0_97 = arith.constant 0 : index
    %123 = vector.load %arg31[%c0_96, %c0_97] : memref<1x32xf32, #tpu.memory_space<vmem>>, vector<1x32xf32>
    %124 = vector.broadcast %123 : vector<1x32xf32> to vector<16x32xf32>
    %125 = arith.addf %122, %124 : vector<16x32xf32>
    %126 = arith.negf %125 : vector<16x32xf32>
    %127 = math.exp %126 : vector<16x32xf32>
    %cst_98 = arith.constant 1.000000e+00 : f32
    %128 = vector.broadcast %cst_98 : f32 to vector<16x32xf32>
    %129 = arith.addf %128, %127 : vector<16x32xf32>
    %130 = arith.divf %128, %129 : vector<16x32xf32>
    %131 = arith.mulf %125, %130 : vector<16x32xf32>
    %c0_99 = arith.constant 0 : index
    %c0_100 = arith.constant 0 : index
    %132 = vector.load %arg32[%c0_99, %c0_100] : memref<32x32xf32, #tpu.memory_space<vmem>>, vector<32x32xf32>
    %cst_101 = arith.constant dense<0.000000e+00> : vector<16x32xf32>
    %133 = tpu.matmul %131, %132, %cst_101 {dimension_numbers = #tpu.dot_dimension_numbers<[1], [0], [0], [1], [0, 0, 1, 1], [], []>} : vector<16x32xf32>, vector<32x32xf32>, vector<16x32xf32> -> vector<16x32xf32>
    %c0_102 = arith.constant 0 : index
    %c0_103 = arith.constant 0 : index
    %134 = vector.load %arg33[%c0_102, %c0_103] : memref<1x32xf32, #tpu.memory_space<vmem>>, vector<1x32xf32>
    %135 = vector.broadcast %134 : vector<1x32xf32> to vector<16x32xf32>
    %136 = arith.addf %133, %135 : vector<16x32xf32>
    %137 = arith.mulf %136, %120 : vector<16x32xf32>
    %c0_104 = arith.constant 0 : index
    %c0_105 = arith.constant 0 : index
    %138 = vector.load %arg34[%c0_104, %c0_105] : memref<32x1xf32, #tpu.memory_space<vmem>>, vector<32x1xf32>
    %cst_106 = arith.constant dense<0.000000e+00> : vector<16x1xf32>
    %139 = tpu.matmul %137, %138, %cst_106 {dimension_numbers = #tpu.dot_dimension_numbers<[1], [0], [0], [1], [0, 0, 1, 1], [], []>} : vector<16x32xf32>, vector<32x1xf32>, vector<16x1xf32> -> vector<16x1xf32>
    %c0_107 = arith.constant 0 : index
    %c0_108 = arith.constant 0 : index
    %140 = vector.load %arg35[%c0_107, %c0_108] : memref<1x1xf32, #tpu.memory_space<vmem>>, vector<1x1xf32>
    %141 = vector.broadcast %140 : vector<1x1xf32> to vector<16x1xf32>
    %142 = arith.addf %139, %141 : vector<16x1xf32>
    %143 = arith.negf %142 : vector<16x1xf32>
    %144 = math.exp %143 : vector<16x1xf32>
    %cst_109 = arith.constant 1.000000e+00 : f32
    %145 = vector.broadcast %cst_109 : f32 to vector<16x1xf32>
    %146 = arith.addf %145, %144 : vector<16x1xf32>
    %147 = arith.divf %145, %146 : vector<16x1xf32>
    %148 = vector.broadcast %147 : vector<16x1xf32> to vector<16x32xf32>
    %149 = arith.mulf %137, %148 : vector<16x32xf32>
    %c0_110 = arith.constant 0 : index
    %c0_111 = arith.constant 0 : index
    %150 = vector.load %arg36[%c0_110, %c0_111] : memref<32x128xf32, #tpu.memory_space<vmem>>, vector<32x128xf32>
    %cst_112 = arith.constant dense<0.000000e+00> : vector<16x128xf32>
    %151 = tpu.matmul %149, %150, %cst_112 {dimension_numbers = #tpu.dot_dimension_numbers<[1], [0], [0], [1], [0, 0, 1, 1], [], []>} : vector<16x32xf32>, vector<32x128xf32>, vector<16x128xf32> -> vector<16x128xf32>
    %c0_113 = arith.constant 0 : index
    %c0_114 = arith.constant 0 : index
    %152 = vector.load %arg37[%c0_113, %c0_114] : memref<32x128xf32, #tpu.memory_space<vmem>>, vector<32x128xf32>
    %cst_115 = arith.constant dense<0.000000e+00> : vector<16x128xf32>
    %153 = tpu.matmul %149, %152, %cst_115 {dimension_numbers = #tpu.dot_dimension_numbers<[1], [0], [0], [1], [0, 0, 1, 1], [], []>} : vector<16x32xf32>, vector<32x128xf32>, vector<16x128xf32> -> vector<16x128xf32>
    %154 = arith.mulf %151, %153 : vector<16x128xf32>
    %cst_116 = arith.constant 0.176776692 : f32
    %155 = vector.broadcast %cst_116 : f32 to vector<16x128xf32>
    %156 = arith.mulf %154, %155 : vector<16x128xf32>
    %cst_117 = arith.constant dense<0.000000e+00> : vector<16x32xf32>
    %157 = tpu.matmul %156, %12, %cst_117 {dimension_numbers = #tpu.dot_dimension_numbers<[1], [0], [0], [1], [0, 0, 1, 1], [], []>} : vector<16x128xf32>, vector<128x32xf32>, vector<16x32xf32> -> vector<16x32xf32>
    %cst_118 = arith.constant 0.000000e+00 : f32
    %158 = vector.broadcast %cst_118 : f32 to vector<16x32xf32>
    %159 = arith.cmpf ogt, %8, %158 : vector<16x32xf32>
    %cst_119 = arith.constant -1.000000e+30 : f32
    %160 = vector.broadcast %cst_119 : f32 to vector<16x32xf32>
    %161 = arith.select %159, %157, %160 : vector<16x32xi1>, vector<16x32xf32>
    %cst_120 = arith.constant dense<0xFF800000> : vector<32xf32>
    %162 = vector.multi_reduction <maximumf>, %161, %cst_120 [0] : vector<16x32xf32> to vector<32xf32>
    %163 = vector.shape_cast %162 : vector<32xf32> to vector<1x32xf32>
    %164 = vector.broadcast %163 : vector<1x32xf32> to vector<16x32xf32>
    %165 = arith.subf %157, %164 : vector<16x32xf32>
    %166 = math.exp %165 : vector<16x32xf32>
    %cst_121 = arith.constant 0.000000e+00 : f32
    %167 = vector.broadcast %cst_121 : f32 to vector<16x32xf32>
    %168 = arith.select %159, %166, %167 : vector<16x32xi1>, vector<16x32xf32>
    %cst_122 = arith.constant dense<0.000000e+00> : vector<32xf32>
    %169 = vector.multi_reduction <add>, %168, %cst_122 [0] : vector<16x32xf32> to vector<32xf32>
    %170 = vector.shape_cast %169 : vector<32xf32> to vector<1x32xf32>
    %cst_123 = arith.constant 1.000000e+00 : f32
    %171 = vector.broadcast %cst_123 : f32 to vector<1x32xf32>
    %172 = arith.maximumf %170, %171 : vector<1x32xf32>
    %173 = vector.broadcast %172 : vector<1x32xf32> to vector<16x32xf32>
    %174 = arith.divf %168, %173 : vector<16x32xf32>
    %cst_124 = arith.constant dense<0.000000e+00> : vector<16x128xf32>
    %175 = tpu.matmul %174, %13, %cst_124 {dimension_numbers = #tpu.dot_dimension_numbers<[1], [0], [0], [1], [0, 0, 1, 1], [], []>} : vector<16x32xf32>, vector<32x128xf32>, vector<16x128xf32> -> vector<16x128xf32>
    %cst_125 = arith.constant dense<0.000000e+00> : vector<16x128xf32>
    %176 = tpu.matmul %149, %14, %cst_125 {dimension_numbers = #tpu.dot_dimension_numbers<[1], [0], [0], [1], [0, 0, 1, 1], [], []>} : vector<16x32xf32>, vector<32x128xf32>, vector<16x128xf32> -> vector<16x128xf32>
    %177 = arith.mulf %176, %175 : vector<16x128xf32>
    %c0_126 = arith.constant 0 : index
    %c0_127 = arith.constant 0 : index
    %178 = vector.load %arg38[%c0_126, %c0_127] : memref<128x32xf32, #tpu.memory_space<vmem>>, vector<128x32xf32>
    %cst_128 = arith.constant dense<0.000000e+00> : vector<16x32xf32>
    %179 = tpu.matmul %177, %178, %cst_128 {dimension_numbers = #tpu.dot_dimension_numbers<[1], [0], [0], [1], [0, 0, 1, 1], [], []>} : vector<16x128xf32>, vector<128x32xf32>, vector<16x32xf32> -> vector<16x32xf32>
    %c0_129 = arith.constant 0 : index
    %c0_130 = arith.constant 0 : index
    %180 = vector.load %arg39[%c0_129, %c0_130] : memref<32x32xf32, #tpu.memory_space<vmem>>, vector<32x32xf32>
    %cst_131 = arith.constant dense<0.000000e+00> : vector<16x32xf32>
    %181 = tpu.matmul %179, %180, %cst_131 {dimension_numbers = #tpu.dot_dimension_numbers<[1], [0], [0], [1], [0, 0, 1, 1], [], []>} : vector<16x32xf32>, vector<32x32xf32>, vector<16x32xf32> -> vector<16x32xf32>
    %c0_132 = arith.constant 0 : index
    %c0_133 = arith.constant 0 : index
    %182 = vector.load %arg40[%c0_132, %c0_133] : memref<1x32xf32, #tpu.memory_space<vmem>>, vector<1x32xf32>
    %183 = vector.broadcast %182 : vector<1x32xf32> to vector<16x32xf32>
    %184 = arith.addf %181, %183 : vector<16x32xf32>
    %185 = arith.negf %184 : vector<16x32xf32>
    %186 = math.exp %185 : vector<16x32xf32>
    %cst_134 = arith.constant 1.000000e+00 : f32
    %187 = vector.broadcast %cst_134 : f32 to vector<16x32xf32>
    %188 = arith.addf %187, %186 : vector<16x32xf32>
    %189 = arith.divf %187, %188 : vector<16x32xf32>
    %190 = arith.mulf %184, %189 : vector<16x32xf32>
    %c0_135 = arith.constant 0 : index
    %c0_136 = arith.constant 0 : index
    %191 = vector.load %arg41[%c0_135, %c0_136] : memref<32x32xf32, #tpu.memory_space<vmem>>, vector<32x32xf32>
    %cst_137 = arith.constant dense<0.000000e+00> : vector<16x32xf32>
    %192 = tpu.matmul %190, %191, %cst_137 {dimension_numbers = #tpu.dot_dimension_numbers<[1], [0], [0], [1], [0, 0, 1, 1], [], []>} : vector<16x32xf32>, vector<32x32xf32>, vector<16x32xf32> -> vector<16x32xf32>
    %c0_138 = arith.constant 0 : index
    %c0_139 = arith.constant 0 : index
    %193 = vector.load %arg42[%c0_138, %c0_139] : memref<1x32xf32, #tpu.memory_space<vmem>>, vector<1x32xf32>
    %194 = vector.broadcast %193 : vector<1x32xf32> to vector<16x32xf32>
    %195 = arith.addf %192, %194 : vector<16x32xf32>
    %c0_140 = arith.constant 0 : index
    %c0_141 = arith.constant 0 : index
    %196 = vector.load %arg43[%c0_140, %c0_141] : memref<32x32xf32, #tpu.memory_space<vmem>>, vector<32x32xf32>
    %cst_142 = arith.constant dense<0.000000e+00> : vector<16x32xf32>
    %197 = tpu.matmul %98, %196, %cst_142 {dimension_numbers = #tpu.dot_dimension_numbers<[1], [0], [0], [1], [0, 0, 1, 1], [], []>} : vector<16x32xf32>, vector<32x32xf32>, vector<16x32xf32> -> vector<16x32xf32>
    %c0_143 = arith.constant 0 : index
    %c0_144 = arith.constant 0 : index
    %198 = vector.load %arg44[%c0_143, %c0_144] : memref<1x32xf32, #tpu.memory_space<vmem>>, vector<1x32xf32>
    %199 = vector.broadcast %198 : vector<1x32xf32> to vector<16x32xf32>
    %200 = arith.addf %197, %199 : vector<16x32xf32>
    %201 = arith.negf %200 : vector<16x32xf32>
    %202 = math.exp %201 : vector<16x32xf32>
    %cst_145 = arith.constant 1.000000e+00 : f32
    %203 = vector.broadcast %cst_145 : f32 to vector<16x32xf32>
    %204 = arith.addf %203, %202 : vector<16x32xf32>
    %205 = arith.divf %203, %204 : vector<16x32xf32>
    %206 = arith.mulf %200, %205 : vector<16x32xf32>
    %c0_146 = arith.constant 0 : index
    %c0_147 = arith.constant 0 : index
    %207 = vector.load %arg45[%c0_146, %c0_147] : memref<32x1xf32, #tpu.memory_space<vmem>>, vector<32x1xf32>
    %cst_148 = arith.constant dense<0.000000e+00> : vector<16x1xf32>
    %208 = tpu.matmul %206, %207, %cst_148 {dimension_numbers = #tpu.dot_dimension_numbers<[1], [0], [0], [1], [0, 0, 1, 1], [], []>} : vector<16x32xf32>, vector<32x1xf32>, vector<16x1xf32> -> vector<16x1xf32>
    %c0_149 = arith.constant 0 : index
    %c0_150 = arith.constant 0 : index
    %209 = vector.load %arg46[%c0_149, %c0_150] : memref<1x1xf32, #tpu.memory_space<vmem>>, vector<1x1xf32>
    %210 = vector.broadcast %209 : vector<1x1xf32> to vector<16x1xf32>
    %211 = arith.addf %208, %210 : vector<16x1xf32>
    %c0_151 = arith.constant 0 : index
    %c0_152 = arith.constant 0 : index
    %212 = vector.load %arg47[%c0_151, %c0_152] : memref<32x32xf32, #tpu.memory_space<vmem>>, vector<32x32xf32>
    %cst_153 = arith.constant dense<0.000000e+00> : vector<16x32xf32>
    %213 = tpu.matmul %120, %212, %cst_153 {dimension_numbers = #tpu.dot_dimension_numbers<[1], [0], [0], [1], [0, 0, 1, 1], [], []>} : vector<16x32xf32>, vector<32x32xf32>, vector<16x32xf32> -> vector<16x32xf32>
    %c0_154 = arith.constant 0 : index
    %c0_155 = arith.constant 0 : index
    %214 = vector.load %arg48[%c0_154, %c0_155] : memref<1x32xf32, #tpu.memory_space<vmem>>, vector<1x32xf32>
    %215 = vector.broadcast %214 : vector<1x32xf32> to vector<16x32xf32>
    %216 = arith.addf %213, %215 : vector<16x32xf32>
    %217 = arith.negf %216 : vector<16x32xf32>
    %218 = math.exp %217 : vector<16x32xf32>
    %cst_156 = arith.constant 1.000000e+00 : f32
    %219 = vector.broadcast %cst_156 : f32 to vector<16x32xf32>
    %220 = arith.addf %219, %218 : vector<16x32xf32>
    %221 = arith.divf %219, %220 : vector<16x32xf32>
    %222 = arith.mulf %216, %221 : vector<16x32xf32>
    %c0_157 = arith.constant 0 : index
    %c0_158 = arith.constant 0 : index
    %223 = vector.load %arg49[%c0_157, %c0_158] : memref<32x1xf32, #tpu.memory_space<vmem>>, vector<32x1xf32>
    %cst_159 = arith.constant dense<0.000000e+00> : vector<16x1xf32>
    %224 = tpu.matmul %222, %223, %cst_159 {dimension_numbers = #tpu.dot_dimension_numbers<[1], [0], [0], [1], [0, 0, 1, 1], [], []>} : vector<16x32xf32>, vector<32x1xf32>, vector<16x1xf32> -> vector<16x1xf32>
    %c0_160 = arith.constant 0 : index
    %c0_161 = arith.constant 0 : index
    %225 = vector.load %arg50[%c0_160, %c0_161] : memref<1x1xf32, #tpu.memory_space<vmem>>, vector<1x1xf32>
    %226 = vector.broadcast %225 : vector<1x1xf32> to vector<16x1xf32>
    %227 = arith.addf %224, %226 : vector<16x1xf32>
    %228 = arith.mulf %211, %227 : vector<16x1xf32>
    %229 = vector.broadcast %228 : vector<16x1xf32> to vector<16x3xf32>
    %230 = arith.mulf %37, %229 : vector<16x3xf32>
    %cst_162 = arith.constant dense<0.000000e+00> : vector<8x3xf32>
    %231 = tpu.matmul %7, %230, %cst_162 {dimension_numbers = #tpu.dot_dimension_numbers<[1], [0], [0], [1], [0, 0, 1, 1], [], []>} : vector<8x16xf32>, vector<16x3xf32>, vector<8x3xf32> -> vector<8x3xf32>
    %232 = vector.broadcast %22 : vector<8x1xf32> to vector<8x3xf32>
    %233 = arith.mulf %231, %232 : vector<8x3xf32>
    %cst_163 = arith.constant 2.000000e-01 : f32
    %234 = vector.broadcast %cst_163 : f32 to vector<8x3xf32>
    %235 = arith.mulf %234, %2 : vector<8x3xf32>
    %cst_164 = arith.constant 8.000000e-01 : f32
    %236 = vector.broadcast %cst_164 : f32 to vector<8x3xf32>
    %237 = arith.mulf %236, %1 : vector<8x3xf32>
    %238 = arith.addf %235, %237 : vector<8x3xf32>
    %239 = arith.addf %238, %233 : vector<8x3xf32>
    %cst_165 = arith.constant dense<0.000000e+00> : vector<8x32xf32>
    %240 = tpu.matmul %7, %195, %cst_165 {dimension_numbers = #tpu.dot_dimension_numbers<[1], [0], [0], [1], [0, 0, 1, 1], [], []>} : vector<8x16xf32>, vector<16x32xf32>, vector<8x32xf32> -> vector<8x32xf32>
    %241 = vector.broadcast %22 : vector<8x1xf32> to vector<8x32xf32>
    %242 = arith.mulf %240, %241 : vector<8x32xf32>
    %c0_166 = arith.constant 0 : index
    %c0_167 = arith.constant 0 : index
    %243 = vector.load %arg51[%c0_166, %c0_167] : memref<32x32xf32, #tpu.memory_space<vmem>>, vector<32x32xf32>
    %cst_168 = arith.constant dense<0.000000e+00> : vector<8x32xf32>
    %244 = tpu.matmul %0, %243, %cst_168 {dimension_numbers = #tpu.dot_dimension_numbers<[1], [0], [0], [1], [0, 0, 1, 1], [], []>} : vector<8x32xf32>, vector<32x32xf32>, vector<8x32xf32> -> vector<8x32xf32>
    %c0_169 = arith.constant 0 : index
    %c0_170 = arith.constant 0 : index
    %245 = vector.load %arg52[%c0_169, %c0_170] : memref<8x32xf32, #tpu.memory_space<vmem>>, vector<8x32xf32>
    %cst_171 = arith.constant dense<0.000000e+00> : vector<8x32xf32>
    %246 = tpu.matmul %3, %245, %cst_171 {dimension_numbers = #tpu.dot_dimension_numbers<[1], [0], [0], [1], [0, 0, 1, 1], [], []>} : vector<8x8xf32>, vector<8x32xf32>, vector<8x32xf32> -> vector<8x32xf32>
    %247 = arith.addf %244, %246 : vector<8x32xf32>
    %c0_172 = arith.constant 0 : index
    %c0_173 = arith.constant 0 : index
    %248 = vector.load %arg53[%c0_172, %c0_173] : memref<32x32xf32, #tpu.memory_space<vmem>>, vector<32x32xf32>
    %cst_174 = arith.constant dense<0.000000e+00> : vector<8x32xf32>
    %249 = tpu.matmul %242, %248, %cst_174 {dimension_numbers = #tpu.dot_dimension_numbers<[1], [0], [0], [1], [0, 0, 1, 1], [], []>} : vector<8x32xf32>, vector<32x32xf32>, vector<8x32xf32> -> vector<8x32xf32>
    %250 = arith.addf %247, %249 : vector<8x32xf32>
    %c0_175 = arith.constant 0 : index
    %c0_176 = arith.constant 0 : index
    %251 = vector.load %arg54[%c0_175, %c0_176] : memref<1x32xf32, #tpu.memory_space<vmem>>, vector<1x32xf32>
    %252 = vector.broadcast %251 : vector<1x32xf32> to vector<8x32xf32>
    %253 = arith.addf %250, %252 : vector<8x32xf32>
    %254 = arith.negf %253 : vector<8x32xf32>
    %255 = math.exp %254 : vector<8x32xf32>
    %cst_177 = arith.constant 1.000000e+00 : f32
    %256 = vector.broadcast %cst_177 : f32 to vector<8x32xf32>
    %257 = arith.addf %256, %255 : vector<8x32xf32>
    %258 = arith.divf %256, %257 : vector<8x32xf32>
    %259 = arith.mulf %253, %258 : vector<8x32xf32>
    %c0_178 = arith.constant 0 : index
    %c0_179 = arith.constant 0 : index
    %260 = vector.load %arg55[%c0_178, %c0_179] : memref<32x32xf32, #tpu.memory_space<vmem>>, vector<32x32xf32>
    %cst_180 = arith.constant dense<0.000000e+00> : vector<8x32xf32>
    %261 = tpu.matmul %259, %260, %cst_180 {dimension_numbers = #tpu.dot_dimension_numbers<[1], [0], [0], [1], [0, 0, 1, 1], [], []>} : vector<8x32xf32>, vector<32x32xf32>, vector<8x32xf32> -> vector<8x32xf32>
    %c0_181 = arith.constant 0 : index
    %c0_182 = arith.constant 0 : index
    %262 = vector.load %arg56[%c0_181, %c0_182] : memref<1x32xf32, #tpu.memory_space<vmem>>, vector<1x32xf32>
    %263 = vector.broadcast %262 : vector<1x32xf32> to vector<8x32xf32>
    %264 = arith.addf %261, %263 : vector<8x32xf32>
    %cst_183 = arith.constant 2.000000e-01 : f32
    %265 = vector.broadcast %cst_183 : f32 to vector<8x32xf32>
    %266 = arith.mulf %265, %0 : vector<8x32xf32>
    %cst_184 = arith.constant 8.000000e-01 : f32
    %267 = vector.broadcast %cst_184 : f32 to vector<8x32xf32>
    %268 = arith.mulf %267, %264 : vector<8x32xf32>
    %269 = arith.addf %266, %268 : vector<8x32xf32>
    %cst_185 = arith.constant dense<0.000000e+00> : vector<8x128xf32>
    %270 = tpu.matmul %269, %15, %cst_185 {dimension_numbers = #tpu.dot_dimension_numbers<[1], [0], [0], [1], [0, 0, 1, 1], [], []>} : vector<8x32xf32>, vector<32x128xf32>, vector<8x128xf32> -> vector<8x128xf32>
    %cst_186 = arith.constant dense<0.000000e+00> : vector<8x128xf32>
    %271 = tpu.matmul %239, %16, %cst_186 {dimension_numbers = #tpu.dot_dimension_numbers<[1], [0], [0], [1], [0, 0, 1, 1], [], []>} : vector<8x3xf32>, vector<3x128xf32>, vector<8x128xf32> -> vector<8x128xf32>
    %272 = arith.addf %270, %271 : vector<8x128xf32>
    %c0_187 = arith.constant 0 : index
    %c0_188 = arith.constant 0 : index
    %273 = vector.load %arg57[%c0_187, %c0_188] : memref<8x128xf32, #tpu.memory_space<vmem>>, vector<8x128xf32>
    tpu.vector_store %arg57[%c0_187, %c0_188], %272 {strides = array<i32>} : memref<8x128xf32, #tpu.memory_space<vmem>>, vector<8x128xf32>,
    return
  }
}

</mosaic_0001>

<llo_original>
// kernel: pta_egnn_forward.1
$region0: #{pta_egnn_forward.1}
  #allocation0 [shape = 'u32[]', space=smem, size = 0x4, offset = 0x4, fixed_abs, tag = 'smem constant byte address 0x4 - core index']
  #allocation1 [shape = 'u32[144,128]{1,0:T(1,128)}', space=vmem, size = 0x12000, scoped, tag = 'internal scratch']
  #allocation2 [shape = 'f32[1,1]{1,0:T(1,128)S(1)}', space=vmem, size = 0x200, scoped, tag = 'scoped memory for pta_egnn_forward.1']
  #allocation3 [shape = 'f32[1,1]{1,0:T(1,128)S(1)}', space=vmem, size = 0x200, scoped, tag = 'scoped memory for pta_egnn_forward.1']
  #allocation4 [shape = 'f32[1,1]{1,0:T(1,128)S(1)}', space=vmem, size = 0x200, scoped, tag = 'scoped memory for pta_egnn_forward.1']
  %s0 = inlined_call_operand.smem [shape: u32[58], index: -1, kind: input, shape index: {}]
  %s1 = sld [smem:[%s0]]
  %s2 = scalar_lea.smem %s0, 1
  %s3 = sld [smem:[%s2]]
  %s4 = scalar_lea.smem %s0, 2
  %s5 = sld [smem:[%s4]]
  %s6 = scalar_lea.smem %s0, 3
  %s7 = sld [smem:[%s6]]
  %s8 = scalar_lea.smem %s0, 4
  %s9 = sld [smem:[%s8]]
  %s10 = scalar_lea.smem %s0, 5
  %s11 = sld [smem:[%s10]]
  %s12 = scalar_lea.smem %s0, 6
  %s13 = sld [smem:[%s12]]
  %s14 = scalar_lea.smem %s0, 7
  %s15 = sld [smem:[%s14]]
  %s16 = scalar_lea.smem %s0, 8
  %s17 = sld [smem:[%s16]]
  %s18 = scalar_lea.smem %s0, 9
  %s19 = sld [smem:[%s18]]
  %s20 = scalar_lea.smem %s0, 10
  %s21 = sld [smem:[%s20]]
  %s22 = scalar_lea.smem %s0, 11
  %s23 = sld [smem:[%s22]]
  %s24 = scalar_lea.smem %s0, 12
  %s25 = sld [smem:[%s24]]
  %s26 = scalar_lea.smem %s0, 13
  %s27 = sld [smem:[%s26]]
  %s28 = scalar_lea.smem %s0, 14
  %s29 = sld [smem:[%s28]]
  %s30 = scalar_lea.smem %s0, 15
  %s31 = sld [smem:[%s30]]
  %s32 = scalar_lea.smem %s0, 16
  %s33 = sld [smem:[%s32]]
  %s34 = scalar_lea.smem %s0, 17
  %s35 = sld [smem:[%s34]]
  %s36 = scalar_lea.smem %s0, 18
  %s37 = sld [smem:[%s36]]
  %s38 = scalar_lea.smem %s0, 19
  %s39 = sld [smem:[%s38]]
  %s40 = scalar_lea.smem %s0, 20
  %s41 = sld [smem:[%s40]]
  %s42 = scalar_lea.smem %s0, 21
  %s43 = sld [smem:[%s42]]
  %s44 = scalar_lea.smem %s0, 22
  %s45 = sld [smem:[%s44]]
  %s46 = scalar_lea.smem %s0, 23
  %s47 = sld [smem:[%s46]]
  %s48 = scalar_lea.smem %s0, 24
  %s49 = sld [smem:[%s48]]
  %s50 = scalar_lea.smem %s0, 25
  %s51 = sld [smem:[%s50]]
  %s52 = scalar_lea.smem %s0, 26
  %s53 = sld [smem:[%s52]]
  %s54 = scalar_lea.smem %s0, 27
  %s55 = sld [smem:[%s54]]
  %s56 = scalar_lea.smem %s0, 28
  %s57 = sld [smem:[%s56]]
  %s58 = scalar_lea.smem %s0, 29
  %s59 = sld [smem:[%s58]]
  %s60 = scalar_lea.smem %s0, 30
  %s61 = sld [smem:[%s60]]
  %s62 = scalar_lea.smem %s0, 31
  %s63 = sld [smem:[%s62]]
  %s64 = scalar_lea.smem %s0, 32
  %s65 = sld [smem:[%s64]]
  %s66 = scalar_lea.smem %s0, 33
  %s67 = sld [smem:[%s66]]
  %s68 = scalar_lea.smem %s0, 34
  %s69 = sld [smem:[%s68]]
  %s70 = scalar_lea.smem %s0, 35
  %s71 = sld [smem:[%s70]]
  %s72 = scalar_lea.smem %s0, 36
  %s73 = sld [smem:[%s72]]
  %s74 = scalar_lea.smem %s0, 37
  %s75 = sld [smem:[%s74]]
  %s76 = scalar_lea.smem %s0, 38
  %s77 = sld [smem:[%s76]]
  %s78 = scalar_lea.smem %s0, 39
  %s79 = sld [smem:[%s78]]
  %s80 = scalar_lea.smem %s0, 40
  %s81 = sld [smem:[%s80]]
  %s82 = scalar_lea.smem %s0, 41
  %s83 = sld [smem:[%s82]]
  %s84 = scalar_lea.smem %s0, 42
  %s85 = sld [smem:[%s84]]
  %s86 = scalar_lea.smem %s0, 43
  %s87 = sld [smem:[%s86]]
  %s88 = scalar_lea.smem %s0, 44
  %s89 = sld [smem:[%s88]]
  %s90 = scalar_lea.smem %s0, 45
  %s91 = sld [smem:[%s90]]
  %s92 = scalar_lea.smem %s0, 46
  %s93 = sld [smem:[%s92]]
  %s94 = scalar_lea.smem %s0, 47
  %s95 = sld [smem:[%s94]]
  %s96 = scalar_lea.smem %s0, 48
  %s97 = sld [smem:[%s96]]
  %s98 = scalar_lea.smem %s0, 49
  %s99 = sld [smem:[%s98]]
  %s100 = scalar_lea.smem %s0, 50
  %s101 = sld [smem:[%s100]]
  %s102 = scalar_lea.smem %s0, 51
  %s103 = sld [smem:[%s102]]
  %s104 = scalar_lea.smem %s0, 52
  %s105 = sld [smem:[%s104]]
  %s106 = scalar_lea.smem %s0, 53
  %s107 = sld [smem:[%s106]]
  %s108 = scalar_lea.smem %s0, 54
  %s109 = sld [smem:[%s108]]
  %s110 = scalar_lea.smem %s0, 55
  %s111 = sld [smem:[%s110]]
  %s112 = scalar_lea.smem %s0, 56
  %s113 = sld [smem:[%s112]]
  %s114 = scalar_lea.smem %s0, 57
  %s115 = sld [smem:[%s114]]
  %s116 = sld [smem:[#allocation0]]
  $region330: #{pta_egnn_forward.1} parent=0
    _
  %s118 = ssub.s32 1, %s116
  %s119 = scalar_select 0, %s118, %s116
  %v120 = vstv %s71
  %121 = vst [vmem:[#allocation2] sm:$0x1] %v120
  %v122 = vstv %s93
  %123 = vst [vmem:[#allocation3] sm:$0x1] %v122
  %v124 = vstv %s101
  %125 = vst [vmem:[#allocation4] sm:$0x1] %v124
  $region1: #{pta_egnn_forward.1} parent=0
    #allocation5 [shape = 'u8[4096]{0}', space=vmem, size = 0x1000, scoped, tag = 'input window, operand 0, single buffered']
    #allocation6 [shape = 's32[1]{0}', space=sflag, size = 0x4, scoped, tag = 'scoped memory for pta_egnn_forward.1']
    #allocation7 [shape = 'u8[4096]{0}', space=vmem, size = 0x1000, scoped, tag = 'input window, operand 3, single buffered']
    #allocation8 [shape = 's32[1]{0}', space=sflag, size = 0x4, scoped, tag = 'scoped memory for pta_egnn_forward.1']
    #allocation9 [shape = 'u8[2048]{0}', space=vmem, size = 0x800, scoped, tag = 'input window, operand 11, single buffered']
    #allocation10 [shape = 'u8[4096]{0}', space=vmem, size = 0x1000, scoped, tag = 'input window, operand 20, single buffered']
    #allocation11 [shape = 's32[1]{0}', space=sflag, size = 0x4, scoped, tag = 'scoped memory for pta_egnn_forward.1']
    #allocation12 [shape = 'u8[512]{0}', space=vmem, size = 0x400, scoped, tag = 'input window, operand 21, single buffered']
    #allocation13 [shape = 'u8[512]{0}', space=vmem, size = 0x400, scoped, tag = 'input window, operand 23, single buffered']
    #allocation14 [shape = 's32[1]{0}', space=sflag, size = 0x4, scoped, tag = 'scoped memory for pta_egnn_forward.1']
    #allocation15 [shape = 'u8[2048]{0}', space=vmem, size = 0x800, scoped, tag = 'input window, operand 24, single buffered']
    #allocation16 [shape = 'u8[8192]{0}', space=vmem, size = 0x2000, scoped, tag = 'input window, operand 25, single buffered']
    #allocation17 [shape = 's32[1]{0}', space=sflag, size = 0x4, scoped, tag = 'scoped memory for pta_egnn_forward.1']
    #allocation18 [shape = 'u8[4096]{0}', space=vmem, size = 0x1000, scoped, tag = 'input window, operand 26, single buffered']
    #allocation19 [shape = 'u8[512]{0}', space=vmem, size = 0x400, scoped, tag = 'input window, operand 27, single buffered']
    #allocation20 [shape = 's32[1]{0}', space=sflag, size = 0x4, scoped, tag = 'scoped memory for pta_egnn_forward.1']
    #allocation21 [shape = 'u8[512]{0}', space=vmem, size = 0x400, scoped, tag = 'input window, operand 29, single buffered']
    #allocation22 [shape = 'u8[512]{0}', space=vmem, size = 0x400, scoped, tag = 'input window, operand 31, single buffered']
    #allocation23 [shape = 's32[1]{0}', space=sflag, size = 0x4, scoped, tag = 'scoped memory for pta_egnn_forward.1']
    #allocation24 [shape = 'u8[512]{0}', space=vmem, size = 0x400, scoped, tag = 'input window, operand 33, single buffered']
    #allocation25 [shape = 'u8[512]{0}', space=vmem, size = 0x400, scoped, tag = 'input window, operand 40, single buffered']
    #allocation26 [shape = 's32[1]{0}', space=sflag, size = 0x4, scoped, tag = 'scoped memory for pta_egnn_forward.1']
    #allocation27 [shape = 'u8[512]{0}', space=vmem, size = 0x400, scoped, tag = 'input window, operand 42, single buffered']
    #allocation28 [shape = 'u8[512]{0}', space=vmem, size = 0x400, scoped, tag = 'input window, operand 44, single buffered']
    #allocation29 [shape = 's32[1]{0}', space=sflag, size = 0x4, scoped, tag = 'scoped memory for pta_egnn_forward.1']
    #allocation30 [shape = 'u8[512]{0}', space=vmem, size = 0x400, scoped, tag = 'input window, operand 48, single buffered']
    #allocation31 [shape = 'u8[16384]{0}', space=vmem, size = 0x4000, scoped, tag = 'input window, operand 51, single buffered']
    #allocation32 [shape = 's32[1]{0}', space=sflag, size = 0x4, scoped, tag = 'scoped memory for pta_egnn_forward.1']
    #allocation33 [shape = 'u8[4096]{0}', space=vmem, size = 0x1000, scoped, tag = 'input window, operand 52, single buffered']
    #allocation34 [shape = 'u8[16384]{0}', space=vmem, size = 0x4000, scoped, tag = 'input window, operand 53, single buffered']
    #allocation35 [shape = 's32[1]{0}', space=sflag, size = 0x4, scoped, tag = 'scoped memory for pta_egnn_forward.1']
    #allocation36 [shape = 'u8[512]{0}', space=vmem, size = 0x400, scoped, tag = 'input window, operand 54, single buffered']
    #allocation37 [shape = 'u8[16384]{0}', space=vmem, size = 0x4000, scoped, tag = 'input window, operand 55, single buffered']
    #allocation38 [shape = 's32[1]{0}', space=sflag, size = 0x4, scoped, tag = 'scoped memory for pta_egnn_forward.1']
    #allocation39 [shape = 'u8[512]{0}', space=vmem, size = 0x400, scoped, tag = 'input window, operand 56, single buffered']
    %126 = vsyncpa [#allocation6], 0
    %127 = vsyncpa [#allocation8], 0
    %128 = vsyncpa [#allocation11], 0
    %129 = vsyncpa [#allocation14], 0
    %130 = vsyncpa [#allocation17], 0
    %131 = vsyncpa [#allocation20], 0
    %132 = vsyncpa [#allocation23], 0
    %133 = vsyncpa [#allocation26], 0
    %134 = vsyncpa [#allocation29], 0
    %135 = vsyncpa [#allocation32], 0
    %136 = vsyncpa [#allocation35], 0
    %137 = vsyncpa [#allocation38], 0
    // Predicated region
    $region2: #{pta_egnn_forward.1} parent=1 // pred_check
      _
    $region3: #{pta_egnn_forward.1} parent=1 // pred_check_branch
      %139 = sbr.rel (0) target = $region5
    $region4: #{pta_egnn_forward.1} parent=1 // pred_region
      %s141 = ssub.s32 128, 128
      %142 = vsyncadd [#allocation6], %s141
      %s144 = sshll.u32 [#allocation5], 4
      %s145 = int_to_ptr.vmem [resolvable:$true] %s144
      %147 = dma.hbm_to_vmem [thread:$0]  %s1, 128, %s145, [#allocation6]
    $region5: #{pta_egnn_forward.1} parent=1 // pred_fallthru
      _
    // Predicated region
    $region6: #{pta_egnn_forward.1} parent=1 // pred_check
      _
    $region7: #{pta_egnn_forward.1} parent=1 // pred_check_branch
      %149 = sbr.rel (0) target = $region9
    $region8: #{pta_egnn_forward.1} parent=1 // pred_region
      _
    $region9: #{pta_egnn_forward.1} parent=1 // pred_fallthru
      _
    // Predicated region
    $region10: #{pta_egnn_forward.1} parent=1 // pred_check
      _
    $region11: #{pta_egnn_forward.1} parent=1 // pred_check_branch
      %151 = sbr.rel (0) target = $region13
    $region12: #{pta_egnn_forward.1} parent=1 // pred_region
      _
    $region13: #{pta_egnn_forward.1} parent=1 // pred_fallthru
      _
    // Predicated region
    $region14: #{pta_egnn_forward.1} parent=1 // pred_check
      _
    $region15: #{pta_egnn_forward.1} parent=1 // pred_check_branch
      %153 = sbr.rel (0) target = $region17
    $region16: #{pta_egnn_forward.1} parent=1 // pred_region
      %s155 = ssub.s32 128, 128
      %156 = vsyncadd [#allocation8], %s155
      %s158 = sshll.u32 [#allocation7], 4
      %s159 = int_to_ptr.vmem [resolvable:$true] %s158
      %161 = dma.hbm_to_vmem [thread:$0]  %s7, 128, %s159, [#allocation8]
    $region17: #{pta_egnn_forward.1} parent=1 // pred_fallthru
      _
    // Predicated region
    $region18: #{pta_egnn_forward.1} parent=1 // pred_check
      _
    $region19: #{pta_egnn_forward.1} parent=1 // pred_check_branch
      %163 = sbr.rel (0) target = $region21
    $region20: #{pta_egnn_forward.1} parent=1 // pred_region
      _
    $region21: #{pta_egnn_forward.1} parent=1 // pred_fallthru
      _
    // Predicated region
    $region22: #{pta_egnn_forward.1} parent=1 // pred_check
      _
    $region23: #{pta_egnn_forward.1} parent=1 // pred_check_branch
      %165 = sbr.rel (0) target = $region25
    $region24: #{pta_egnn_forward.1} parent=1 // pred_region
      _
    $region25: #{pta_egnn_forward.1} parent=1 // pred_fallthru
      _
    // Predicated region
    $region26: #{pta_egnn_forward.1} parent=1 // pred_check
      _
    $region27: #{pta_egnn_forward.1} parent=1 // pred_check_branch
      %167 = sbr.rel (0) target = $region29
    $region28: #{pta_egnn_forward.1} parent=1 // pred_region
      _
    $region29: #{pta_egnn_forward.1} parent=1 // pred_fallthru
      _
    // Predicated region
    $region30: #{pta_egnn_forward.1} parent=1 // pred_check
      _
    $region31: #{pta_egnn_forward.1} parent=1 // pred_check_branch
      %169 = sbr.rel (0) target = $region33
    $region32: #{pta_egnn_forward.1} parent=1 // pred_region
      _
    $region33: #{pta_egnn_forward.1} parent=1 // pred_fallthru
      _
    // Predicated region
    $region34: #{pta_egnn_forward.1} parent=1 // pred_check
      _
    $region35: #{pta_egnn_forward.1} parent=1 // pred_check_branch
      %171 = sbr.rel (0) target = $region37
    $region36: #{pta_egnn_forward.1} parent=1 // pred_region
      _
    $region37: #{pta_egnn_forward.1} parent=1 // pred_fallthru
      _
    // Predicated region
    $region38: #{pta_egnn_forward.1} parent=1 // pred_check
      _
    $region39: #{pta_egnn_forward.1} parent=1 // pred_check_branch
      %173 = sbr.rel (0) target = $region41
    $region40: #{pta_egnn_forward.1} parent=1 // pred_region
      _
    $region41: #{pta_egnn_forward.1} parent=1 // pred_fallthru
      _
    // Predicated region
    $region42: #{pta_egnn_forward.1} parent=1 // pred_check
      _
    $region43: #{pta_egnn_forward.1} parent=1 // pred_check_branch
      %175 = sbr.rel (0) target = $region45
    $region44: #{pta_egnn_forward.1} parent=1 // pred_region
      _
    $region45: #{pta_egnn_forward.1} parent=1 // pred_fallthru
      _
    // Predicated region
    $region46: #{pta_egnn_forward.1} parent=1 // pred_check
      _
    $region47: #{pta_egnn_forward.1} parent=1 // pred_check_branch
      %177 = sbr.rel (0) target = $region49
    $region48: #{pta_egnn_forward.1} parent=1 // pred_region
      %s179 = ssub.s32 64, 64
      %180 = vsyncadd [#allocation8], %s179
      %s182 = sshll.u32 [#allocation9], 4
      %s183 = int_to_ptr.vmem [resolvable:$true] %s182
      %185 = dma.hbm_to_vmem [thread:$0]  %s23, 64, %s183, [#allocation8]
    $region49: #{pta_egnn_forward.1} parent=1 // pred_fallthru
      _
    // Predicated region
    $region50: #{pta_egnn_forward.1} parent=1 // pred_check
      _
    $region51: #{pta_egnn_forward.1} parent=1 // pred_check_branch
      %187 = sbr.rel (0) target = $region53
    $region52: #{pta_egnn_forward.1} parent=1 // pred_region
      _
    $region53: #{pta_egnn_forward.1} parent=1 // pred_fallthru
      _
    // Predicated region
    $region54: #{pta_egnn_forward.1} parent=1 // pred_check
      _
    $region55: #{pta_egnn_forward.1} parent=1 // pred_check_branch
      %189 = sbr.rel (0) target = $region57
    $region56: #{pta_egnn_forward.1} parent=1 // pred_region
      _
    $region57: #{pta_egnn_forward.1} parent=1 // pred_fallthru
      _
    // Predicated region
    $region58: #{pta_egnn_forward.1} parent=1 // pred_check
      _
    $region59: #{pta_egnn_forward.1} parent=1 // pred_check_branch
      %191 = sbr.rel (0) target = $region61
    $region60: #{pta_egnn_forward.1} parent=1 // pred_region
      _
    $region61: #{pta_egnn_forward.1} parent=1 // pred_fallthru
      _
    // Predicated region
    $region62: #{pta_egnn_forward.1} parent=1 // pred_check
      _
    $region63: #{pta_egnn_forward.1} parent=1 // pred_check_branch
      %193 = sbr.rel (0) target = $region65
    $region64: #{pta_egnn_forward.1} parent=1 // pred_region
      _
    $region65: #{pta_egnn_forward.1} parent=1 // pred_fallthru
      _
    // Predicated region
    $region66: #{pta_egnn_forward.1} parent=1 // pred_check
      _
    $region67: #{pta_egnn_forward.1} parent=1 // pred_check_branch
      %195 = sbr.rel (0) target = $region69
    $region68: #{pta_egnn_forward.1} parent=1 // pred_region
      _
    $region69: #{pta_egnn_forward.1} parent=1 // pred_fallthru
      _
    // Predicated region
    $region70: #{pta_egnn_forward.1} parent=1 // pred_check
      _
    $region71: #{pta_egnn_forward.1} parent=1 // pred_check_branch
      %197 = sbr.rel (0) target = $region73
    $region72: #{pta_egnn_forward.1} parent=1 // pred_region
      _
    $region73: #{pta_egnn_forward.1} parent=1 // pred_fallthru
      _
    // Predicated region
    $region74: #{pta_egnn_forward.1} parent=1 // pred_check
      _
    $region75: #{pta_egnn_forward.1} parent=1 // pred_check_branch
      %199 = sbr.rel (0) target = $region77
    $region76: #{pta_egnn_forward.1} parent=1 // pred_region
      _
    $region77: #{pta_egnn_forward.1} parent=1 // pred_fallthru
      _
    // Predicated region
    $region78: #{pta_egnn_forward.1} parent=1 // pred_check
      _
    $region79: #{pta_egnn_forward.1} parent=1 // pred_check_branch
      %201 = sbr.rel (0) target = $region81
    $region80: #{pta_egnn_forward.1} parent=1 // pred_region
      _
    $region81: #{pta_egnn_forward.1} parent=1 // pred_fallthru
      _
    // Predicated region
    $region82: #{pta_egnn_forward.1} parent=1 // pred_check
      _
    $region83: #{pta_egnn_forward.1} parent=1 // pred_check_branch
      %203 = sbr.rel (0) target = $region85
    $region84: #{pta_egnn_forward.1} parent=1 // pred_region
      %s205 = ssub.s32 128, 128
      %206 = vsyncadd [#allocation11], %s205
      %s208 = sshll.u32 [#allocation10], 4
      %s209 = int_to_ptr.vmem [resolvable:$true] %s208
      %211 = dma.hbm_to_vmem [thread:$0]  %s41, 128, %s209, [#allocation11]
    $region85: #{pta_egnn_forward.1} parent=1 // pred_fallthru
      _
    // Predicated region
    $region86: #{pta_egnn_forward.1} parent=1 // pred_check
      _
    $region87: #{pta_egnn_forward.1} parent=1 // pred_check_branch
      %213 = sbr.rel (0) target = $region89
    $region88: #{pta_egnn_forward.1} parent=1 // pred_region
      %s215 = ssub.s32 16, 16
      %216 = vsyncadd [#allocation11], %s215
      %s218 = sshll.u32 [#allocation12], 4
      %s219 = int_to_ptr.vmem [resolvable:$true] %s218
      %221 = dma.hbm_to_vmem [thread:$0]  %s43, 16, %s219, [#allocation11]
    $region89: #{pta_egnn_forward.1} parent=1 // pred_fallthru
      _
    // Predicated region
    $region90: #{pta_egnn_forward.1} parent=1 // pred_check
      _
    $region91: #{pta_egnn_forward.1} parent=1 // pred_check_branch
      %223 = sbr.rel (0) target = $region93
    $region92: #{pta_egnn_forward.1} parent=1 // pred_region
      _
    $region93: #{pta_egnn_forward.1} parent=1 // pred_fallthru
      _
    // Predicated region
    $region94: #{pta_egnn_forward.1} parent=1 // pred_check
      _
    $region95: #{pta_egnn_forward.1} parent=1 // pred_check_branch
      %225 = sbr.rel (0) target = $region97
    $region96: #{pta_egnn_forward.1} parent=1 // pred_region
      %s227 = ssub.s32 16, 16
      %228 = vsyncadd [#allocation14], %s227
      %s230 = sshll.u32 [#allocation13], 4
      %s231 = int_to_ptr.vmem [resolvable:$true] %s230
      %233 = dma.hbm_to_vmem [thread:$0]  %s47, 16, %s231, [#allocation14]
    $region97: #{pta_egnn_forward.1} parent=1 // pred_fallthru
      _
    // Predicated region
    $region98: #{pta_egnn_forward.1} parent=1 // pred_check
      _
    $region99: #{pta_egnn_forward.1} parent=1 // pred_check_branch
      %235 = sbr.rel (0) target = $region101
    $region100: #{pta_egnn_forward.1} parent=1 // pred_region
      %s237 = ssub.s32 64, 64
      %238 = vsyncadd [#allocation14], %s237
      %s240 = sshll.u32 [#allocation15], 4
      %s241 = int_to_ptr.vmem [resolvable:$true] %s240
      %243 = dma.hbm_to_vmem [thread:$0]  %s49, 64, %s241, [#allocation14]
    $region101: #{pta_egnn_forward.1} parent=1 // pred_fallthru
      _
    // Predicated region
    $region102: #{pta_egnn_forward.1} parent=1 // pred_check
      _
    $region103: #{pta_egnn_forward.1} parent=1 // pred_check_branch
      %245 = sbr.rel (0) target = $region105
    $region104: #{pta_egnn_forward.1} parent=1 // pred_region
      %s247 = ssub.s32 256, 256
      %248 = vsyncadd [#allocation17], %s247
      %s249 = sshll.u32 [#allocation16], 4
      %s250 = int_to_ptr.vmem [resolvable:$true] %s249
      %255 = dma.hbm_to_vmem [thread:$0]  %s51, 256, %s250, [#allocation17], 128, 128, 8
    $region105: #{pta_egnn_forward.1} parent=1 // pred_fallthru
      _
    // Predicated region
    $region106: #{pta_egnn_forward.1} parent=1 // pred_check
      _
    $region107: #{pta_egnn_forward.1} parent=1 // pred_check_branch
      %257 = sbr.rel (0) target = $region109
    $region108: #{pta_egnn_forward.1} parent=1 // pred_region
      %s259 = ssub.s32 128, 128
      %260 = vsyncadd [#allocation17], %s259
      %s262 = sshll.u32 [#allocation18], 4
      %s263 = int_to_ptr.vmem [resolvable:$true] %s262
      %265 = dma.hbm_to_vmem [thread:$0]  %s53, 128, %s263, [#allocation17]
    $region109: #{pta_egnn_forward.1} parent=1 // pred_fallthru
      _
    // Predicated region
    $region110: #{pta_egnn_forward.1} parent=1 // pred_check
      _
    $region111: #{pta_egnn_forward.1} parent=1 // pred_check_branch
      %267 = sbr.rel (0) target = $region113
    $region112: #{pta_egnn_forward.1} parent=1 // pred_region
      %s269 = ssub.s32 16, 16
      %270 = vsyncadd [#allocation20], %s269
      %s272 = sshll.u32 [#allocation19], 4
      %s273 = int_to_ptr.vmem [resolvable:$true] %s272
      %275 = dma.hbm_to_vmem [thread:$0]  %s55, 16, %s273, [#allocation20]
    $region113: #{pta_egnn_forward.1} parent=1 // pred_fallthru
      _
    // Predicated region
    $region114: #{pta_egnn_forward.1} parent=1 // pred_check
      _
    $region115: #{pta_egnn_forward.1} parent=1 // pred_check_branch
      %277 = sbr.rel (0) target = $region117
    $region116: #{pta_egnn_forward.1} parent=1 // pred_region
      _
    $region117: #{pta_egnn_forward.1} parent=1 // pred_fallthru
      _
    // Predicated region
    $region118: #{pta_egnn_forward.1} parent=1 // pred_check
      _
    $region119: #{pta_egnn_forward.1} parent=1 // pred_check_branch
      %279 = sbr.rel (0) target = $region121
    $region120: #{pta_egnn_forward.1} parent=1 // pred_region
      %s281 = ssub.s32 16, 16
      %282 = vsyncadd [#allocation20], %s281
      %s284 = sshll.u32 [#allocation21], 4
      %s285 = int_to_ptr.vmem [resolvable:$true] %s284
      %287 = dma.hbm_to_vmem [thread:$0]  %s59, 16, %s285, [#allocation20]
    $region121: #{pta_egnn_forward.1} parent=1 // pred_fallthru
      _
    // Predicated region
    $region122: #{pta_egnn_forward.1} parent=1 // pred_check
      _
    $region123: #{pta_egnn_forward.1} parent=1 // pred_check_branch
      %289 = sbr.rel (0) target = $region125
    $region124: #{pta_egnn_forward.1} parent=1 // pred_region
      _
    $region125: #{pta_egnn_forward.1} parent=1 // pred_fallthru
      _
    // Predicated region
    $region126: #{pta_egnn_forward.1} parent=1 // pred_check
      _
    $region127: #{pta_egnn_forward.1} parent=1 // pred_check_branch
      %291 = sbr.rel (0) target = $region129
    $region128: #{pta_egnn_forward.1} parent=1 // pred_region
      %s293 = ssub.s32 16, 16
      %294 = vsyncadd [#allocation23], %s293
      %s296 = sshll.u32 [#allocation22], 4
      %s297 = int_to_ptr.vmem [resolvable:$true] %s296
      %299 = dma.hbm_to_vmem [thread:$0]  %s63, 16, %s297, [#allocation23]
    $region129: #{pta_egnn_forward.1} parent=1 // pred_fallthru
      _
    // Predicated region
    $region130: #{pta_egnn_forward.1} parent=1 // pred_check
      _
    $region131: #{pta_egnn_forward.1} parent=1 // pred_check_branch
      %301 = sbr.rel (0) target = $region133
    $region132: #{pta_egnn_forward.1} parent=1 // pred_region
      _
    $region133: #{pta_egnn_forward.1} parent=1 // pred_fallthru
      _
    // Predicated region
    $region134: #{pta_egnn_forward.1} parent=1 // pred_check
      _
    $region135: #{pta_egnn_forward.1} parent=1 // pred_check_branch
      %303 = sbr.rel (0) target = $region137
    $region136: #{pta_egnn_forward.1} parent=1 // pred_region
      %s305 = ssub.s32 16, 16
      %306 = vsyncadd [#allocation23], %s305
      %s308 = sshll.u32 [#allocation24], 4
      %s309 = int_to_ptr.vmem [resolvable:$true] %s308
      %311 = dma.hbm_to_vmem [thread:$0]  %s67, 16, %s309, [#allocation23]
    $region137: #{pta_egnn_forward.1} parent=1 // pred_fallthru
      _
    // Predicated region
    $region138: #{pta_egnn_forward.1} parent=1 // pred_check
      _
    $region139: #{pta_egnn_forward.1} parent=1 // pred_check_branch
      %313 = sbr.rel (0) target = $region141
    $region140: #{pta_egnn_forward.1} parent=1 // pred_region
      _
    $region141: #{pta_egnn_forward.1} parent=1 // pred_fallthru
      _
    // Predicated region
    $region142: #{pta_egnn_forward.1} parent=1 // pred_check
      _
    $region143: #{pta_egnn_forward.1} parent=1 // pred_check_branch
      %315 = sbr.rel (0) target = $region145
    $region144: #{pta_egnn_forward.1} parent=1 // pred_region
      _
    $region145: #{pta_egnn_forward.1} parent=1 // pred_fallthru
      _
    // Predicated region
    $region146: #{pta_egnn_forward.1} parent=1 // pred_check
      _
    $region147: #{pta_egnn_forward.1} parent=1 // pred_check_branch
      %317 = sbr.rel (0) target = $region149
    $region148: #{pta_egnn_forward.1} parent=1 // pred_region
      _
    $region149: #{pta_egnn_forward.1} parent=1 // pred_fallthru
      _
    // Predicated region
    $region150: #{pta_egnn_forward.1} parent=1 // pred_check
      _
    $region151: #{pta_egnn_forward.1} parent=1 // pred_check_branch
      %319 = sbr.rel (0) target = $region153
    $region152: #{pta_egnn_forward.1} parent=1 // pred_region
      _
    $region153: #{pta_egnn_forward.1} parent=1 // pred_fallthru
      _
    // Predicated region
    $region154: #{pta_egnn_forward.1} parent=1 // pred_check
      _
    $region155: #{pta_egnn_forward.1} parent=1 // pred_check_branch
      %321 = sbr.rel (0) target = $region157
    $region156: #{pta_egnn_forward.1} parent=1 // pred_region
      _
    $region157: #{pta_egnn_forward.1} parent=1 // pred_fallthru
      _
    // Predicated region
    $region158: #{pta_egnn_forward.1} parent=1 // pred_check
      _
    $region159: #{pta_egnn_forward.1} parent=1 // pred_check_branch
      %323 = sbr.rel (0) target = $region161
    $region160: #{pta_egnn_forward.1} parent=1 // pred_region
      _
    $region161: #{pta_egnn_forward.1} parent=1 // pred_fallthru
      _
    // Predicated region
    $region162: #{pta_egnn_forward.1} parent=1 // pred_check
      _
    $region163: #{pta_egnn_forward.1} parent=1 // pred_check_branch
      %325 = sbr.rel (0) target = $region165
    $region164: #{pta_egnn_forward.1} parent=1 // pred_region
      %s327 = ssub.s32 16, 16
      %328 = vsyncadd [#allocation26], %s327
      %s330 = sshll.u32 [#allocation25], 4
      %s331 = int_to_ptr.vmem [resolvable:$true] %s330
      %333 = dma.hbm_to_vmem [thread:$0]  %s81, 16, %s331, [#allocation26]
    $region165: #{pta_egnn_forward.1} parent=1 // pred_fallthru
      _
    // Predicated region
    $region166: #{pta_egnn_forward.1} parent=1 // pred_check
      _
    $region167: #{pta_egnn_forward.1} parent=1 // pred_check_branch
      %335 = sbr.rel (0) target = $region169
    $region168: #{pta_egnn_forward.1} parent=1 // pred_region
      _
    $region169: #{pta_egnn_forward.1} parent=1 // pred_fallthru
      _
    // Predicated region
    $region170: #{pta_egnn_forward.1} parent=1 // pred_check
      _
    $region171: #{pta_egnn_forward.1} parent=1 // pred_check_branch
      %337 = sbr.rel (0) target = $region173
    $region172: #{pta_egnn_forward.1} parent=1 // pred_region
      %s339 = ssub.s32 16, 16
      %340 = vsyncadd [#allocation26], %s339
      %s342 = sshll.u32 [#allocation27], 4
      %s343 = int_to_ptr.vmem [resolvable:$true] %s342
      %345 = dma.hbm_to_vmem [thread:$0]  %s85, 16, %s343, [#allocation26]
    $region173: #{pta_egnn_forward.1} parent=1 // pred_fallthru
      _
    // Predicated region
    $region174: #{pta_egnn_forward.1} parent=1 // pred_check
      _
    $region175: #{pta_egnn_forward.1} parent=1 // pred_check_branch
      %347 = sbr.rel (0) target = $region177
    $region176: #{pta_egnn_forward.1} parent=1 // pred_region
      _
    $region177: #{pta_egnn_forward.1} parent=1 // pred_fallthru
      _
    // Predicated region
    $region178: #{pta_egnn_forward.1} parent=1 // pred_check
      _
    $region179: #{pta_egnn_forward.1} parent=1 // pred_check_branch
      %349 = sbr.rel (0) target = $region181
    $region180: #{pta_egnn_forward.1} parent=1 // pred_region
      %s351 = ssub.s32 16, 16
      %352 = vsyncadd [#allocation29], %s351
      %s354 = sshll.u32 [#allocation28], 4
      %s355 = int_to_ptr.vmem [resolvable:$true] %s354
      %357 = dma.hbm_to_vmem [thread:$0]  %s89, 16, %s355, [#allocation29]
    $region181: #{pta_egnn_forward.1} parent=1 // pred_fallthru
      _
    // Predicated region
    $region182: #{pta_egnn_forward.1} parent=1 // pred_check
      _
    $region183: #{pta_egnn_forward.1} parent=1 // pred_check_branch
      %359 = sbr.rel (0) target = $region185
    $region184: #{pta_egnn_forward.1} parent=1 // pred_region
      _
    $region185: #{pta_egnn_forward.1} parent=1 // pred_fallthru
      _
    // Predicated region
    $region186: #{pta_egnn_forward.1} parent=1 // pred_check
      _
    $region187: #{pta_egnn_forward.1} parent=1 // pred_check_branch
      %361 = sbr.rel (0) target = $region189
    $region188: #{pta_egnn_forward.1} parent=1 // pred_region
      _
    $region189: #{pta_egnn_forward.1} parent=1 // pred_fallthru
      _
    // Predicated region
    $region190: #{pta_egnn_forward.1} parent=1 // pred_check
      _
    $region191: #{pta_egnn_forward.1} parent=1 // pred_check_branch
      %363 = sbr.rel (0) target = $region193
    $region192: #{pta_egnn_forward.1} parent=1 // pred_region
      _
    $region193: #{pta_egnn_forward.1} parent=1 // pred_fallthru
      _
    // Predicated region
    $region194: #{pta_egnn_forward.1} parent=1 // pred_check
      _
    $region195: #{pta_egnn_forward.1} parent=1 // pred_check_branch
      %365 = sbr.rel (0) target = $region197
    $region196: #{pta_egnn_forward.1} parent=1 // pred_region
      %s367 = ssub.s32 16, 16
      %368 = vsyncadd [#allocation29], %s367
      %s370 = sshll.u32 [#allocation30], 4
      %s371 = int_to_ptr.vmem [resolvable:$true] %s370
      %373 = dma.hbm_to_vmem [thread:$0]  %s97, 16, %s371, [#allocation29]
    $region197: #{pta_egnn_forward.1} parent=1 // pred_fallthru
      _
    // Predicated region
    $region198: #{pta_egnn_forward.1} parent=1 // pred_check
      _
    $region199: #{pta_egnn_forward.1} parent=1 // pred_check_branch
      %375 = sbr.rel (0) target = $region201
    $region200: #{pta_egnn_forward.1} parent=1 // pred_region
      _
    $region201: #{pta_egnn_forward.1} parent=1 // pred_fallthru
      _
    // Predicated region
    $region202: #{pta_egnn_forward.1} parent=1 // pred_check
      _
    $region203: #{pta_egnn_forward.1} parent=1 // pred_check_branch
      %377 = sbr.rel (0) target = $region205
    $region204: #{pta_egnn_forward.1} parent=1 // pred_region
      _
    $region205: #{pta_egnn_forward.1} parent=1 // pred_fallthru
      _
    // Predicated region
    $region206: #{pta_egnn_forward.1} parent=1 // pred_check
      _
    $region207: #{pta_egnn_forward.1} parent=1 // pred_check_branch
      %379 = sbr.rel (0) target = $region209
    $region208: #{pta_egnn_forward.1} parent=1 // pred_region
      %s381 = ssub.s32 512, 512
      %382 = vsyncadd [#allocation32], %s381
      %s383 = sshll.u32 [#allocation31], 4
      %s384 = int_to_ptr.vmem [resolvable:$true] %s383
      %389 = dma.hbm_to_vmem [thread:$0]  %s103, 512, %s384, [#allocation32], 128, 128, 8
    $region209: #{pta_egnn_forward.1} parent=1 // pred_fallthru
      _
    // Predicated region
    $region210: #{pta_egnn_forward.1} parent=1 // pred_check
      _
    $region211: #{pta_egnn_forward.1} parent=1 // pred_check_branch
      %391 = sbr.rel (0) target = $region213
    $region212: #{pta_egnn_forward.1} parent=1 // pred_region
      %s393 = ssub.s32 128, 128
      %394 = vsyncadd [#allocation32], %s393
      %s396 = sshll.u32 [#allocation33], 4
      %s397 = int_to_ptr.vmem [resolvable:$true] %s396
      %399 = dma.hbm_to_vmem [thread:$0]  %s105, 128, %s397, [#allocation32]
    $region213: #{pta_egnn_forward.1} parent=1 // pred_fallthru
      _
    // Predicated region
    $region214: #{pta_egnn_forward.1} parent=1 // pred_check
      _
    $region215: #{pta_egnn_forward.1} parent=1 // pred_check_branch
      %401 = sbr.rel (0) target = $region217
    $region216: #{pta_egnn_forward.1} parent=1 // pred_region
      %s403 = ssub.s32 512, 512
      %404 = vsyncadd [#allocation35], %s403
      %s405 = sshll.u32 [#allocation34], 4
      %s406 = int_to_ptr.vmem [resolvable:$true] %s405
      %411 = dma.hbm_to_vmem [thread:$0]  %s107, 512, %s406, [#allocation35], 128, 128, 8
    $region217: #{pta_egnn_forward.1} parent=1 // pred_fallthru
      _
    // Predicated region
    $region218: #{pta_egnn_forward.1} parent=1 // pred_check
      _
    $region219: #{pta_egnn_forward.1} parent=1 // pred_check_branch
      %413 = sbr.rel (0) target = $region221
    $region220: #{pta_egnn_forward.1} parent=1 // pred_region
      %s415 = ssub.s32 16, 16
      %416 = vsyncadd [#allocation35], %s415
      %s418 = sshll.u32 [#allocation36], 4
      %s419 = int_to_ptr.vmem [resolvable:$true] %s418
      %421 = dma.hbm_to_vmem [thread:$0]  %s109, 16, %s419, [#allocation35]
    $region221: #{pta_egnn_forward.1} parent=1 // pred_fallthru
      _
    // Predicated region
    $region222: #{pta_egnn_forward.1} parent=1 // pred_check
      _
    $region223: #{pta_egnn_forward.1} parent=1 // pred_check_branch
      %423 = sbr.rel (0) target = $region225
    $region224: #{pta_egnn_forward.1} parent=1 // pred_region
      %s425 = ssub.s32 512, 512
      %426 = vsyncadd [#allocation38], %s425
      %s427 = sshll.u32 [#allocation37], 4
      %s428 = int_to_ptr.vmem [resolvable:$true] %s427
      %433 = dma.hbm_to_vmem [thread:$0]  %s111, 512, %s428, [#allocation38], 128, 128, 8
    $region225: #{pta_egnn_forward.1} parent=1 // pred_fallthru
      _
    // Predicated region
    $region226: #{pta_egnn_forward.1} parent=1 // pred_check
      _
    $region227: #{pta_egnn_forward.1} parent=1 // pred_check_branch
      %435 = sbr.rel (0) target = $region229
    $region228: #{pta_egnn_forward.1} parent=1 // pred_region
      %s437 = ssub.s32 16, 16
      %438 = vsyncadd [#allocation38], %s437
      %s440 = sshll.u32 [#allocation39], 4
      %s441 = int_to_ptr.vmem [resolvable:$true] %s440
      %443 = dma.hbm_to_vmem [thread:$0]  %s113, 16, %s441, [#allocation38]
    $region229: #{pta_egnn_forward.1} parent=1 // pred_fallthru
      _
    // Predicated region
    $region230: #{pta_egnn_forward.1} parent=1 // pred_check
      _
    $region231: #{pta_egnn_forward.1} parent=1 // pred_check_branch
      %445 = sbr.rel (0) target = $region233
    $region232: #{pta_egnn_forward.1} parent=1 // pred_region
      %446 = dma.done [#allocation6], 128
    $region233: #{pta_egnn_forward.1} parent=1 // pred_fallthru
      _
    // Predicated region
    $region234: #{pta_egnn_forward.1} parent=1 // pred_check
      _
    $region235: #{pta_egnn_forward.1} parent=1 // pred_check_branch
      %448 = sbr.rel (0) target = $region237
    $region236: #{pta_egnn_forward.1} parent=1 // pred_region
      %449 = dma.done [#allocation8], 128
    $region237: #{pta_egnn_forward.1} parent=1 // pred_fallthru
      _
    // Predicated region
    $region238: #{pta_egnn_forward.1} parent=1 // pred_check
      _
    $region239: #{pta_egnn_forward.1} parent=1 // pred_check_branch
      %451 = sbr.rel (0) target = $region241
    $region240: #{pta_egnn_forward.1} parent=1 // pred_region
      %452 = dma.done [#allocation8], 64
    $region241: #{pta_egnn_forward.1} parent=1 // pred_fallthru
      _
    // Predicated region
    $region242: #{pta_egnn_forward.1} parent=1 // pred_check
      _
    $region243: #{pta_egnn_forward.1} parent=1 // pred_check_branch
      %454 = sbr.rel (0) target = $region245
    $region244: #{pta_egnn_forward.1} parent=1 // pred_region
      %455 = dma.done [#allocation11], 128
    $region245: #{pta_egnn_forward.1} parent=1 // pred_fallthru
      _
    // Predicated region
    $region246: #{pta_egnn_forward.1} parent=1 // pred_check
      _
    $region247: #{pta_egnn_forward.1} parent=1 // pred_check_branch
      %457 = sbr.rel (0) target = $region249
    $region248: #{pta_egnn_forward.1} parent=1 // pred_region
      %458 = dma.done [#allocation11], 16
    $region249: #{pta_egnn_forward.1} parent=1 // pred_fallthru
      _
    // Predicated region
    $region250: #{pta_egnn_forward.1} parent=1 // pred_check
      _
    $region251: #{pta_egnn_forward.1} parent=1 // pred_check_branch
      %460 = sbr.rel (0) target = $region253
    $region252: #{pta_egnn_forward.1} parent=1 // pred_region
      %461 = dma.done [#allocation14], 16
    $region253: #{pta_egnn_forward.1} parent=1 // pred_fallthru
      _
    // Predicated region
    $region254: #{pta_egnn_forward.1} parent=1 // pred_check
      _
    $region255: #{pta_egnn_forward.1} parent=1 // pred_check_branch
      %463 = sbr.rel (0) target = $region257
    $region256: #{pta_egnn_forward.1} parent=1 // pred_region
      %464 = dma.done [#allocation14], 64
    $region257: #{pta_egnn_forward.1} parent=1 // pred_fallthru
      _
    // Predicated region
    $region258: #{pta_egnn_forward.1} parent=1 // pred_check
      _
    $region259: #{pta_egnn_forward.1} parent=1 // pred_check_branch
      %466 = sbr.rel (0) target = $region261
    $region260: #{pta_egnn_forward.1} parent=1 // pred_region
      %467 = dma.done [#allocation17], 256
    $region261: #{pta_egnn_forward.1} parent=1 // pred_fallthru
      _
    // Predicated region
    $region262: #{pta_egnn_forward.1} parent=1 // pred_check
      _
    $region263: #{pta_egnn_forward.1} parent=1 // pred_check_branch
      %469 = sbr.rel (0) target = $region265
    $region264: #{pta_egnn_forward.1} parent=1 // pred_region
      %470 = dma.done [#allocation17], 128
    $region265: #{pta_egnn_forward.1} parent=1 // pred_fallthru
      _
    // Predicated region
    $region266: #{pta_egnn_forward.1} parent=1 // pred_check
      _
    $region267: #{pta_egnn_forward.1} parent=1 // pred_check_branch
      %472 = sbr.rel (0) target = $region269
    $region268: #{pta_egnn_forward.1} parent=1 // pred_region
      %473 = dma.done [#allocation20], 16
    $region269: #{pta_egnn_forward.1} parent=1 // pred_fallthru
      _
    // Predicated region
    $region270: #{pta_egnn_forward.1} parent=1 // pred_check
      _
    $region271: #{pta_egnn_forward.1} parent=1 // pred_check_branch
      %475 = sbr.rel (0) target = $region273
    $region272: #{pta_egnn_forward.1} parent=1 // pred_region
      %476 = dma.done [#allocation20], 16
    $region273: #{pta_egnn_forward.1} parent=1 // pred_fallthru
      _
    // Predicated region
    $region274: #{pta_egnn_forward.1} parent=1 // pred_check
      _
    $region275: #{pta_egnn_forward.1} parent=1 // pred_check_branch
      %478 = sbr.rel (0) target = $region277
    $region276: #{pta_egnn_forward.1} parent=1 // pred_region
      %479 = dma.done [#allocation23], 16
    $region277: #{pta_egnn_forward.1} parent=1 // pred_fallthru
      _
    // Predicated region
    $region278: #{pta_egnn_forward.1} parent=1 // pred_check
      _
    $region279: #{pta_egnn_forward.1} parent=1 // pred_check_branch
      %481 = sbr.rel (0) target = $region281
    $region280: #{pta_egnn_forward.1} parent=1 // pred_region
      %482 = dma.done [#allocation23], 16
    $region281: #{pta_egnn_forward.1} parent=1 // pred_fallthru
      _
    // Predicated region
    $region282: #{pta_egnn_forward.1} parent=1 // pred_check
      _
    $region283: #{pta_egnn_forward.1} parent=1 // pred_check_branch
      %484 = sbr.rel (0) target = $region285
    $region284: #{pta_egnn_forward.1} parent=1 // pred_region
      %485 = dma.done [#allocation26], 16
    $region285: #{pta_egnn_forward.1} parent=1 // pred_fallthru
      _
    // Predicated region
    $region286: #{pta_egnn_forward.1} parent=1 // pred_check
      _
    $region287: #{pta_egnn_forward.1} parent=1 // pred_check_branch
      %487 = sbr.rel (0) target = $region289
    $region288: #{pta_egnn_forward.1} parent=1 // pred_region
      %488 = dma.done [#allocation26], 16
    $region289: #{pta_egnn_forward.1} parent=1 // pred_fallthru
      _
    // Predicated region
    $region290: #{pta_egnn_forward.1} parent=1 // pred_check
      _
    $region291: #{pta_egnn_forward.1} parent=1 // pred_check_branch
      %490 = sbr.rel (0) target = $region293
    $region292: #{pta_egnn_forward.1} parent=1 // pred_region
      %491 = dma.done [#allocation29], 16
    $region293: #{pta_egnn_forward.1} parent=1 // pred_fallthru
      _
    // Predicated region
    $region294: #{pta_egnn_forward.1} parent=1 // pred_check
      _
    $region295: #{pta_egnn_forward.1} parent=1 // pred_check_branch
      %493 = sbr.rel (0) target = $region297
    $region296: #{pta_egnn_forward.1} parent=1 // pred_region
      %494 = dma.done [#allocation29], 16
    $region297: #{pta_egnn_forward.1} parent=1 // pred_fallthru
      _
    // Predicated region
    $region298: #{pta_egnn_forward.1} parent=1 // pred_check
      _
    $region299: #{pta_egnn_forward.1} parent=1 // pred_check_branch
      %496 = sbr.rel (0) target = $region301
    $region300: #{pta_egnn_forward.1} parent=1 // pred_region
      %497 = dma.done [#allocation32], 512
    $region301: #{pta_egnn_forward.1} parent=1 // pred_fallthru
      _
    // Predicated region
    $region302: #{pta_egnn_forward.1} parent=1 // pred_check
      _
    $region303: #{pta_egnn_forward.1} parent=1 // pred_check_branch
      %499 = sbr.rel (0) target = $region305
    $region304: #{pta_egnn_forward.1} parent=1 // pred_region
      %500 = dma.done [#allocation32], 128
    $region305: #{pta_egnn_forward.1} parent=1 // pred_fallthru
      _
    // Predicated region
    $region306: #{pta_egnn_forward.1} parent=1 // pred_check
      _
    $region307: #{pta_egnn_forward.1} parent=1 // pred_check_branch
      %502 = sbr.rel (0) target = $region309
    $region308: #{pta_egnn_forward.1} parent=1 // pred_region
      %503 = dma.done [#allocation35], 512
    $region309: #{pta_egnn_forward.1} parent=1 // pred_fallthru
      _
    // Predicated region
    $region310: #{pta_egnn_forward.1} parent=1 // pred_check
      _
    $region311: #{pta_egnn_forward.1} parent=1 // pred_check_branch
      %505 = sbr.rel (0) target = $region313
    $region312: #{pta_egnn_forward.1} parent=1 // pred_region
      %506 = dma.done [#allocation35], 16
    $region313: #{pta_egnn_forward.1} parent=1 // pred_fallthru
      _
    // Predicated region
    $region314: #{pta_egnn_forward.1} parent=1 // pred_check
      _
    $region315: #{pta_egnn_forward.1} parent=1 // pred_check_branch
      %508 = sbr.rel (0) target = $region317
    $region316: #{pta_egnn_forward.1} parent=1 // pred_region
      %509 = dma.done [#allocation38], 512
    $region317: #{pta_egnn_forward.1} parent=1 // pred_fallthru
      _
    // Predicated region
    $region318: #{pta_egnn_forward.1} parent=1 // pred_check
      _
    $region319: #{pta_egnn_forward.1} parent=1 // pred_check_branch
      %511 = sbr.rel (0) target = $region321
    $region320: #{pta_egnn_forward.1} parent=1 // pred_region
      %512 = dma.done [#allocation38], 16
    $region321: #{pta_egnn_forward.1} parent=1 // pred_fallthru
      _
    %v513 = vld [vmem:[#allocation5] sm:$0xff]
    %v514 = vld [vmem:[%s3] sm:$0xff]
    %v515 = vld [vmem:[%s5] sm:$0xff]
    %v516 = vld [vmem:[#allocation7] sm:$0xff]
    %v517 = vld [vmem:[%s9] sm:$0xff]
    %v518 = vld [vmem:[%s9 + $0x8] sm:$0xff]
    %v519 = vld [vmem:[%s11] sm:$0xff]
    %v520 = vld [vmem:[%s11 + $0x8] sm:$0xff]
    %v521 = vld [vmem:[%s13] sm:$0xff]
    %v522 = vld [vmem:[%s13 + $0x8] sm:$0xff]
    %v523 = vld [vmem:[%s15] sm:$0xff]
    %v524 = vld [vmem:[%s17] sm:$0xff]
    %v525 = vld [vmem:[%s17 + $0x8] sm:$0xff]
    %v526 = vld [vmem:[%s19] sm:$0x1]
    %v527 = vld [vmem:[%s21] sm:$0xff]
    %v528 = vld [vmem:[%s21 + $0x8] sm:$0x1]
    %v529 = vld [vmem:[#allocation9] sm:$0x7]
    %v530 = vld [vmem:[%s25] sm:$0xff]
    %v531 = vld [vmem:[%s25 + $0x8] sm:$0xff]
    %v532 = vld [vmem:[%s25 + $0x10] sm:$0xff]
    %v533 = vld [vmem:[%s25 + $0x18] sm:$0xff]
    %v534 = vld [vmem:[%s25 + $0x20] sm:$0xff]
    %v535 = vld [vmem:[%s25 + $0x28] sm:$0xff]
    %v536 = vld [vmem:[%s25 + $0x30] sm:$0xff]
    %v537 = vld [vmem:[%s25 + $0x38] sm:$0xff]
    %v538 = vld [vmem:[%s25 + $0x40] sm:$0xff]
    %v539 = vld [vmem:[%s25 + $0x48] sm:$0xff]
    %v540 = vld [vmem:[%s25 + $0x50] sm:$0xff]
    %v541 = vld [vmem:[%s25 + $0x58] sm:$0xff]
    %v542 = vld [vmem:[%s25 + $0x60] sm:$0xff]
    %v543 = vld [vmem:[%s25 + $0x68] sm:$0xff]
    %v544 = vld [vmem:[%s25 + $0x70] sm:$0xff]
    %v545 = vld [vmem:[%s25 + $0x78] sm:$0xff]
    %v546 = vld [vmem:[%s27] sm:$0xff]
    %v547 = vld [vmem:[%s27 + $0x8] sm:$0xff]
    %v548 = vld [vmem:[%s27 + $0x10] sm:$0xff]
    %v549 = vld [vmem:[%s27 + $0x18] sm:$0xff]
    %v550 = vld [vmem:[%s29] sm:$0xff]
    %v551 = vld [vmem:[%s29 + $0x8] sm:$0xff]
    %v552 = vld [vmem:[%s29 + $0x10] sm:$0xff]
    %v553 = vld [vmem:[%s29 + $0x18] sm:$0xff]
    %v554 = vld [vmem:[%s33] sm:$0xff]
    %v555 = vld [vmem:[%s33 + $0x8] sm:$0xff]
    %v556 = vld [vmem:[%s33 + $0x10] sm:$0xff]
    %v557 = vld [vmem:[%s33 + $0x18] sm:$0xff]
    %v558 = vld [vmem:[%s35] sm:$0x7]
    %vm559 = vcmask 130048
    %v560 = vsel %vm559, %v523, 0.0
    %561 = vadd.xlane.f32.xlu0 %v560
    %v562 = vpop.xlane.xlu0 %561
    %v563 = vmax.f32 %v562, 1.0
    %v564 = vrcp.pop %v563
    %v565 = vmul.f32 1.0, %v564
    %vm566 = vcmask 64512
    %v568 = vsel %vm566, %v519, 0
    %v571 = vsel %vm566, %v520, 0
    %573 = vmatprep.subr.mxu0 0.0
    %574 = vmatpush1.msra.mxu0 %v514
    %575 = vmatprep.subr.mxu0 0.0
    %576 = vmatpush1.msra.mxu0 0.0
    %577 = vmatprep.subr.mxu0 0.0
    %578 = vmatpush1.msra.mxu0 0.0
    %579 = vmatprep.subr.mxu0 0.0
    %580 = vmatpush1.msra.mxu0 0.0
    %581 = vmatprep.subr.mxu0 0.0
    %582 = vmatpush1.msra.mxu0 0.0
    %583 = vmatprep.subr.mxu0 0.0
    %584 = vmatpush1.msra.mxu0 0.0
    %585 = vmatprep.subr.mxu0 0.0
    %586 = vmatpush1.msra.mxu0 0.0
    %587 = vmatprep.subr.mxu0 0.0
    %588 = vmatpush1.msra.mxu0 0.0
    %589 = vmatprep.subr.mxu0 0.0
    %590 = vmatpush1.msra.mxu0 0.0
    %591 = vmatprep.subr.mxu0 0.0
    %592 = vmatpush1.msra.mxu0 0.0
    %593 = vmatprep.subr.mxu0 0.0
    %594 = vmatpush1.msra.mxu0 0.0
    %595 = vmatprep.subr.mxu0 0.0
    %596 = vmatpush1.msra.mxu0 0.0
    %597 = vmatprep.subr.mxu0 0.0
    %598 = vmatpush1.msra.mxu0 0.0
    %599 = vmatprep.subr.mxu0 0.0
    %600 = vmatpush1.msra.mxu0 0.0
    %601 = vmatprep.subr.mxu0 0.0
    %602 = vmatpush1.msra.mxu0 0.0
    %603 = vmatprep.subr.mxu0 0.0
    %604 = vmatpush1.msra.mxu0 0.0
    %605 = vmatprep.subr.mxu0 0.0
    %606 = vmatpush1.msra.mxu0 0.0
    %607 = vmatprep.subr.mxu0 0.0
    %608 = vmatpush1.msra.mxu0 0.0
    %609 = vmatprep.subr.mxu0 0.0
    %610 = vmatpush1.msra.mxu0 0.0
    %611 = vmatprep.subr.mxu0 0.0
    %612 = vmatpush1.msra.mxu0 0.0
    %613 = vmatprep.subr.mxu0 0.0
    %614 = vmatpush1.msra.mxu0 0.0
    %615 = vmatprep.subr.mxu0 0.0
    %616 = vmatpush1.msra.mxu0 0.0
    %617 = vmatprep.subr.mxu0 0.0
    %618 = vmatpush1.msra.mxu0 0.0
    %619 = vmatprep.subr.mxu0 0.0
    %620 = vmatpush1.msra.mxu0 0.0
    %621 = vmatprep.subr.mxu0 0.0
    %622 = vmatpush1.msra.mxu0 0.0
    %623 = vmatprep.subr.mxu0 0.0
    %624 = vmatpush1.msra.mxu0 0.0
    %625 = vmatprep.subr.mxu0 0.0
    %626 = vmatpush1.msra.mxu0 0.0
    %627 = vmatprep.subr.mxu0 0.0
    %628 = vmatpush1.msra.mxu0 0.0
    %629 = vmatprep.subr.mxu0 0.0
    %630 = vmatpush1.msra.mxu0 0.0
    %631 = vmatprep.subr.mxu0 0.0
    %632 = vmatpush1.msra.mxu0 0.0
    %633 = vmatprep.subr.mxu0 0.0
    %634 = vmatpush1.msra.mxu0 0.0
    %635 = vmatprep.subr.mxu0 0.0
    %636 = vmatpush1.msra.mxu0 0.0
    %637 = vmatprep.mubr.f32.mxu0 0.0
    %638 = vmatmul.mubr.f32.gmra.mrb[0].mxu0 %v568
    %v639 = vpop.f32.mrb[0].mxu0
    %v640 = vadd.f32 0.0, %v639
    %v641 = vpop.f32.mrb[0].mxu0
    %642 = vmatprep.mubr.f32.mxu0 0.0
    %643 = vmatmul.mubr.f32.gmra.mrb[0].mxu0 %v571
    %v644 = vpop.f32.mrb[0].mxu0
    %v645 = vadd.f32 0.0, %v644
    %v646 = vpop.f32.mrb[0].mxu0
    %647 = vdwg.mxu0
    %v649 = vsel %vm566, %v521, 0
    %v652 = vsel %vm566, %v522, 0
    %654 = vmatprep.subr.mxu0 0.0
    %655 = vmatpush1.msra.mxu0 %v514
    %656 = vmatprep.subr.mxu0 0.0
    %657 = vmatpush1.msra.mxu0 0.0
    %658 = vmatprep.subr.mxu0 0.0
    %659 = vmatpush1.msra.mxu0 0.0
    %660 = vmatprep.subr.mxu0 0.0
    %661 = vmatpush1.msra.mxu0 0.0
    %662 = vmatprep.subr.mxu0 0.0
    %663 = vmatpush1.msra.mxu0 0.0
    %664 = vmatprep.subr.mxu0 0.0
    %665 = vmatpush1.msra.mxu0 0.0
    %666 = vmatprep.subr.mxu0 0.0
    %667 = vmatpush1.msra.mxu0 0.0
    %668 = vmatprep.subr.mxu0 0.0
    %669 = vmatpush1.msra.mxu0 0.0
    %670 = vmatprep.subr.mxu0 0.0
    %671 = vmatpush1.msra.mxu0 0.0
    %672 = vmatprep.subr.mxu0 0.0
    %673 = vmatpush1.msra.mxu0 0.0
    %674 = vmatprep.subr.mxu0 0.0
    %675 = vmatpush1.msra.mxu0 0.0
    %676 = vmatprep.subr.mxu0 0.0
    %677 = vmatpush1.msra.mxu0 0.0
    %678 = vmatprep.subr.mxu0 0.0
    %679 = vmatpush1.msra.mxu0 0.0
    %680 = vmatprep.subr.mxu0 0.0
    %681 = vmatpush1.msra.mxu0 0.0
    %682 = vmatprep.subr.mxu0 0.0
    %683 = vmatpush1.msra.mxu0 0.0
    %684 = vmatprep.subr.mxu0 0.0
    %685 = vmatpush1.msra.mxu0 0.0
    %686 = vmatprep.subr.mxu0 0.0
    %687 = vmatpush1.msra.mxu0 0.0
    %688 = vmatprep.subr.mxu0 0.0
    %689 = vmatpush1.msra.mxu0 0.0
    %690 = vmatprep.subr.mxu0 0.0
    %691 = vmatpush1.msra.mxu0 0.0
    %692 = vmatprep.subr.mxu0 0.0
    %693 = vmatpush1.msra.mxu0 0.0
    %694 = vmatprep.subr.mxu0 0.0
    %695 = vmatpush1.msra.mxu0 0.0
    %696 = vmatprep.subr.mxu0 0.0
    %697 = vmatpush1.msra.mxu0 0.0
    %698 = vmatprep.subr.mxu0 0.0
    %699 = vmatpush1.msra.mxu0 0.0
    %700 = vmatprep.subr.mxu0 0.0
    %701 = vmatpush1.msra.mxu0 0.0
    %702 = vmatprep.subr.mxu0 0.0
    %703 = vmatpush1.msra.mxu0 0.0
    %704 = vmatprep.subr.mxu0 0.0
    %705 = vmatpush1.msra.mxu0 0.0
    %706 = vmatprep.subr.mxu0 0.0
    %707 = vmatpush1.msra.mxu0 0.0
    %708 = vmatprep.subr.mxu0 0.0
    %709 = vmatpush1.msra.mxu0 0.0
    %710 = vmatprep.subr.mxu0 0.0
    %711 = vmatpush1.msra.mxu0 0.0
    %712 = vmatprep.subr.mxu0 0.0
    %713 = vmatpush1.msra.mxu0 0.0
    %714 = vmatprep.subr.mxu0 0.0
    %715 = vmatpush1.msra.mxu0 0.0
    %716 = vmatprep.subr.mxu0 0.0
    %717 = vmatpush1.msra.mxu0 0.0
    %718 = vmatprep.mubr.f32.mxu0 0.0
    %719 = vmatmul.mubr.f32.gmra.mrb[0].mxu0 %v649
    %v720 = vpop.f32.mrb[0].mxu0
    %v721 = vadd.f32 0.0, %v720
    %v722 = vpop.f32.mrb[0].mxu0
    %723 = vmatprep.mubr.f32.mxu0 0.0
    %724 = vmatmul.mubr.f32.gmra.mrb[0].mxu0 %v652
    %v725 = vpop.f32.mrb[0].mxu0
    %v726 = vadd.f32 0.0, %v725
    %v727 = vpop.f32.mrb[0].mxu0
    %728 = vdwg.mxu0
    %v729 = vsub.f32 %v640, %v721
    %v730 = vsub.f32 %v645, %v726
    %v731 = vmul.f32 %v729, %v729
    %v732 = vmul.f32 %v730, %v730
    %vm733 = vcmask 23552
    %v734 = vsel %vm733, %v731, 0.0
    %735 = vadd.xlane.f32.xlu0 %v734
    %v736 = vpop.xlane.xlu0 %735
    %v737 = vsel %vm733, %v732, 0.0
    %738 = vadd.xlane.f32.xlu0 %v737
    %v739 = vpop.xlane.xlu0 %738
    %v741 = vlaneseq
    %v742 = vshrl.u32 %v741, 7
    %v743 = vsub.s32 0, %v742
    %v744 = vrot.slane %v526, %v743
    %v746 = vmul.f32 %v736, %v744
    %v747 = vmul.f32 %v739, %v744
    %v748 = vmul.f32 %v746, 1.442695
    %v749 = vpow.pop %v748
    %v750 = vmul.f32 %v747, 1.442695
    %v751 = vpow.pop %v750
    %v752 = vrsqrt.pop %v736
    %v753 = vmul.f32 %v736, %v752
    %vm754 = vcmp.eq.f32.partialorder %v736, inf
    %v755 = vsel %vm754, %v736, %v753
    %vm756 = vcmp.eq.f32.partialorder %v736, 0.0
    %v757 = vand.u32 %v736, 2147483648
    %v758 = vsel %vm756, %v757, %v755
    %v759 = vrsqrt.pop %v739
    %v760 = vmul.f32 %v739, %v759
    %vm761 = vcmp.eq.f32.partialorder %v739, inf
    %v762 = vsel %vm761, %v739, %v760
    %vm763 = vcmp.eq.f32.partialorder %v739, 0.0
    %v764 = vand.u32 %v739, 2147483648
    %v765 = vsel %vm763, %v764, %v762
    %v766 = vadd.f32 %v758, 1e-08
    %v767 = vadd.f32 %v765, 1e-08
    %v768 = vrcp.pop %v766
    %v769 = vmul.f32 %v729, %v768
    %v770 = vrcp.pop %v767
    %v771 = vmul.f32 %v730, %v770
    %v772 = vrcp.pop %v758
    %v773 = vmul.f32 1.0, %v772
    %v774 = vrcp.pop %v765
    %v775 = vmul.f32 1.0, %v774
    %v776 = vmul.f32 %v773, %v773
    %v777 = vmul.f32 %v775, %v775
    %v778 = vmul.f32 %v776, %v773
    %v779 = vmul.f32 %v777, %v775
    %v780 = vmul.f32 %v778, %v773
    %v781 = vmul.f32 %v779, %v775
    %v782 = vmul.f32 %v780, %v773
    %v783 = vmul.f32 %v781, %v775
    %v784 = vmul.f32 %v729, %v778
    %v785 = vmul.f32 %v730, %v779
    %v786 = vld [vmem:[%s31] sm:$0x7]
    %v787 = vmul.f32 %v729, %v780
    %v788 = vmul.f32 %v730, %v781
    %s789 = scalar_lea.vmem %s31, 4
    %v790 = vld [vmem:[%s789] sm:$0x7]
    %v792 = vsel %vm733, %v787, 0
    %v795 = vsel %vm733, %v788, 0
    %vm797 = vcmask 1042432
    %v799 = vsel %vm797, %v790, 0
    %801 = vmatprep.subr.mxu0 0.0
    %802 = vmatpush1.msra.mxu0 %v799
    %803 = vmatprep.subr.mxu0 0.0
    %804 = vmatpush1.msra.mxu0 0.0
    %805 = vmatprep.subr.mxu0 0.0
    %806 = vmatpush1.msra.mxu0 0.0
    %807 = vmatprep.subr.mxu0 0.0
    %808 = vmatpush1.msra.mxu0 0.0
    %809 = vmatprep.subr.mxu0 0.0
    %810 = vmatpush1.msra.mxu0 0.0
    %811 = vmatprep.subr.mxu0 0.0
    %812 = vmatpush1.msra.mxu0 0.0
    %813 = vmatprep.subr.mxu0 0.0
    %814 = vmatpush1.msra.mxu0 0.0
    %815 = vmatprep.subr.mxu0 0.0
    %816 = vmatpush1.msra.mxu0 0.0
    %817 = vmatprep.subr.mxu0 0.0
    %818 = vmatpush1.msra.mxu0 0.0
    %819 = vmatprep.subr.mxu0 0.0
    %820 = vmatpush1.msra.mxu0 0.0
    %821 = vmatprep.subr.mxu0 0.0
    %822 = vmatpush1.msra.mxu0 0.0
    %823 = vmatprep.subr.mxu0 0.0
    %824 = vmatpush1.msra.mxu0 0.0
    %825 = vmatprep.subr.mxu0 0.0
    %826 = vmatpush1.msra.mxu0 0.0
    %827 = vmatprep.subr.mxu0 0.0
    %828 = vmatpush1.msra.mxu0 0.0
    %829 = vmatprep.subr.mxu0 0.0
    %830 = vmatpush1.msra.mxu0 0.0
    %831 = vmatprep.subr.mxu0 0.0
    %832 = vmatpush1.msra.mxu0 0.0
    %833 = vmatprep.subr.mxu0 0.0
    %834 = vmatpush1.msra.mxu0 0.0
    %835 = vmatprep.subr.mxu0 0.0
    %836 = vmatpush1.msra.mxu0 0.0
    %837 = vmatprep.subr.mxu0 0.0
    %838 = vmatpush1.msra.mxu0 0.0
    %839 = vmatprep.subr.mxu0 0.0
    %840 = vmatpush1.msra.mxu0 0.0
    %841 = vmatprep.subr.mxu0 0.0
    %842 = vmatpush1.msra.mxu0 0.0
    %843 = vmatprep.subr.mxu0 0.0
    %844 = vmatpush1.msra.mxu0 0.0
    %845 = vmatprep.subr.mxu0 0.0
    %846 = vmatpush1.msra.mxu0 0.0
    %847 = vmatprep.subr.mxu0 0.0
    %848 = vmatpush1.msra.mxu0 0.0
    %849 = vmatprep.subr.mxu0 0.0
    %850 = vmatpush1.msra.mxu0 0.0
    %851 = vmatprep.subr.mxu0 0.0
    %852 = vmatpush1.msra.mxu0 0.0
    %853 = vmatprep.subr.mxu0 0.0
    %854 = vmatpush1.msra.mxu0 0.0
    %855 = vmatprep.subr.mxu0 0.0
    %856 = vmatpush1.msra.mxu0 0.0
    %857 = vmatprep.subr.mxu0 0.0
    %858 = vmatpush1.msra.mxu0 0.0
    %859 = vmatprep.subr.mxu0 0.0
    %860 = vmatpush1.msra.mxu0 0.0
    %861 = vmatprep.subr.mxu0 0.0
    %862 = vmatpush1.msra.mxu0 0.0
    %863 = vmatprep.subr.mxu0 0.0
    %864 = vmatpush1.msra.mxu0 0.0
    %865 = vmatprep.mubr.f32.mxu0 0.0
    %866 = vmatmul.mubr.f32.gmra.mrb[0].mxu0 %v792
    %v867 = vpop.f32.mrb[0].mxu0
    %v868 = vadd.f32 0.0, %v867
    %v869 = vpop.f32.mrb[0].mxu0
    %870 = vmatprep.mubr.f32.mxu0 0.0
    %871 = vmatmul.mubr.f32.gmra.mrb[0].mxu0 %v795
    %v872 = vpop.f32.mrb[0].mxu0
    %v873 = vadd.f32 0.0, %v872
    %v874 = vpop.f32.mrb[0].mxu0
    %875 = vdwg.mxu0
    %v877 = vsel %vm733, %v784, 0
    %v880 = vsel %vm733, %v785, 0
    %v883 = vsel %vm797, %v786, 0
    %885 = vmatprep.subr.mxu0 0.0
    %886 = vmatpush1.msra.mxu0 %v883
    %887 = vmatprep.subr.mxu0 0.0
    %888 = vmatpush1.msra.mxu0 0.0
    %889 = vmatprep.subr.mxu0 0.0
    %890 = vmatpush1.msra.mxu0 0.0
    %891 = vmatprep.subr.mxu0 0.0
    %892 = vmatpush1.msra.mxu0 0.0
    %893 = vmatprep.subr.mxu0 0.0
    %894 = vmatpush1.msra.mxu0 0.0
    %895 = vmatprep.subr.mxu0 0.0
    %896 = vmatpush1.msra.mxu0 0.0
    %897 = vmatprep.subr.mxu0 0.0
    %898 = vmatpush1.msra.mxu0 0.0
    %899 = vmatprep.subr.mxu0 0.0
    %900 = vmatpush1.msra.mxu0 0.0
    %901 = vmatprep.subr.mxu0 0.0
    %902 = vmatpush1.msra.mxu0 0.0
    %903 = vmatprep.subr.mxu0 0.0
    %904 = vmatpush1.msra.mxu0 0.0
    %905 = vmatprep.subr.mxu0 0.0
    %906 = vmatpush1.msra.mxu0 0.0
    %907 = vmatprep.subr.mxu0 0.0
    %908 = vmatpush1.msra.mxu0 0.0
    %909 = vmatprep.subr.mxu0 0.0
    %910 = vmatpush1.msra.mxu0 0.0
    %911 = vmatprep.subr.mxu0 0.0
    %912 = vmatpush1.msra.mxu0 0.0
    %913 = vmatprep.subr.mxu0 0.0
    %914 = vmatpush1.msra.mxu0 0.0
    %915 = vmatprep.subr.mxu0 0.0
    %916 = vmatpush1.msra.mxu0 0.0
    %917 = vmatprep.subr.mxu0 0.0
    %918 = vmatpush1.msra.mxu0 0.0
    %919 = vmatprep.subr.mxu0 0.0
    %920 = vmatpush1.msra.mxu0 0.0
    %921 = vmatprep.subr.mxu0 0.0
    %922 = vmatpush1.msra.mxu0 0.0
    %923 = vmatprep.subr.mxu0 0.0
    %924 = vmatpush1.msra.mxu0 0.0
    %925 = vmatprep.subr.mxu0 0.0
    %926 = vmatpush1.msra.mxu0 0.0
    %927 = vmatprep.subr.mxu0 0.0
    %928 = vmatpush1.msra.mxu0 0.0
    %929 = vmatprep.subr.mxu0 0.0
    %930 = vmatpush1.msra.mxu0 0.0
    %931 = vmatprep.subr.mxu0 0.0
    %932 = vmatpush1.msra.mxu0 0.0
    %933 = vmatprep.subr.mxu0 0.0
    %934 = vmatpush1.msra.mxu0 0.0
    %935 = vmatprep.subr.mxu0 0.0
    %936 = vmatpush1.msra.mxu0 0.0
    %937 = vmatprep.subr.mxu0 0.0
    %938 = vmatpush1.msra.mxu0 0.0
    %939 = vmatprep.subr.mxu0 0.0
    %940 = vmatpush1.msra.mxu0 0.0
    %941 = vmatprep.subr.mxu0 0.0
    %942 = vmatpush1.msra.mxu0 0.0
    %943 = vmatprep.subr.mxu0 0.0
    %944 = vmatpush1.msra.mxu0 0.0
    %945 = vmatprep.subr.mxu0 0.0
    %946 = vmatpush1.msra.mxu0 0.0
    %947 = vmatprep.subr.mxu0 0.0
    %948 = vmatpush1.msra.mxu0 0.0
    %949 = vmatprep.mubr.f32.mxu0 0.0
    %950 = vmatmul.mubr.f32.gmra.mrb[0].mxu0 %v877
    %v951 = vpop.f32.mrb[0].mxu0
    %v952 = vadd.f32 %v868, %v951
    %v953 = vpop.f32.mrb[0].mxu0
    %954 = vmatprep.mubr.f32.mxu0 0.0
    %955 = vmatmul.mubr.f32.gmra.mrb[0].mxu0 %v880
    %v956 = vpop.f32.mrb[0].mxu0
    %v957 = vadd.f32 %v873, %v956
    %v958 = vpop.f32.mrb[0].mxu0
    %959 = vdwg.mxu0
    %v960 = vmul.f32 %v729, %v782
    %v961 = vmul.f32 %v730, %v783
    %s962 = scalar_lea.vmem %s31, 8
    %v963 = vld [vmem:[%s962] sm:$0x7]
    %v965 = vsel %vm733, %v960, 0
    %v968 = vsel %vm733, %v961, 0
    %v971 = vsel %vm797, %v963, 0
    %973 = vmatprep.subr.mxu0 0.0
    %974 = vmatpush1.msra.mxu0 %v971
    %975 = vmatprep.subr.mxu0 0.0
    %976 = vmatpush1.msra.mxu0 0.0
    %977 = vmatprep.subr.mxu0 0.0
    %978 = vmatpush1.msra.mxu0 0.0
    %979 = vmatprep.subr.mxu0 0.0
    %980 = vmatpush1.msra.mxu0 0.0
    %981 = vmatprep.subr.mxu0 0.0
    %982 = vmatpush1.msra.mxu0 0.0
    %983 = vmatprep.subr.mxu0 0.0
    %984 = vmatpush1.msra.mxu0 0.0
    %985 = vmatprep.subr.mxu0 0.0
    %986 = vmatpush1.msra.mxu0 0.0
    %987 = vmatprep.subr.mxu0 0.0
    %988 = vmatpush1.msra.mxu0 0.0
    %989 = vmatprep.subr.mxu0 0.0
    %990 = vmatpush1.msra.mxu0 0.0
    %991 = vmatprep.subr.mxu0 0.0
    %992 = vmatpush1.msra.mxu0 0.0
    %993 = vmatprep.subr.mxu0 0.0
    %994 = vmatpush1.msra.mxu0 0.0
    %995 = vmatprep.subr.mxu0 0.0
    %996 = vmatpush1.msra.mxu0 0.0
    %997 = vmatprep.subr.mxu0 0.0
    %998 = vmatpush1.msra.mxu0 0.0
    %999 = vmatprep.subr.mxu0 0.0
    %1000 = vmatpush1.msra.mxu0 0.0
    %1001 = vmatprep.subr.mxu0 0.0
    %1002 = vmatpush1.msra.mxu0 0.0
    %1003 = vmatprep.subr.mxu0 0.0
    %1004 = vmatpush1.msra.mxu0 0.0
    %1005 = vmatprep.subr.mxu0 0.0
    %1006 = vmatpush1.msra.mxu0 0.0
    %1007 = vmatprep.subr.mxu0 0.0
    %1008 = vmatpush1.msra.mxu0 0.0
    %1009 = vmatprep.subr.mxu0 0.0
    %1010 = vmatpush1.msra.mxu0 0.0
    %1011 = vmatprep.subr.mxu0 0.0
    %1012 = vmatpush1.msra.mxu0 0.0
    %1013 = vmatprep.subr.mxu0 0.0
    %1014 = vmatpush1.msra.mxu0 0.0
    %1015 = vmatprep.subr.mxu0 0.0
    %1016 = vmatpush1.msra.mxu0 0.0
    %1017 = vmatprep.subr.mxu0 0.0
    %1018 = vmatpush1.msra.mxu0 0.0
    %1019 = vmatprep.subr.mxu0 0.0
    %1020 = vmatpush1.msra.mxu0 0.0
    %1021 = vmatprep.subr.mxu0 0.0
    %1022 = vmatpush1.msra.mxu0 0.0
    %1023 = vmatprep.subr.mxu0 0.0
    %1024 = vmatpush1.msra.mxu0 0.0
    %1025 = vmatprep.subr.mxu0 0.0
    %1026 = vmatpush1.msra.mxu0 0.0
    %1027 = vmatprep.subr.mxu0 0.0
    %1028 = vmatpush1.msra.mxu0 0.0
    %1029 = vmatprep.subr.mxu0 0.0
    %1030 = vmatpush1.msra.mxu0 0.0
    %1031 = vmatprep.subr.mxu0 0.0
    %1032 = vmatpush1.msra.mxu0 0.0
    %1033 = vmatprep.subr.mxu0 0.0
    %1034 = vmatpush1.msra.mxu0 0.0
    %1035 = vmatprep.subr.mxu0 0.0
    %1036 = vmatpush1.msra.mxu0 0.0
    %1037 = vmatprep.mubr.f32.mxu0 0.0
    %1038 = vmatmul.mubr.f32.gmra.mrb[0].mxu0 %v965
    %v1039 = vpop.f32.mrb[0].mxu0
    %v1040 = vadd.f32 0.0, %v1039
    %v1041 = vpop.f32.mrb[0].mxu0
    %1042 = vmatprep.mubr.f32.mxu0 0.0
    %1043 = vmatmul.mubr.f32.gmra.mrb[0].mxu0 %v968
    %v1044 = vpop.f32.mrb[0].mxu0
    %v1045 = vadd.f32 0.0, %v1044
    %v1046 = vpop.f32.mrb[0].mxu0
    %1047 = vdwg.mxu0
    %v1048 = vadd.f32 %v952, %v1040
    %v1049 = vadd.f32 %v957, %v1045
    %v1051 = vsel %vm559, %v523, 0
    %1053 = vmatprep.subr.mxu0 0.0
    %1054 = vmatpush1.msra.mxu0 %v1048
    %1055 = vmatprep.subr.mxu0 0.0
    %1056 = vmatpush1.msra.mxu0 %v1049
    %1057 = vmatprep.subr.mxu0 0.0
    %1058 = vmatpush1.msra.mxu0 0.0
    %1059 = vmatprep.subr.mxu0 0.0
    %1060 = vmatpush1.msra.mxu0 0.0
    %1061 = vmatprep.subr.mxu0 0.0
    %1062 = vmatpush1.msra.mxu0 0.0
    %1063 = vmatprep.subr.mxu0 0.0
    %1064 = vmatpush1.msra.mxu0 0.0
    %1065 = vmatprep.subr.mxu0 0.0
    %1066 = vmatpush1.msra.mxu0 0.0
    %1067 = vmatprep.subr.mxu0 0.0
    %1068 = vmatpush1.msra.mxu0 0.0
    %1069 = vmatprep.subr.mxu0 0.0
    %1070 = vmatpush1.msra.mxu0 0.0
    %1071 = vmatprep.subr.mxu0 0.0
    %1072 = vmatpush1.msra.mxu0 0.0
    %1073 = vmatprep.subr.mxu0 0.0
    %1074 = vmatpush1.msra.mxu0 0.0
    %1075 = vmatprep.subr.mxu0 0.0
    %1076 = vmatpush1.msra.mxu0 0.0
    %1077 = vmatprep.subr.mxu0 0.0
    %1078 = vmatpush1.msra.mxu0 0.0
    %1079 = vmatprep.subr.mxu0 0.0
    %1080 = vmatpush1.msra.mxu0 0.0
    %1081 = vmatprep.subr.mxu0 0.0
    %1082 = vmatpush1.msra.mxu0 0.0
    %1083 = vmatprep.subr.mxu0 0.0
    %1084 = vmatpush1.msra.mxu0 0.0
    %1085 = vmatprep.subr.mxu0 0.0
    %1086 = vmatpush1.msra.mxu0 0.0
    %1087 = vmatprep.subr.mxu0 0.0
    %1088 = vmatpush1.msra.mxu0 0.0
    %1089 = vmatprep.subr.mxu0 0.0
    %1090 = vmatpush1.msra.mxu0 0.0
    %1091 = vmatprep.subr.mxu0 0.0
    %1092 = vmatpush1.msra.mxu0 0.0
    %1093 = vmatprep.subr.mxu0 0.0
    %1094 = vmatpush1.msra.mxu0 0.0
    %1095 = vmatprep.subr.mxu0 0.0
    %1096 = vmatpush1.msra.mxu0 0.0
    %1097 = vmatprep.subr.mxu0 0.0
    %1098 = vmatpush1.msra.mxu0 0.0
    %1099 = vmatprep.subr.mxu0 0.0
    %1100 = vmatpush1.msra.mxu0 0.0
    %1101 = vmatprep.subr.mxu0 0.0
    %1102 = vmatpush1.msra.mxu0 0.0
    %1103 = vmatprep.subr.mxu0 0.0
    %1104 = vmatpush1.msra.mxu0 0.0
    %1105 = vmatprep.subr.mxu0 0.0
    %1106 = vmatpush1.msra.mxu0 0.0
    %1107 = vmatprep.subr.mxu0 0.0
    %1108 = vmatpush1.msra.mxu0 0.0
    %1109 = vmatprep.subr.mxu0 0.0
    %1110 = vmatpush1.msra.mxu0 0.0
    %1111 = vmatprep.subr.mxu0 0.0
    %1112 = vmatpush1.msra.mxu0 0.0
    %1113 = vmatprep.subr.mxu0 0.0
    %1114 = vmatpush1.msra.mxu0 0.0
    %1115 = vmatprep.subr.mxu0 0.0
    %1116 = vmatpush1.msra.mxu0 0.0
    %1117 = vmatprep.mubr.f32.mxu0 0.0
    %1118 = vmatmul.mubr.f32.gmra.mrb[0].mxu0 %v1051
    %v1119 = vpop.f32.mrb[0].mxu0
    %v1120 = vadd.f32 0.0, %v1119
    %v1121 = vpop.f32.mrb[0].mxu0
    %1122 = vdwg.mxu0
    %v1123 = vmul.f32 %v1120, %v565
    %v1124 = vmul.f32 %v1123, %v1123
    %vm1125 = vcmask 72704
    %v1127 = vsel %vm1125, %v1124, 0
    %vm1129 = vcmask 1040384
    %v1131 = vsel %vm1129, %v528, 0
    %1133 = vmatprep.subr.mxu0 0.0
    %1134 = vmatpush1.msra.mxu0 %v527
    %1135 = vmatprep.subr.mxu0 0.0
    %1136 = vmatpush1.msra.mxu0 %v1131
    %1137 = vmatprep.subr.mxu0 0.0
    %1138 = vmatpush1.msra.mxu0 0.0
    %1139 = vmatprep.subr.mxu0 0.0
    %1140 = vmatpush1.msra.mxu0 0.0
    %1141 = vmatprep.subr.mxu0 0.0
    %1142 = vmatpush1.msra.mxu0 0.0
    %1143 = vmatprep.subr.mxu0 0.0
    %1144 = vmatpush1.msra.mxu0 0.0
    %1145 = vmatprep.subr.mxu0 0.0
    %1146 = vmatpush1.msra.mxu0 0.0
    %1147 = vmatprep.subr.mxu0 0.0
    %1148 = vmatpush1.msra.mxu0 0.0
    %1149 = vmatprep.subr.mxu0 0.0
    %1150 = vmatpush1.msra.mxu0 0.0
    %1151 = vmatprep.subr.mxu0 0.0
    %1152 = vmatpush1.msra.mxu0 0.0
    %1153 = vmatprep.subr.mxu0 0.0
    %1154 = vmatpush1.msra.mxu0 0.0
    %1155 = vmatprep.subr.mxu0 0.0
    %1156 = vmatpush1.msra.mxu0 0.0
    %1157 = vmatprep.subr.mxu0 0.0
    %1158 = vmatpush1.msra.mxu0 0.0
    %1159 = vmatprep.subr.mxu0 0.0
    %1160 = vmatpush1.msra.mxu0 0.0
    %1161 = vmatprep.subr.mxu0 0.0
    %1162 = vmatpush1.msra.mxu0 0.0
    %1163 = vmatprep.subr.mxu0 0.0
    %1164 = vmatpush1.msra.mxu0 0.0
    %1165 = vmatprep.subr.mxu0 0.0
    %1166 = vmatpush1.msra.mxu0 0.0
    %1167 = vmatprep.subr.mxu0 0.0
    %1168 = vmatpush1.msra.mxu0 0.0
    %1169 = vmatprep.subr.mxu0 0.0
    %1170 = vmatpush1.msra.mxu0 0.0
    %1171 = vmatprep.subr.mxu0 0.0
    %1172 = vmatpush1.msra.mxu0 0.0
    %1173 = vmatprep.subr.mxu0 0.0
    %1174 = vmatpush1.msra.mxu0 0.0
    %1175 = vmatprep.subr.mxu0 0.0
    %1176 = vmatpush1.msra.mxu0 0.0
    %1177 = vmatprep.subr.mxu0 0.0
    %1178 = vmatpush1.msra.mxu0 0.0
    %1179 = vmatprep.subr.mxu0 0.0
    %1180 = vmatpush1.msra.mxu0 0.0
    %1181 = vmatprep.subr.mxu0 0.0
    %1182 = vmatpush1.msra.mxu0 0.0
    %1183 = vmatprep.subr.mxu0 0.0
    %1184 = vmatpush1.msra.mxu0 0.0
    %1185 = vmatprep.subr.mxu0 0.0
    %1186 = vmatpush1.msra.mxu0 0.0
    %1187 = vmatprep.subr.mxu0 0.0
    %1188 = vmatpush1.msra.mxu0 0.0
    %1189 = vmatprep.subr.mxu0 0.0
    %1190 = vmatpush1.msra.mxu0 0.0
    %1191 = vmatprep.subr.mxu0 0.0
    %1192 = vmatpush1.msra.mxu0 0.0
    %1193 = vmatprep.subr.mxu0 0.0
    %1194 = vmatpush1.msra.mxu0 0.0
    %1195 = vmatprep.subr.mxu0 0.0
    %1196 = vmatpush1.msra.mxu0 0.0
    %1197 = vmatprep.mubr.f32.mxu0 0.0
    %1198 = vmatmul.mubr.f32.gmra.mrb[0].mxu0 %v1127
    %v1199 = vpop.f32.mrb[0].mxu0
    %v1200 = vadd.f32 0.0, %v1199
    %v1201 = vpop.f32.mrb[0].mxu0
    %1202 = vdwg.mxu0
    %v1203 = vrsqrt.pop %v1200
    %v1204 = vmul.f32 %v1200, %v1203
    %vm1205 = vcmp.eq.f32.partialorder %v1200, inf
    %v1206 = vsel %vm1205, %v1200, %v1204
    %vm1207 = vcmp.eq.f32.partialorder %v1200, 0.0
    %v1208 = vand.u32 %v1200, 2147483648
    %v1209 = vsel %vm1207, %v1208, %v1206
    %v1210 = vadd.f32 %v1209, 1e-08
    %v1212 = vsel %vm733, %v1210, 0
    %v1215 = vsel %vm797, %v529, 0
    %1217 = vmatprep.subr.mxu0 0.0
    %1218 = vmatpush1.msra.mxu0 %v1215
    %1219 = vmatprep.subr.mxu0 0.0
    %1220 = vmatpush1.msra.mxu0 0.0
    %1221 = vmatprep.subr.mxu0 0.0
    %1222 = vmatpush1.msra.mxu0 0.0
    %1223 = vmatprep.subr.mxu0 0.0
    %1224 = vmatpush1.msra.mxu0 0.0
    %1225 = vmatprep.subr.mxu0 0.0
    %1226 = vmatpush1.msra.mxu0 0.0
    %1227 = vmatprep.subr.mxu0 0.0
    %1228 = vmatpush1.msra.mxu0 0.0
    %1229 = vmatprep.subr.mxu0 0.0
    %1230 = vmatpush1.msra.mxu0 0.0
    %1231 = vmatprep.subr.mxu0 0.0
    %1232 = vmatpush1.msra.mxu0 0.0
    %1233 = vmatprep.subr.mxu0 0.0
    %1234 = vmatpush1.msra.mxu0 0.0
    %1235 = vmatprep.subr.mxu0 0.0
    %1236 = vmatpush1.msra.mxu0 0.0
    %1237 = vmatprep.subr.mxu0 0.0
    %1238 = vmatpush1.msra.mxu0 0.0
    %1239 = vmatprep.subr.mxu0 0.0
    %1240 = vmatpush1.msra.mxu0 0.0
    %1241 = vmatprep.subr.mxu0 0.0
    %1242 = vmatpush1.msra.mxu0 0.0
    %1243 = vmatprep.subr.mxu0 0.0
    %1244 = vmatpush1.msra.mxu0 0.0
    %1245 = vmatprep.subr.mxu0 0.0
    %1246 = vmatpush1.msra.mxu0 0.0
    %1247 = vmatprep.subr.mxu0 0.0
    %1248 = vmatpush1.msra.mxu0 0.0
    %1249 = vmatprep.subr.mxu0 0.0
    %1250 = vmatpush1.msra.mxu0 0.0
    %1251 = vmatprep.subr.mxu0 0.0
    %1252 = vmatpush1.msra.mxu0 0.0
    %1253 = vmatprep.subr.mxu0 0.0
    %1254 = vmatpush1.msra.mxu0 0.0
    %1255 = vmatprep.subr.mxu0 0.0
    %1256 = vmatpush1.msra.mxu0 0.0
    %1257 = vmatprep.subr.mxu0 0.0
    %1258 = vmatpush1.msra.mxu0 0.0
    %1259 = vmatprep.subr.mxu0 0.0
    %1260 = vmatpush1.msra.mxu0 0.0
    %1261 = vmatprep.subr.mxu0 0.0
    %1262 = vmatpush1.msra.mxu0 0.0
    %1263 = vmatprep.subr.mxu0 0.0
    %1264 = vmatpush1.msra.mxu0 0.0
    %1265 = vmatprep.subr.mxu0 0.0
    %1266 = vmatpush1.msra.mxu0 0.0
    %1267 = vmatprep.subr.mxu0 0.0
    %1268 = vmatpush1.msra.mxu0 0.0
    %1269 = vmatprep.subr.mxu0 0.0
    %1270 = vmatpush1.msra.mxu0 0.0
    %1271 = vmatprep.subr.mxu0 0.0
    %1272 = vmatpush1.msra.mxu0 0.0
    %1273 = vmatprep.subr.mxu0 0.0
    %1274 = vmatpush1.msra.mxu0 0.0
    %1275 = vmatprep.subr.mxu0 0.0
    %1276 = vmatpush1.msra.mxu0 0.0
    %1277 = vmatprep.subr.mxu0 0.0
    %1278 = vmatpush1.msra.mxu0 0.0
    %1279 = vmatprep.subr.mxu0 0.0
    %1280 = vmatpush1.msra.mxu0 0.0
    %1281 = vmatprep.mubr.f32.mxu0 0.0
    %1282 = vmatmul.mubr.f32.gmra.mrb[0].mxu0 %v1212
    %v1283 = vpop.f32.mrb[0].mxu0
    %v1284 = vadd.f32 0.0, %v1283
    %v1285 = vpop.f32.mrb[0].mxu0
    %1286 = vdwg.mxu0
    %v1287 = vrcp.pop %v1284
    %v1288 = vmul.f32 %v1123, %v1287
    %1289 = vmatprep.subr.mxu0 0.0
    %1290 = vmatpush1.msra.mxu0 %v1288
    %1291 = vmatprep.subr.mxu0 0.0
    %1292 = vmatpush1.msra.mxu0 0.0
    %1293 = vmatprep.subr.mxu0 0.0
    %1294 = vmatpush1.msra.mxu0 0.0
    %1295 = vmatprep.subr.mxu0 0.0
    %1296 = vmatpush1.msra.mxu0 0.0
    %1297 = vmatprep.subr.mxu0 0.0
    %1298 = vmatpush1.msra.mxu0 0.0
    %1299 = vmatprep.subr.mxu0 0.0
    %1300 = vmatpush1.msra.mxu0 0.0
    %1301 = vmatprep.subr.mxu0 0.0
    %1302 = vmatpush1.msra.mxu0 0.0
    %1303 = vmatprep.subr.mxu0 0.0
    %1304 = vmatpush1.msra.mxu0 0.0
    %1305 = vmatprep.subr.mxu0 0.0
    %1306 = vmatpush1.msra.mxu0 0.0
    %1307 = vmatprep.subr.mxu0 0.0
    %1308 = vmatpush1.msra.mxu0 0.0
    %1309 = vmatprep.subr.mxu0 0.0
    %1310 = vmatpush1.msra.mxu0 0.0
    %1311 = vmatprep.subr.mxu0 0.0
    %1312 = vmatpush1.msra.mxu0 0.0
    %1313 = vmatprep.subr.mxu0 0.0
    %1314 = vmatpush1.msra.mxu0 0.0
    %1315 = vmatprep.subr.mxu0 0.0
    %1316 = vmatpush1.msra.mxu0 0.0
    %1317 = vmatprep.subr.mxu0 0.0
    %1318 = vmatpush1.msra.mxu0 0.0
    %1319 = vmatprep.subr.mxu0 0.0
    %1320 = vmatpush1.msra.mxu0 0.0
    %1321 = vmatprep.subr.mxu0 0.0
    %1322 = vmatpush1.msra.mxu0 0.0
    %1323 = vmatprep.subr.mxu0 0.0
    %1324 = vmatpush1.msra.mxu0 0.0
    %1325 = vmatprep.subr.mxu0 0.0
    %1326 = vmatpush1.msra.mxu0 0.0
    %1327 = vmatprep.subr.mxu0 0.0
    %1328 = vmatpush1.msra.mxu0 0.0
    %1329 = vmatprep.subr.mxu0 0.0
    %1330 = vmatpush1.msra.mxu0 0.0
    %1331 = vmatprep.subr.mxu0 0.0
    %1332 = vmatpush1.msra.mxu0 0.0
    %1333 = vmatprep.subr.mxu0 0.0
    %1334 = vmatpush1.msra.mxu0 0.0
    %1335 = vmatprep.subr.mxu0 0.0
    %1336 = vmatpush1.msra.mxu0 0.0
    %1337 = vmatprep.subr.mxu0 0.0
    %1338 = vmatpush1.msra.mxu0 0.0
    %1339 = vmatprep.subr.mxu0 0.0
    %1340 = vmatpush1.msra.mxu0 0.0
    %1341 = vmatprep.subr.mxu0 0.0
    %1342 = vmatpush1.msra.mxu0 0.0
    %1343 = vmatprep.subr.mxu0 0.0
    %1344 = vmatpush1.msra.mxu0 0.0
    %1345 = vmatprep.subr.mxu0 0.0
    %1346 = vmatpush1.msra.mxu0 0.0
    %1347 = vmatprep.subr.mxu0 0.0
    %1348 = vmatpush1.msra.mxu0 0.0
    %1349 = vmatprep.subr.mxu0 0.0
    %1350 = vmatpush1.msra.mxu0 0.0
    %1351 = vmatprep.subr.mxu0 0.0
    %1352 = vmatpush1.msra.mxu0 0.0
    %1353 = vmatprep.mubr.f32.mxu0 0.0
    %1354 = vmatmul.mubr.f32.gmra.mrb[0].mxu0 %v568
    %v1355 = vpop.f32.mrb[0].mxu0
    %v1356 = vadd.f32 0.0, %v1355
    %v1357 = vpop.f32.mrb[0].mxu0
    %1358 = vmatprep.mubr.f32.mxu0 0.0
    %1359 = vmatmul.mubr.f32.gmra.mrb[0].mxu0 %v571
    %v1360 = vpop.f32.mrb[0].mxu0
    %v1361 = vadd.f32 0.0, %v1360
    %v1362 = vpop.f32.mrb[0].mxu0
    %1363 = vdwg.mxu0
    %1364 = vmatprep.subr.mxu0 0.0
    %1365 = vmatpush1.msra.mxu0 %v1288
    %1366 = vmatprep.subr.mxu0 0.0
    %1367 = vmatpush1.msra.mxu0 0.0
    %1368 = vmatprep.subr.mxu0 0.0
    %1369 = vmatpush1.msra.mxu0 0.0
    %1370 = vmatprep.subr.mxu0 0.0
    %1371 = vmatpush1.msra.mxu0 0.0
    %1372 = vmatprep.subr.mxu0 0.0
    %1373 = vmatpush1.msra.mxu0 0.0
    %1374 = vmatprep.subr.mxu0 0.0
    %1375 = vmatpush1.msra.mxu0 0.0
    %1376 = vmatprep.subr.mxu0 0.0
    %1377 = vmatpush1.msra.mxu0 0.0
    %1378 = vmatprep.subr.mxu0 0.0
    %1379 = vmatpush1.msra.mxu0 0.0
    %1380 = vmatprep.subr.mxu0 0.0
    %1381 = vmatpush1.msra.mxu0 0.0
    %1382 = vmatprep.subr.mxu0 0.0
    %1383 = vmatpush1.msra.mxu0 0.0
    %1384 = vmatprep.subr.mxu0 0.0
    %1385 = vmatpush1.msra.mxu0 0.0
    %1386 = vmatprep.subr.mxu0 0.0
    %1387 = vmatpush1.msra.mxu0 0.0
    %1388 = vmatprep.subr.mxu0 0.0
    %1389 = vmatpush1.msra.mxu0 0.0
    %1390 = vmatprep.subr.mxu0 0.0
    %1391 = vmatpush1.msra.mxu0 0.0
    %1392 = vmatprep.subr.mxu0 0.0
    %1393 = vmatpush1.msra.mxu0 0.0
    %1394 = vmatprep.subr.mxu0 0.0
    %1395 = vmatpush1.msra.mxu0 0.0
    %1396 = vmatprep.subr.mxu0 0.0
    %1397 = vmatpush1.msra.mxu0 0.0
    %1398 = vmatprep.subr.mxu0 0.0
    %1399 = vmatpush1.msra.mxu0 0.0
    %1400 = vmatprep.subr.mxu0 0.0
    %1401 = vmatpush1.msra.mxu0 0.0
    %1402 = vmatprep.subr.mxu0 0.0
    %1403 = vmatpush1.msra.mxu0 0.0
    %1404 = vmatprep.subr.mxu0 0.0
    %1405 = vmatpush1.msra.mxu0 0.0
    %1406 = vmatprep.subr.mxu0 0.0
    %1407 = vmatpush1.msra.mxu0 0.0
    %1408 = vmatprep.subr.mxu0 0.0
    %1409 = vmatpush1.msra.mxu0 0.0
    %1410 = vmatprep.subr.mxu0 0.0
    %1411 = vmatpush1.msra.mxu0 0.0
    %1412 = vmatprep.subr.mxu0 0.0
    %1413 = vmatpush1.msra.mxu0 0.0
    %1414 = vmatprep.subr.mxu0 0.0
    %1415 = vmatpush1.msra.mxu0 0.0
    %1416 = vmatprep.subr.mxu0 0.0
    %1417 = vmatpush1.msra.mxu0 0.0
    %1418 = vmatprep.subr.mxu0 0.0
    %1419 = vmatpush1.msra.mxu0 0.0
    %1420 = vmatprep.subr.mxu0 0.0
    %1421 = vmatpush1.msra.mxu0 0.0
    %1422 = vmatprep.subr.mxu0 0.0
    %1423 = vmatpush1.msra.mxu0 0.0
    %1424 = vmatprep.subr.mxu0 0.0
    %1425 = vmatpush1.msra.mxu0 0.0
    %1426 = vmatprep.subr.mxu0 0.0
    %1427 = vmatpush1.msra.mxu0 0.0
    %1428 = vmatprep.mubr.f32.mxu0 0.0
    %1429 = vmatmul.mubr.f32.gmra.mrb[0].mxu0 %v649
    %v1430 = vpop.f32.mrb[0].mxu0
    %v1431 = vadd.f32 0.0, %v1430
    %v1432 = vpop.f32.mrb[0].mxu0
    %1433 = vmatprep.mubr.f32.mxu0 0.0
    %1434 = vmatmul.mubr.f32.gmra.mrb[0].mxu0 %v652
    %v1435 = vpop.f32.mrb[0].mxu0
    %v1436 = vadd.f32 0.0, %v1435
    %v1437 = vpop.f32.mrb[0].mxu0
    %1438 = vdwg.mxu0
    %v1439 = vmul.f32 %v1356, %v1431
    %v1440 = vmul.f32 %v1361, %v1436
    %v1442 = vsel %vm1125, %v1439, 0
    %v1445 = vsel %vm1125, %v1440, 0
    %1447 = vmatprep.subr.mxu0 0.0
    %1448 = vmatpush1.msra.mxu0 %v527
    %1449 = vmatprep.subr.mxu0 0.0
    %1450 = vmatpush1.msra.mxu0 %v1131
    %1451 = vmatprep.subr.mxu0 0.0
    %1452 = vmatpush1.msra.mxu0 0.0
    %1453 = vmatprep.subr.mxu0 0.0
    %1454 = vmatpush1.msra.mxu0 0.0
    %1455 = vmatprep.subr.mxu0 0.0
    %1456 = vmatpush1.msra.mxu0 0.0
    %1457 = vmatprep.subr.mxu0 0.0
    %1458 = vmatpush1.msra.mxu0 0.0
    %1459 = vmatprep.subr.mxu0 0.0
    %1460 = vmatpush1.msra.mxu0 0.0
    %1461 = vmatprep.subr.mxu0 0.0
    %1462 = vmatpush1.msra.mxu0 0.0
    %1463 = vmatprep.subr.mxu0 0.0
    %1464 = vmatpush1.msra.mxu0 0.0
    %1465 = vmatprep.subr.mxu0 0.0
    %1466 = vmatpush1.msra.mxu0 0.0
    %1467 = vmatprep.subr.mxu0 0.0
    %1468 = vmatpush1.msra.mxu0 0.0
    %1469 = vmatprep.subr.mxu0 0.0
    %1470 = vmatpush1.msra.mxu0 0.0
    %1471 = vmatprep.subr.mxu0 0.0
    %1472 = vmatpush1.msra.mxu0 0.0
    %1473 = vmatprep.subr.mxu0 0.0
    %1474 = vmatpush1.msra.mxu0 0.0
    %1475 = vmatprep.subr.mxu0 0.0
    %1476 = vmatpush1.msra.mxu0 0.0
    %1477 = vmatprep.subr.mxu0 0.0
    %1478 = vmatpush1.msra.mxu0 0.0
    %1479 = vmatprep.subr.mxu0 0.0
    %1480 = vmatpush1.msra.mxu0 0.0
    %1481 = vmatprep.subr.mxu0 0.0
    %1482 = vmatpush1.msra.mxu0 0.0
    %1483 = vmatprep.subr.mxu0 0.0
    %1484 = vmatpush1.msra.mxu0 0.0
    %1485 = vmatprep.subr.mxu0 0.0
    %1486 = vmatpush1.msra.mxu0 0.0
    %1487 = vmatprep.subr.mxu0 0.0
    %1488 = vmatpush1.msra.mxu0 0.0
    %1489 = vmatprep.subr.mxu0 0.0
    %1490 = vmatpush1.msra.mxu0 0.0
    %1491 = vmatprep.subr.mxu0 0.0
    %1492 = vmatpush1.msra.mxu0 0.0
    %1493 = vmatprep.subr.mxu0 0.0
    %1494 = vmatpush1.msra.mxu0 0.0
    %1495 = vmatprep.subr.mxu0 0.0
    %1496 = vmatpush1.msra.mxu0 0.0
    %1497 = vmatprep.subr.mxu0 0.0
    %1498 = vmatpush1.msra.mxu0 0.0
    %1499 = vmatprep.subr.mxu0 0.0
    %1500 = vmatpush1.msra.mxu0 0.0
    %1501 = vmatprep.subr.mxu0 0.0
    %1502 = vmatpush1.msra.mxu0 0.0
    %1503 = vmatprep.subr.mxu0 0.0
    %1504 = vmatpush1.msra.mxu0 0.0
    %1505 = vmatprep.subr.mxu0 0.0
    %1506 = vmatpush1.msra.mxu0 0.0
    %1507 = vmatprep.subr.mxu0 0.0
    %1508 = vmatpush1.msra.mxu0 0.0
    %1509 = vmatprep.subr.mxu0 0.0
    %1510 = vmatpush1.msra.mxu0 0.0
    %1511 = vmatprep.mubr.f32.mxu0 0.0
    %1512 = vmatmul.mubr.f32.gmra.mrb[0].mxu0 %v1442
    %v1513 = vpop.f32.mrb[0].mxu0
    %v1514 = vadd.f32 0.0, %v1513
    %v1515 = vpop.f32.mrb[0].mxu0
    %1516 = vmatprep.mubr.f32.mxu0 0.0
    %1517 = vmatmul.mubr.f32.gmra.mrb[0].mxu0 %v1445
    %v1518 = vpop.f32.mrb[0].mxu0
    %v1519 = vadd.f32 0.0, %v1518
    %v1520 = vpop.f32.mrb[0].mxu0
    %1521 = vdwg.mxu0
    %1522 = vmatprep.subr.mxu0 0.0
    %1523 = vmatpush1.msra.mxu0 %v513
    %1524 = vmatprep.subr.mxu0 0.0
    %1525 = vmatpush1.msra.mxu0 0.0
    %1526 = vmatprep.subr.mxu0 0.0
    %1527 = vmatpush1.msra.mxu0 0.0
    %1528 = vmatprep.subr.mxu0 0.0
    %1529 = vmatpush1.msra.mxu0 0.0
    %1530 = vmatprep.subr.mxu0 0.0
    %1531 = vmatpush1.msra.mxu0 0.0
    %1532 = vmatprep.subr.mxu0 0.0
    %1533 = vmatpush1.msra.mxu0 0.0
    %1534 = vmatprep.subr.mxu0 0.0
    %1535 = vmatpush1.msra.mxu0 0.0
    %1536 = vmatprep.subr.mxu0 0.0
    %1537 = vmatpush1.msra.mxu0 0.0
    %1538 = vmatprep.subr.mxu0 0.0
    %1539 = vmatpush1.msra.mxu0 0.0
    %1540 = vmatprep.subr.mxu0 0.0
    %1541 = vmatpush1.msra.mxu0 0.0
    %1542 = vmatprep.subr.mxu0 0.0
    %1543 = vmatpush1.msra.mxu0 0.0
    %1544 = vmatprep.subr.mxu0 0.0
    %1545 = vmatpush1.msra.mxu0 0.0
    %1546 = vmatprep.subr.mxu0 0.0
    %1547 = vmatpush1.msra.mxu0 0.0
    %1548 = vmatprep.subr.mxu0 0.0
    %1549 = vmatpush1.msra.mxu0 0.0
    %1550 = vmatprep.subr.mxu0 0.0
    %1551 = vmatpush1.msra.mxu0 0.0
    %1552 = vmatprep.subr.mxu0 0.0
    %1553 = vmatpush1.msra.mxu0 0.0
    %1554 = vmatprep.subr.mxu0 0.0
    %1555 = vmatpush1.msra.mxu0 0.0
    %1556 = vmatprep.subr.mxu0 0.0
    %1557 = vmatpush1.msra.mxu0 0.0
    %1558 = vmatprep.subr.mxu0 0.0
    %1559 = vmatpush1.msra.mxu0 0.0
    %1560 = vmatprep.subr.mxu0 0.0
    %1561 = vmatpush1.msra.mxu0 0.0
    %1562 = vmatprep.subr.mxu0 0.0
    %1563 = vmatpush1.msra.mxu0 0.0
    %1564 = vmatprep.subr.mxu0 0.0
    %1565 = vmatpush1.msra.mxu0 0.0
    %1566 = vmatprep.subr.mxu0 0.0
    %1567 = vmatpush1.msra.mxu0 0.0
    %1568 = vmatprep.subr.mxu0 0.0
    %1569 = vmatpush1.msra.mxu0 0.0
    %1570 = vmatprep.subr.mxu0 0.0
    %1571 = vmatpush1.msra.mxu0 0.0
    %1572 = vmatprep.subr.mxu0 0.0
    %1573 = vmatpush1.msra.mxu0 0.0
    %1574 = vmatprep.subr.mxu0 0.0
    %1575 = vmatpush1.msra.mxu0 0.0
    %1576 = vmatprep.subr.mxu0 0.0
    %1577 = vmatpush1.msra.mxu0 0.0
    %1578 = vmatprep.subr.mxu0 0.0
    %1579 = vmatpush1.msra.mxu0 0.0
    %1580 = vmatprep.subr.mxu0 0.0
    %1581 = vmatpush1.msra.mxu0 0.0
    %1582 = vmatprep.subr.mxu0 0.0
    %1583 = vmatpush1.msra.mxu0 0.0
    %1584 = vmatprep.subr.mxu0 0.0
    %1585 = vmatpush1.msra.mxu0 0.0
    %1586 = vmatprep.mubr.f32.mxu0 0.0
    %1587 = vmatmul.mubr.f32.gmra.mrb[0].mxu0 %v568
    %v1588 = vpop.f32.mrb[0].mxu0
    %v1589 = vadd.f32 0.0, %v1588
    %v1590 = vpop.f32.mrb[0].mxu0
    %1591 = vmatprep.mubr.f32.mxu0 0.0
    %1592 = vmatmul.mubr.f32.gmra.mrb[0].mxu0 %v571
    %v1593 = vpop.f32.mrb[0].mxu0
    %v1594 = vadd.f32 0.0, %v1593
    %v1595 = vpop.f32.mrb[0].mxu0
    %1596 = vdwg.mxu0
    %1597 = vmatprep.subr.mxu0 0.0
    %1598 = vmatpush1.msra.mxu0 %v513
    %1599 = vmatprep.subr.mxu0 0.0
    %1600 = vmatpush1.msra.mxu0 0.0
    %1601 = vmatprep.subr.mxu0 0.0
    %1602 = vmatpush1.msra.mxu0 0.0
    %1603 = vmatprep.subr.mxu0 0.0
    %1604 = vmatpush1.msra.mxu0 0.0
    %1605 = vmatprep.subr.mxu0 0.0
    %1606 = vmatpush1.msra.mxu0 0.0
    %1607 = vmatprep.subr.mxu0 0.0
    %1608 = vmatpush1.msra.mxu0 0.0
    %1609 = vmatprep.subr.mxu0 0.0
    %1610 = vmatpush1.msra.mxu0 0.0
    %1611 = vmatprep.subr.mxu0 0.0
    %1612 = vmatpush1.msra.mxu0 0.0
    %1613 = vmatprep.subr.mxu0 0.0
    %1614 = vmatpush1.msra.mxu0 0.0
    %1615 = vmatprep.subr.mxu0 0.0
    %1616 = vmatpush1.msra.mxu0 0.0
    %1617 = vmatprep.subr.mxu0 0.0
    %1618 = vmatpush1.msra.mxu0 0.0
    %1619 = vmatprep.subr.mxu0 0.0
    %1620 = vmatpush1.msra.mxu0 0.0
    %1621 = vmatprep.subr.mxu0 0.0
    %1622 = vmatpush1.msra.mxu0 0.0
    %1623 = vmatprep.subr.mxu0 0.0
    %1624 = vmatpush1.msra.mxu0 0.0
    %1625 = vmatprep.subr.mxu0 0.0
    %1626 = vmatpush1.msra.mxu0 0.0
    %1627 = vmatprep.subr.mxu0 0.0
    %1628 = vmatpush1.msra.mxu0 0.0
    %1629 = vmatprep.subr.mxu0 0.0
    %1630 = vmatpush1.msra.mxu0 0.0
    %1631 = vmatprep.subr.mxu0 0.0
    %1632 = vmatpush1.msra.mxu0 0.0
    %1633 = vmatprep.subr.mxu0 0.0
    %1634 = vmatpush1.msra.mxu0 0.0
    %1635 = vmatprep.subr.mxu0 0.0
    %1636 = vmatpush1.msra.mxu0 0.0
    %1637 = vmatprep.subr.mxu0 0.0
    %1638 = vmatpush1.msra.mxu0 0.0
    %1639 = vmatprep.subr.mxu0 0.0
    %1640 = vmatpush1.msra.mxu0 0.0
    %1641 = vmatprep.subr.mxu0 0.0
    %1642 = vmatpush1.msra.mxu0 0.0
    %1643 = vmatprep.subr.mxu0 0.0
    %1644 = vmatpush1.msra.mxu0 0.0
    %1645 = vmatprep.subr.mxu0 0.0
    %1646 = vmatpush1.msra.mxu0 0.0
    %1647 = vmatprep.subr.mxu0 0.0
    %1648 = vmatpush1.msra.mxu0 0.0
    %1649 = vmatprep.subr.mxu0 0.0
    %1650 = vmatpush1.msra.mxu0 0.0
    %1651 = vmatprep.subr.mxu0 0.0
    %1652 = vmatpush1.msra.mxu0 0.0
    %1653 = vmatprep.subr.mxu0 0.0
    %1654 = vmatpush1.msra.mxu0 0.0
    %1655 = vmatprep.subr.mxu0 0.0
    %1656 = vmatpush1.msra.mxu0 0.0
    %1657 = vmatprep.subr.mxu0 0.0
    %1658 = vmatpush1.msra.mxu0 0.0
    %1659 = vmatprep.subr.mxu0 0.0
    %1660 = vmatpush1.msra.mxu0 0.0
    %1661 = vmatprep.mubr.f32.mxu0 0.0
    %1662 = vmatmul.mubr.f32.gmra.mrb[0].mxu0 %v649
    %v1663 = vpop.f32.mrb[0].mxu0
    %v1664 = vadd.f32 0.0, %v1663
    %v1665 = vpop.f32.mrb[0].mxu0
    %1666 = vmatprep.mubr.f32.mxu0 0.0
    %1667 = vmatmul.mubr.f32.gmra.mrb[0].mxu0 %v652
    %v1668 = vpop.f32.mrb[0].mxu0
    %v1669 = vadd.f32 0.0, %v1668
    %v1670 = vpop.f32.mrb[0].mxu0
    %1671 = vdwg.mxu0
    %v1672 = vld [vmem:[%s37] sm:$0xff]
    %v1673 = vld [vmem:[%s37 + $0x8] sm:$0xff]
    %v1674 = vld [vmem:[%s37 + $0x10] sm:$0xff]
    %v1675 = vld [vmem:[%s37 + $0x18] sm:$0xff]
    %v1676 = vld [vmem:[%s39] sm:$0xff]
    %v1677 = vld [vmem:[%s39 + $0x8] sm:$0xff]
    %v1678 = vld [vmem:[%s39 + $0x10] sm:$0xff]
    %v1679 = vld [vmem:[%s39 + $0x18] sm:$0xff]
    %vm1680 = vcmask 261120
    %v1682 = vsel %vm1680, %v1664, 0
    %v1685 = vsel %vm1680, %v1669, 0
    %1687 = vmatprep.subr.mxu0 0.0
    %1688 = vmatpush1.msra.mxu0 %v1676
    %1689 = vmatprep.subr.mxu0 0.0
    %1690 = vmatpush1.msra.mxu0 %v1677
    %1691 = vmatprep.subr.mxu0 0.0
    %1692 = vmatpush1.msra.mxu0 %v1678
    %1693 = vmatprep.subr.mxu0 0.0
    %1694 = vmatpush1.msra.mxu0 %v1679
    %1695 = vmatprep.subr.mxu0 0.0
    %1696 = vmatpush1.msra.mxu0 0.0
    %1697 = vmatprep.subr.mxu0 0.0
    %1698 = vmatpush1.msra.mxu0 0.0
    %1699 = vmatprep.subr.mxu0 0.0
    %1700 = vmatpush1.msra.mxu0 0.0
    %1701 = vmatprep.subr.mxu0 0.0
    %1702 = vmatpush1.msra.mxu0 0.0
    %1703 = vmatprep.subr.mxu0 0.0
    %1704 = vmatpush1.msra.mxu0 0.0
    %1705 = vmatprep.subr.mxu0 0.0
    %1706 = vmatpush1.msra.mxu0 0.0
    %1707 = vmatprep.subr.mxu0 0.0
    %1708 = vmatpush1.msra.mxu0 0.0
    %1709 = vmatprep.subr.mxu0 0.0
    %1710 = vmatpush1.msra.mxu0 0.0
    %1711 = vmatprep.subr.mxu0 0.0
    %1712 = vmatpush1.msra.mxu0 0.0
    %1713 = vmatprep.subr.mxu0 0.0
    %1714 = vmatpush1.msra.mxu0 0.0
    %1715 = vmatprep.subr.mxu0 0.0
    %1716 = vmatpush1.msra.mxu0 0.0
    %1717 = vmatprep.subr.mxu0 0.0
    %1718 = vmatpush1.msra.mxu0 0.0
    %1719 = vmatprep.subr.mxu0 0.0
    %1720 = vmatpush1.msra.mxu0 0.0
    %1721 = vmatprep.subr.mxu0 0.0
    %1722 = vmatpush1.msra.mxu0 0.0
    %1723 = vmatprep.subr.mxu0 0.0
    %1724 = vmatpush1.msra.mxu0 0.0
    %1725 = vmatprep.subr.mxu0 0.0
    %1726 = vmatpush1.msra.mxu0 0.0
    %1727 = vmatprep.subr.mxu0 0.0
    %1728 = vmatpush1.msra.mxu0 0.0
    %1729 = vmatprep.subr.mxu0 0.0
    %1730 = vmatpush1.msra.mxu0 0.0
    %1731 = vmatprep.subr.mxu0 0.0
    %1732 = vmatpush1.msra.mxu0 0.0
    %1733 = vmatprep.subr.mxu0 0.0
    %1734 = vmatpush1.msra.mxu0 0.0
    %1735 = vmatprep.subr.mxu0 0.0
    %1736 = vmatpush1.msra.mxu0 0.0
    %1737 = vmatprep.subr.mxu0 0.0
    %1738 = vmatpush1.msra.mxu0 0.0
    %1739 = vmatprep.subr.mxu0 0.0
    %1740 = vmatpush1.msra.mxu0 0.0
    %1741 = vmatprep.subr.mxu0 0.0
    %1742 = vmatpush1.msra.mxu0 0.0
    %1743 = vmatprep.subr.mxu0 0.0
    %1744 = vmatpush1.msra.mxu0 0.0
    %1745 = vmatprep.subr.mxu0 0.0
    %1746 = vmatpush1.msra.mxu0 0.0
    %1747 = vmatprep.subr.mxu0 0.0
    %1748 = vmatpush1.msra.mxu0 0.0
    %1749 = vmatprep.subr.mxu0 0.0
    %1750 = vmatpush1.msra.mxu0 0.0
    %1751 = vmatprep.mubr.f32.mxu0 0.0
    %1752 = vmatmul.mubr.f32.gmra.mrb[0].mxu0 %v1682
    %v1753 = vpop.f32.mrb[0].mxu0
    %v1754 = vadd.f32 0.0, %v1753
    %v1755 = vpop.f32.mrb[0].mxu0
    %1756 = vmatprep.mubr.f32.mxu0 0.0
    %1757 = vmatmul.mubr.f32.gmra.mrb[0].mxu0 %v1685
    %v1758 = vpop.f32.mrb[0].mxu0
    %v1759 = vadd.f32 0.0, %v1758
    %v1760 = vpop.f32.mrb[0].mxu0
    %1761 = vdwg.mxu0
    %v1763 = vsel %vm1680, %v1589, 0
    %v1766 = vsel %vm1680, %v1594, 0
    %1768 = vmatprep.subr.mxu0 0.0
    %1769 = vmatpush1.msra.mxu0 %v1672
    %1770 = vmatprep.subr.mxu0 0.0
    %1771 = vmatpush1.msra.mxu0 %v1673
    %1772 = vmatprep.subr.mxu0 0.0
    %1773 = vmatpush1.msra.mxu0 %v1674
    %1774 = vmatprep.subr.mxu0 0.0
    %1775 = vmatpush1.msra.mxu0 %v1675
    %1776 = vmatprep.subr.mxu0 0.0
    %1777 = vmatpush1.msra.mxu0 0.0
    %1778 = vmatprep.subr.mxu0 0.0
    %1779 = vmatpush1.msra.mxu0 0.0
    %1780 = vmatprep.subr.mxu0 0.0
    %1781 = vmatpush1.msra.mxu0 0.0
    %1782 = vmatprep.subr.mxu0 0.0
    %1783 = vmatpush1.msra.mxu0 0.0
    %1784 = vmatprep.subr.mxu0 0.0
    %1785 = vmatpush1.msra.mxu0 0.0
    %1786 = vmatprep.subr.mxu0 0.0
    %1787 = vmatpush1.msra.mxu0 0.0
    %1788 = vmatprep.subr.mxu0 0.0
    %1789 = vmatpush1.msra.mxu0 0.0
    %1790 = vmatprep.subr.mxu0 0.0
    %1791 = vmatpush1.msra.mxu0 0.0
    %1792 = vmatprep.subr.mxu0 0.0
    %1793 = vmatpush1.msra.mxu0 0.0
    %1794 = vmatprep.subr.mxu0 0.0
    %1795 = vmatpush1.msra.mxu0 0.0
    %1796 = vmatprep.subr.mxu0 0.0
    %1797 = vmatpush1.msra.mxu0 0.0
    %1798 = vmatprep.subr.mxu0 0.0
    %1799 = vmatpush1.msra.mxu0 0.0
    %1800 = vmatprep.subr.mxu0 0.0
    %1801 = vmatpush1.msra.mxu0 0.0
    %1802 = vmatprep.subr.mxu0 0.0
    %1803 = vmatpush1.msra.mxu0 0.0
    %1804 = vmatprep.subr.mxu0 0.0
    %1805 = vmatpush1.msra.mxu0 0.0
    %1806 = vmatprep.subr.mxu0 0.0
    %1807 = vmatpush1.msra.mxu0 0.0
    %1808 = vmatprep.subr.mxu0 0.0
    %1809 = vmatpush1.msra.mxu0 0.0
    %1810 = vmatprep.subr.mxu0 0.0
    %1811 = vmatpush1.msra.mxu0 0.0
    %1812 = vmatprep.subr.mxu0 0.0
    %1813 = vmatpush1.msra.mxu0 0.0
    %1814 = vmatprep.subr.mxu0 0.0
    %1815 = vmatpush1.msra.mxu0 0.0
    %1816 = vmatprep.subr.mxu0 0.0
    %1817 = vmatpush1.msra.mxu0 0.0
    %1818 = vmatprep.subr.mxu0 0.0
    %1819 = vmatpush1.msra.mxu0 0.0
    %1820 = vmatprep.subr.mxu0 0.0
    %1821 = vmatpush1.msra.mxu0 0.0
    %1822 = vmatprep.subr.mxu0 0.0
    %1823 = vmatpush1.msra.mxu0 0.0
    %1824 = vmatprep.subr.mxu0 0.0
    %1825 = vmatpush1.msra.mxu0 0.0
    %1826 = vmatprep.subr.mxu0 0.0
    %1827 = vmatpush1.msra.mxu0 0.0
    %1828 = vmatprep.subr.mxu0 0.0
    %1829 = vmatpush1.msra.mxu0 0.0
    %1830 = vmatprep.subr.mxu0 0.0
    %1831 = vmatpush1.msra.mxu0 0.0
    %1832 = vmatprep.mubr.f32.mxu0 0.0
    %1833 = vmatmul.mubr.f32.gmra.mrb[0].mxu0 %v1763
    %v1834 = vpop.f32.mrb[0].mxu0
    %v1835 = vadd.f32 %v1754, %v1834
    %v1836 = vpop.f32.mrb[0].mxu0
    %1837 = vmatprep.mubr.f32.mxu0 0.0
    %1838 = vmatmul.mubr.f32.gmra.mrb[0].mxu0 %v1766
    %v1839 = vpop.f32.mrb[0].mxu0
    %v1840 = vadd.f32 %v1759, %v1839
    %v1841 = vpop.f32.mrb[0].mxu0
    %1842 = vdwg.mxu0
    %v1843 = vld [vmem:[#allocation10] sm:$0xff]
    %v1845 = vsel %vm566, %v517, 0
    %v1848 = vsel %vm566, %v518, 0
    %1850 = vmatprep.subr.mxu0 0.0
    %1851 = vmatpush1.msra.mxu0 %v1843
    %1852 = vmatprep.subr.mxu0 0.0
    %1853 = vmatpush1.msra.mxu0 0.0
    %1854 = vmatprep.subr.mxu0 0.0
    %1855 = vmatpush1.msra.mxu0 0.0
    %1856 = vmatprep.subr.mxu0 0.0
    %1857 = vmatpush1.msra.mxu0 0.0
    %1858 = vmatprep.subr.mxu0 0.0
    %1859 = vmatpush1.msra.mxu0 0.0
    %1860 = vmatprep.subr.mxu0 0.0
    %1861 = vmatpush1.msra.mxu0 0.0
    %1862 = vmatprep.subr.mxu0 0.0
    %1863 = vmatpush1.msra.mxu0 0.0
    %1864 = vmatprep.subr.mxu0 0.0
    %1865 = vmatpush1.msra.mxu0 0.0
    %1866 = vmatprep.subr.mxu0 0.0
    %1867 = vmatpush1.msra.mxu0 0.0
    %1868 = vmatprep.subr.mxu0 0.0
    %1869 = vmatpush1.msra.mxu0 0.0
    %1870 = vmatprep.subr.mxu0 0.0
    %1871 = vmatpush1.msra.mxu0 0.0
    %1872 = vmatprep.subr.mxu0 0.0
    %1873 = vmatpush1.msra.mxu0 0.0
    %1874 = vmatprep.subr.mxu0 0.0
    %1875 = vmatpush1.msra.mxu0 0.0
    %1876 = vmatprep.subr.mxu0 0.0
    %1877 = vmatpush1.msra.mxu0 0.0
    %1878 = vmatprep.subr.mxu0 0.0
    %1879 = vmatpush1.msra.mxu0 0.0
    %1880 = vmatprep.subr.mxu0 0.0
    %1881 = vmatpush1.msra.mxu0 0.0
    %1882 = vmatprep.subr.mxu0 0.0
    %1883 = vmatpush1.msra.mxu0 0.0
    %1884 = vmatprep.subr.mxu0 0.0
    %1885 = vmatpush1.msra.mxu0 0.0
    %1886 = vmatprep.subr.mxu0 0.0
    %1887 = vmatpush1.msra.mxu0 0.0
    %1888 = vmatprep.subr.mxu0 0.0
    %1889 = vmatpush1.msra.mxu0 0.0
    %1890 = vmatprep.subr.mxu0 0.0
    %1891 = vmatpush1.msra.mxu0 0.0
    %1892 = vmatprep.subr.mxu0 0.0
    %1893 = vmatpush1.msra.mxu0 0.0
    %1894 = vmatprep.subr.mxu0 0.0
    %1895 = vmatpush1.msra.mxu0 0.0
    %1896 = vmatprep.subr.mxu0 0.0
    %1897 = vmatpush1.msra.mxu0 0.0
    %1898 = vmatprep.subr.mxu0 0.0
    %1899 = vmatpush1.msra.mxu0 0.0
    %1900 = vmatprep.subr.mxu0 0.0
    %1901 = vmatpush1.msra.mxu0 0.0
    %1902 = vmatprep.subr.mxu0 0.0
    %1903 = vmatpush1.msra.mxu0 0.0
    %1904 = vmatprep.subr.mxu0 0.0
    %1905 = vmatpush1.msra.mxu0 0.0
    %1906 = vmatprep.subr.mxu0 0.0
    %1907 = vmatpush1.msra.mxu0 0.0
    %1908 = vmatprep.subr.mxu0 0.0
    %1909 = vmatpush1.msra.mxu0 0.0
    %1910 = vmatprep.subr.mxu0 0.0
    %1911 = vmatpush1.msra.mxu0 0.0
    %1912 = vmatprep.subr.mxu0 0.0
    %1913 = vmatpush1.msra.mxu0 0.0
    %1914 = vmatprep.mubr.f32.mxu0 0.0
    %1915 = vmatmul.mubr.f32.gmra.mrb[0].mxu0 %v1845
    %v1916 = vpop.f32.mrb[0].mxu0
    %v1917 = vadd.f32 0.0, %v1916
    %v1918 = vpop.f32.mrb[0].mxu0
    %1919 = vmatprep.mubr.f32.mxu0 0.0
    %1920 = vmatmul.mubr.f32.gmra.mrb[0].mxu0 %v1848
    %v1921 = vpop.f32.mrb[0].mxu0
    %v1922 = vadd.f32 0.0, %v1921
    %v1923 = vpop.f32.mrb[0].mxu0
    %1924 = vdwg.mxu0
    %v1925 = vadd.f32 %v1835, %v1917
    %v1926 = vadd.f32 %v1840, %v1922
    %v1927 = vld [vmem:[#allocation12] sm:$0x1]
    %v1929 = vlaneseq
    %v1930 = vshrl.u32 %v1929, 7
    %v1931 = vsub.s32 0, %v1930
    %v1932 = vrot.slane %v1927, %v1931
    %v1934 = vadd.f32 %v1925, %v1932
    %v1935 = vadd.f32 %v1926, %v1932
    %v1936 = vxor.u32 %v1934, 2147483648
    %v1937 = vxor.u32 %v1935, 2147483648
    %v1938 = vmul.f32 %v1936, 1.442695
    %v1939 = vpow.pop %v1938
    %v1940 = vmul.f32 %v1937, 1.442695
    %v1941 = vpow.pop %v1940
    %v1942 = vadd.f32 %v1939, 1.0
    %v1943 = vadd.f32 %v1941, 1.0
    %v1944 = vrcp.pop %v1942
    %v1945 = vmul.f32 1.0, %v1944
    %v1946 = vrcp.pop %v1943
    %v1947 = vmul.f32 1.0, %v1946
    %v1948 = vmul.f32 %v1934, %v1945
    %v1949 = vmul.f32 %v1935, %v1947
    %v1950 = vld [vmem:[%s45] sm:$0xff]
    %v1951 = vld [vmem:[%s45 + $0x8] sm:$0xff]
    %v1952 = vld [vmem:[%s45 + $0x10] sm:$0xff]
    %v1953 = vld [vmem:[%s45 + $0x18] sm:$0xff]
    %v1954 = vld [vmem:[#allocation13] sm:$0x1]
    %v1956 = vlaneseq
    %v1957 = vshrl.u32 %v1956, 7
    %v1958 = vsub.s32 0, %v1957
    %v1959 = vrot.slane %v1954, %v1958
    %v1962 = vsel %vm1680, %v1948, 0
    %v1965 = vsel %vm1680, %v1949, 0
    %1967 = vmatprep.subr.mxu0 0.0
    %1968 = vmatpush1.msra.mxu0 %v1950
    %1969 = vmatprep.subr.mxu0 0.0
    %1970 = vmatpush1.msra.mxu0 %v1951
    %1971 = vmatprep.subr.mxu0 0.0
    %1972 = vmatpush1.msra.mxu0 %v1952
    %1973 = vmatprep.subr.mxu0 0.0
    %1974 = vmatpush1.msra.mxu0 %v1953
    %1975 = vmatprep.subr.mxu0 0.0
    %1976 = vmatpush1.msra.mxu0 0.0
    %1977 = vmatprep.subr.mxu0 0.0
    %1978 = vmatpush1.msra.mxu0 0.0
    %1979 = vmatprep.subr.mxu0 0.0
    %1980 = vmatpush1.msra.mxu0 0.0
    %1981 = vmatprep.subr.mxu0 0.0
    %1982 = vmatpush1.msra.mxu0 0.0
    %1983 = vmatprep.subr.mxu0 0.0
    %1984 = vmatpush1.msra.mxu0 0.0
    %1985 = vmatprep.subr.mxu0 0.0
    %1986 = vmatpush1.msra.mxu0 0.0
    %1987 = vmatprep.subr.mxu0 0.0
    %1988 = vmatpush1.msra.mxu0 0.0
    %1989 = vmatprep.subr.mxu0 0.0
    %1990 = vmatpush1.msra.mxu0 0.0
    %1991 = vmatprep.subr.mxu0 0.0
    %1992 = vmatpush1.msra.mxu0 0.0
    %1993 = vmatprep.subr.mxu0 0.0
    %1994 = vmatpush1.msra.mxu0 0.0
    %1995 = vmatprep.subr.mxu0 0.0
    %1996 = vmatpush1.msra.mxu0 0.0
    %1997 = vmatprep.subr.mxu0 0.0
    %1998 = vmatpush1.msra.mxu0 0.0
    %1999 = vmatprep.subr.mxu0 0.0
    %2000 = vmatpush1.msra.mxu0 0.0
    %2001 = vmatprep.subr.mxu0 0.0
    %2002 = vmatpush1.msra.mxu0 0.0
    %2003 = vmatprep.subr.mxu0 0.0
    %2004 = vmatpush1.msra.mxu0 0.0
    %2005 = vmatprep.subr.mxu0 0.0
    %2006 = vmatpush1.msra.mxu0 0.0
    %2007 = vmatprep.subr.mxu0 0.0
    %2008 = vmatpush1.msra.mxu0 0.0
    %2009 = vmatprep.subr.mxu0 0.0
    %2010 = vmatpush1.msra.mxu0 0.0
    %2011 = vmatprep.subr.mxu0 0.0
    %2012 = vmatpush1.msra.mxu0 0.0
    %2013 = vmatprep.subr.mxu0 0.0
    %2014 = vmatpush1.msra.mxu0 0.0
    %2015 = vmatprep.subr.mxu0 0.0
    %2016 = vmatpush1.msra.mxu0 0.0
    %2017 = vmatprep.subr.mxu0 0.0
    %2018 = vmatpush1.msra.mxu0 0.0
    %2019 = vmatprep.subr.mxu0 0.0
    %2020 = vmatpush1.msra.mxu0 0.0
    %2021 = vmatprep.subr.mxu0 0.0
    %2022 = vmatpush1.msra.mxu0 0.0
    %2023 = vmatprep.subr.mxu0 0.0
    %2024 = vmatpush1.msra.mxu0 0.0
    %2025 = vmatprep.subr.mxu0 0.0
    %2026 = vmatpush1.msra.mxu0 0.0
    %2027 = vmatprep.subr.mxu0 0.0
    %2028 = vmatpush1.msra.mxu0 0.0
    %2029 = vmatprep.subr.mxu0 0.0
    %2030 = vmatpush1.msra.mxu0 0.0
    %2031 = vmatprep.mubr.f32.mxu0 0.0
    %2032 = vmatmul.mubr.f32.gmra.mrb[0].mxu0 %v1962
    %v2033 = vpop.f32.mrb[0].mxu0
    %v2034 = vadd.f32 %v1959, %v2033
    %v2035 = vpop.f32.mrb[0].mxu0
    %2036 = vmatprep.mubr.f32.mxu0 0.0
    %2037 = vmatmul.mubr.f32.gmra.mrb[0].mxu0 %v1965
    %v2038 = vpop.f32.mrb[0].mxu0
    %v2039 = vadd.f32 %v1959, %v2038
    %v2040 = vpop.f32.mrb[0].mxu0
    %2041 = vdwg.mxu0
    %v2042 = vld [vmem:[#allocation15] sm:$0x7]
    %v2043 = vld [vmem:[#allocation16] sm:$0xff]
    %v2044 = vld [vmem:[#allocation16 + $0x8] sm:$0x7f]
    %vm2045 = vcmask 121856
    %v2047 = vsel %vm2045, %v749, 0
    %v2050 = vsel %vm2045, %v751, 0
    %vm2052 = vcmask 1046528
    %v2054 = vsel %vm2052, %v2044, 0
    %2056 = vmatprep.subr.mxu0 0.0
    %2057 = vmatpush1.msra.mxu0 %v2043
    %2058 = vmatprep.subr.mxu0 0.0
    %2059 = vmatpush1.msra.mxu0 %v2054
    %2060 = vmatprep.subr.mxu0 0.0
    %2061 = vmatpush1.msra.mxu0 0.0
    %2062 = vmatprep.subr.mxu0 0.0
    %2063 = vmatpush1.msra.mxu0 0.0
    %2064 = vmatprep.subr.mxu0 0.0
    %2065 = vmatpush1.msra.mxu0 0.0
    %2066 = vmatprep.subr.mxu0 0.0
    %2067 = vmatpush1.msra.mxu0 0.0
    %2068 = vmatprep.subr.mxu0 0.0
    %2069 = vmatpush1.msra.mxu0 0.0
    %2070 = vmatprep.subr.mxu0 0.0
    %2071 = vmatpush1.msra.mxu0 0.0
    %2072 = vmatprep.subr.mxu0 0.0
    %2073 = vmatpush1.msra.mxu0 0.0
    %2074 = vmatprep.subr.mxu0 0.0
    %2075 = vmatpush1.msra.mxu0 0.0
    %2076 = vmatprep.subr.mxu0 0.0
    %2077 = vmatpush1.msra.mxu0 0.0
    %2078 = vmatprep.subr.mxu0 0.0
    %2079 = vmatpush1.msra.mxu0 0.0
    %2080 = vmatprep.subr.mxu0 0.0
    %2081 = vmatpush1.msra.mxu0 0.0
    %2082 = vmatprep.subr.mxu0 0.0
    %2083 = vmatpush1.msra.mxu0 0.0
    %2084 = vmatprep.subr.mxu0 0.0
    %2085 = vmatpush1.msra.mxu0 0.0
    %2086 = vmatprep.subr.mxu0 0.0
    %2087 = vmatpush1.msra.mxu0 0.0
    %2088 = vmatprep.subr.mxu0 0.0
    %2089 = vmatpush1.msra.mxu0 0.0
    %2090 = vmatprep.subr.mxu0 0.0
    %2091 = vmatpush1.msra.mxu0 0.0
    %2092 = vmatprep.subr.mxu0 0.0
    %2093 = vmatpush1.msra.mxu0 0.0
    %2094 = vmatprep.subr.mxu0 0.0
    %2095 = vmatpush1.msra.mxu0 0.0
    %2096 = vmatprep.subr.mxu0 0.0
    %2097 = vmatpush1.msra.mxu0 0.0
    %2098 = vmatprep.subr.mxu0 0.0
    %2099 = vmatpush1.msra.mxu0 0.0
    %2100 = vmatprep.subr.mxu0 0.0
    %2101 = vmatpush1.msra.mxu0 0.0
    %2102 = vmatprep.subr.mxu0 0.0
    %2103 = vmatpush1.msra.mxu0 0.0
    %2104 = vmatprep.subr.mxu0 0.0
    %2105 = vmatpush1.msra.mxu0 0.0
    %2106 = vmatprep.subr.mxu0 0.0
    %2107 = vmatpush1.msra.mxu0 0.0
    %2108 = vmatprep.subr.mxu0 0.0
    %2109 = vmatpush1.msra.mxu0 0.0
    %2110 = vmatprep.subr.mxu0 0.0
    %2111 = vmatpush1.msra.mxu0 0.0
    %2112 = vmatprep.subr.mxu0 0.0
    %2113 = vmatpush1.msra.mxu0 0.0
    %2114 = vmatprep.subr.mxu0 0.0
    %2115 = vmatpush1.msra.mxu0 0.0
    %2116 = vmatprep.subr.mxu0 0.0
    %2117 = vmatpush1.msra.mxu0 0.0
    %2118 = vmatprep.subr.mxu0 0.0
    %2119 = vmatpush1.msra.mxu0 0.0
    %2120 = vmatprep.mubr.f32.mxu0 0.0
    %2121 = vmatmul.mubr.f32.gmra.mrb[0].mxu0 %v2047
    %v2122 = vpop.f32.mrb[0].mxu0
    %v2123 = vadd.f32 0.0, %v2122
    %v2124 = vpop.f32.mrb[0].mxu0
    %2125 = vmatprep.mubr.f32.mxu0 0.0
    %2126 = vmatmul.mubr.f32.gmra.mrb[0].mxu0 %v2050
    %v2127 = vpop.f32.mrb[0].mxu0
    %v2128 = vadd.f32 0.0, %v2127
    %v2129 = vpop.f32.mrb[0].mxu0
    %2130 = vdwg.mxu0
    %v2132 = vsel %vm733, %v1514, 0
    %v2135 = vsel %vm733, %v1519, 0
    %v2138 = vsel %vm797, %v2042, 0
    %2140 = vmatprep.subr.mxu0 0.0
    %2141 = vmatpush1.msra.mxu0 %v2138
    %2142 = vmatprep.subr.mxu0 0.0
    %2143 = vmatpush1.msra.mxu0 0.0
    %2144 = vmatprep.subr.mxu0 0.0
    %2145 = vmatpush1.msra.mxu0 0.0
    %2146 = vmatprep.subr.mxu0 0.0
    %2147 = vmatpush1.msra.mxu0 0.0
    %2148 = vmatprep.subr.mxu0 0.0
    %2149 = vmatpush1.msra.mxu0 0.0
    %2150 = vmatprep.subr.mxu0 0.0
    %2151 = vmatpush1.msra.mxu0 0.0
    %2152 = vmatprep.subr.mxu0 0.0
    %2153 = vmatpush1.msra.mxu0 0.0
    %2154 = vmatprep.subr.mxu0 0.0
    %2155 = vmatpush1.msra.mxu0 0.0
    %2156 = vmatprep.subr.mxu0 0.0
    %2157 = vmatpush1.msra.mxu0 0.0
    %2158 = vmatprep.subr.mxu0 0.0
    %2159 = vmatpush1.msra.mxu0 0.0
    %2160 = vmatprep.subr.mxu0 0.0
    %2161 = vmatpush1.msra.mxu0 0.0
    %2162 = vmatprep.subr.mxu0 0.0
    %2163 = vmatpush1.msra.mxu0 0.0
    %2164 = vmatprep.subr.mxu0 0.0
    %2165 = vmatpush1.msra.mxu0 0.0
    %2166 = vmatprep.subr.mxu0 0.0
    %2167 = vmatpush1.msra.mxu0 0.0
    %2168 = vmatprep.subr.mxu0 0.0
    %2169 = vmatpush1.msra.mxu0 0.0
    %2170 = vmatprep.subr.mxu0 0.0
    %2171 = vmatpush1.msra.mxu0 0.0
    %2172 = vmatprep.subr.mxu0 0.0
    %2173 = vmatpush1.msra.mxu0 0.0
    %2174 = vmatprep.subr.mxu0 0.0
    %2175 = vmatpush1.msra.mxu0 0.0
    %2176 = vmatprep.subr.mxu0 0.0
    %2177 = vmatpush1.msra.mxu0 0.0
    %2178 = vmatprep.subr.mxu0 0.0
    %2179 = vmatpush1.msra.mxu0 0.0
    %2180 = vmatprep.subr.mxu0 0.0
    %2181 = vmatpush1.msra.mxu0 0.0
    %2182 = vmatprep.subr.mxu0 0.0
    %2183 = vmatpush1.msra.mxu0 0.0
    %2184 = vmatprep.subr.mxu0 0.0
    %2185 = vmatpush1.msra.mxu0 0.0
    %2186 = vmatprep.subr.mxu0 0.0
    %2187 = vmatpush1.msra.mxu0 0.0
    %2188 = vmatprep.subr.mxu0 0.0
    %2189 = vmatpush1.msra.mxu0 0.0
    %2190 = vmatprep.subr.mxu0 0.0
    %2191 = vmatpush1.msra.mxu0 0.0
    %2192 = vmatprep.subr.mxu0 0.0
    %2193 = vmatpush1.msra.mxu0 0.0
    %2194 = vmatprep.subr.mxu0 0.0
    %2195 = vmatpush1.msra.mxu0 0.0
    %2196 = vmatprep.subr.mxu0 0.0
    %2197 = vmatpush1.msra.mxu0 0.0
    %2198 = vmatprep.subr.mxu0 0.0
    %2199 = vmatpush1.msra.mxu0 0.0
    %2200 = vmatprep.subr.mxu0 0.0
    %2201 = vmatpush1.msra.mxu0 0.0
    %2202 = vmatprep.subr.mxu0 0.0
    %2203 = vmatpush1.msra.mxu0 0.0
    %2204 = vmatprep.mubr.f32.mxu0 0.0
    %2205 = vmatmul.mubr.f32.gmra.mrb[0].mxu0 %v2132
    %v2206 = vpop.f32.mrb[0].mxu0
    %v2207 = vadd.f32 %v2123, %v2206
    %v2208 = vpop.f32.mrb[0].mxu0
    %2209 = vmatprep.mubr.f32.mxu0 0.0
    %2210 = vmatmul.mubr.f32.gmra.mrb[0].mxu0 %v2135
    %v2211 = vpop.f32.mrb[0].mxu0
    %v2212 = vadd.f32 %v2128, %v2211
    %v2213 = vpop.f32.mrb[0].mxu0
    %2214 = vdwg.mxu0
    %v2215 = vld [vmem:[#allocation18] sm:$0xff]
    %2216 = vmatprep.subr.mxu0 0.0
    %2217 = vmatpush1.msra.mxu0 %v2215
    %2218 = vmatprep.subr.mxu0 0.0
    %2219 = vmatpush1.msra.mxu0 0.0
    %2220 = vmatprep.subr.mxu0 0.0
    %2221 = vmatpush1.msra.mxu0 0.0
    %2222 = vmatprep.subr.mxu0 0.0
    %2223 = vmatpush1.msra.mxu0 0.0
    %2224 = vmatprep.subr.mxu0 0.0
    %2225 = vmatpush1.msra.mxu0 0.0
    %2226 = vmatprep.subr.mxu0 0.0
    %2227 = vmatpush1.msra.mxu0 0.0
    %2228 = vmatprep.subr.mxu0 0.0
    %2229 = vmatpush1.msra.mxu0 0.0
    %2230 = vmatprep.subr.mxu0 0.0
    %2231 = vmatpush1.msra.mxu0 0.0
    %2232 = vmatprep.subr.mxu0 0.0
    %2233 = vmatpush1.msra.mxu0 0.0
    %2234 = vmatprep.subr.mxu0 0.0
    %2235 = vmatpush1.msra.mxu0 0.0
    %2236 = vmatprep.subr.mxu0 0.0
    %2237 = vmatpush1.msra.mxu0 0.0
    %2238 = vmatprep.subr.mxu0 0.0
    %2239 = vmatpush1.msra.mxu0 0.0
    %2240 = vmatprep.subr.mxu0 0.0
    %2241 = vmatpush1.msra.mxu0 0.0
    %2242 = vmatprep.subr.mxu0 0.0
    %2243 = vmatpush1.msra.mxu0 0.0
    %2244 = vmatprep.subr.mxu0 0.0
    %2245 = vmatpush1.msra.mxu0 0.0
    %2246 = vmatprep.subr.mxu0 0.0
    %2247 = vmatpush1.msra.mxu0 0.0
    %2248 = vmatprep.subr.mxu0 0.0
    %2249 = vmatpush1.msra.mxu0 0.0
    %2250 = vmatprep.subr.mxu0 0.0
    %2251 = vmatpush1.msra.mxu0 0.0
    %2252 = vmatprep.subr.mxu0 0.0
    %2253 = vmatpush1.msra.mxu0 0.0
    %2254 = vmatprep.subr.mxu0 0.0
    %2255 = vmatpush1.msra.mxu0 0.0
    %2256 = vmatprep.subr.mxu0 0.0
    %2257 = vmatpush1.msra.mxu0 0.0
    %2258 = vmatprep.subr.mxu0 0.0
    %2259 = vmatpush1.msra.mxu0 0.0
    %2260 = vmatprep.subr.mxu0 0.0
    %2261 = vmatpush1.msra.mxu0 0.0
    %2262 = vmatprep.subr.mxu0 0.0
    %2263 = vmatpush1.msra.mxu0 0.0
    %2264 = vmatprep.subr.mxu0 0.0
    %2265 = vmatpush1.msra.mxu0 0.0
    %2266 = vmatprep.subr.mxu0 0.0
    %2267 = vmatpush1.msra.mxu0 0.0
    %2268 = vmatprep.subr.mxu0 0.0
    %2269 = vmatpush1.msra.mxu0 0.0
    %2270 = vmatprep.subr.mxu0 0.0
    %2271 = vmatpush1.msra.mxu0 0.0
    %2272 = vmatprep.subr.mxu0 0.0
    %2273 = vmatpush1.msra.mxu0 0.0
    %2274 = vmatprep.subr.mxu0 0.0
    %2275 = vmatpush1.msra.mxu0 0.0
    %2276 = vmatprep.subr.mxu0 0.0
    %2277 = vmatpush1.msra.mxu0 0.0
    %2278 = vmatprep.subr.mxu0 0.0
    %2279 = vmatpush1.msra.mxu0 0.0
    %2280 = vmatprep.mubr.f32.mxu0 0.0
    %2281 = vmatmul.mubr.f32.gmra.mrb[0].mxu0 %v1845
    %v2282 = vpop.f32.mrb[0].mxu0
    %v2283 = vadd.f32 0.0, %v2282
    %v2284 = vpop.f32.mrb[0].mxu0
    %2285 = vmatprep.mubr.f32.mxu0 0.0
    %2286 = vmatmul.mubr.f32.gmra.mrb[0].mxu0 %v1848
    %v2287 = vpop.f32.mrb[0].mxu0
    %v2288 = vadd.f32 0.0, %v2287
    %v2289 = vpop.f32.mrb[0].mxu0
    %2290 = vdwg.mxu0
    %v2291 = vadd.f32 %v2207, %v2283
    %v2292 = vadd.f32 %v2212, %v2288
    %v2293 = vld [vmem:[#allocation19] sm:$0x1]
    %v2295 = vlaneseq
    %v2296 = vshrl.u32 %v2295, 7
    %v2297 = vsub.s32 0, %v2296
    %v2298 = vrot.slane %v2293, %v2297
    %v2300 = vadd.f32 %v2291, %v2298
    %v2301 = vadd.f32 %v2292, %v2298
    %v2302 = vxor.u32 %v2300, 2147483648
    %v2303 = vxor.u32 %v2301, 2147483648
    %v2304 = vmul.f32 %v2302, 1.442695
    %v2305 = vpow.pop %v2304
    %v2306 = vmul.f32 %v2303, 1.442695
    %v2307 = vpow.pop %v2306
    %v2308 = vadd.f32 %v2305, 1.0
    %v2309 = vadd.f32 %v2307, 1.0
    %v2310 = vrcp.pop %v2308
    %v2311 = vmul.f32 1.0, %v2310
    %v2312 = vrcp.pop %v2309
    %v2313 = vmul.f32 1.0, %v2312
    %v2314 = vmul.f32 %v2300, %v2311
    %v2315 = vmul.f32 %v2301, %v2313
    %v2316 = vld [vmem:[%s57] sm:$0xff]
    %v2317 = vld [vmem:[%s57 + $0x8] sm:$0xff]
    %v2318 = vld [vmem:[%s57 + $0x10] sm:$0xff]
    %v2319 = vld [vmem:[%s57 + $0x18] sm:$0xff]
    %v2320 = vld [vmem:[#allocation21] sm:$0x1]
    %v2322 = vlaneseq
    %v2323 = vshrl.u32 %v2322, 7
    %v2324 = vsub.s32 0, %v2323
    %v2325 = vrot.slane %v2320, %v2324
    %v2328 = vsel %vm1680, %v2314, 0
    %v2331 = vsel %vm1680, %v2315, 0
    %2333 = vmatprep.subr.mxu0 0.0
    %2334 = vmatpush1.msra.mxu0 %v2316
    %2335 = vmatprep.subr.mxu0 0.0
    %2336 = vmatpush1.msra.mxu0 %v2317
    %2337 = vmatprep.subr.mxu0 0.0
    %2338 = vmatpush1.msra.mxu0 %v2318
    %2339 = vmatprep.subr.mxu0 0.0
    %2340 = vmatpush1.msra.mxu0 %v2319
    %2341 = vmatprep.subr.mxu0 0.0
    %2342 = vmatpush1.msra.mxu0 0.0
    %2343 = vmatprep.subr.mxu0 0.0
    %2344 = vmatpush1.msra.mxu0 0.0
    %2345 = vmatprep.subr.mxu0 0.0
    %2346 = vmatpush1.msra.mxu0 0.0
    %2347 = vmatprep.subr.mxu0 0.0
    %2348 = vmatpush1.msra.mxu0 0.0
    %2349 = vmatprep.subr.mxu0 0.0
    %2350 = vmatpush1.msra.mxu0 0.0
    %2351 = vmatprep.subr.mxu0 0.0
    %2352 = vmatpush1.msra.mxu0 0.0
    %2353 = vmatprep.subr.mxu0 0.0
    %2354 = vmatpush1.msra.mxu0 0.0
    %2355 = vmatprep.subr.mxu0 0.0
    %2356 = vmatpush1.msra.mxu0 0.0
    %2357 = vmatprep.subr.mxu0 0.0
    %2358 = vmatpush1.msra.mxu0 0.0
    %2359 = vmatprep.subr.mxu0 0.0
    %2360 = vmatpush1.msra.mxu0 0.0
    %2361 = vmatprep.subr.mxu0 0.0
    %2362 = vmatpush1.msra.mxu0 0.0
    %2363 = vmatprep.subr.mxu0 0.0
    %2364 = vmatpush1.msra.mxu0 0.0
    %2365 = vmatprep.subr.mxu0 0.0
    %2366 = vmatpush1.msra.mxu0 0.0
    %2367 = vmatprep.subr.mxu0 0.0
    %2368 = vmatpush1.msra.mxu0 0.0
    %2369 = vmatprep.subr.mxu0 0.0
    %2370 = vmatpush1.msra.mxu0 0.0
    %2371 = vmatprep.subr.mxu0 0.0
    %2372 = vmatpush1.msra.mxu0 0.0
    %2373 = vmatprep.subr.mxu0 0.0
    %2374 = vmatpush1.msra.mxu0 0.0
    %2375 = vmatprep.subr.mxu0 0.0
    %2376 = vmatpush1.msra.mxu0 0.0
    %2377 = vmatprep.subr.mxu0 0.0
    %2378 = vmatpush1.msra.mxu0 0.0
    %2379 = vmatprep.subr.mxu0 0.0
    %2380 = vmatpush1.msra.mxu0 0.0
    %2381 = vmatprep.subr.mxu0 0.0
    %2382 = vmatpush1.msra.mxu0 0.0
    %2383 = vmatprep.subr.mxu0 0.0
    %2384 = vmatpush1.msra.mxu0 0.0
    %2385 = vmatprep.subr.mxu0 0.0
    %2386 = vmatpush1.msra.mxu0 0.0
    %2387 = vmatprep.subr.mxu0 0.0
    %2388 = vmatpush1.msra.mxu0 0.0
    %2389 = vmatprep.subr.mxu0 0.0
    %2390 = vmatpush1.msra.mxu0 0.0
    %2391 = vmatprep.subr.mxu0 0.0
    %2392 = vmatpush1.msra.mxu0 0.0
    %2393 = vmatprep.subr.mxu0 0.0
    %2394 = vmatpush1.msra.mxu0 0.0
    %2395 = vmatprep.subr.mxu0 0.0
    %2396 = vmatpush1.msra.mxu0 0.0
    %2397 = vmatprep.mubr.f32.mxu0 0.0
    %2398 = vmatmul.mubr.f32.gmra.mrb[0].mxu0 %v2328
    %v2399 = vpop.f32.mrb[0].mxu0
    %v2400 = vadd.f32 %v2325, %v2399
    %v2401 = vpop.f32.mrb[0].mxu0
    %2402 = vmatprep.mubr.f32.mxu0 0.0
    %2403 = vmatmul.mubr.f32.gmra.mrb[0].mxu0 %v2331
    %v2404 = vpop.f32.mrb[0].mxu0
    %v2405 = vadd.f32 %v2325, %v2404
    %v2406 = vpop.f32.mrb[0].mxu0
    %2407 = vdwg.mxu0
    %v2408 = vld [vmem:[%s61] sm:$0xff]
    %v2409 = vld [vmem:[%s61 + $0x8] sm:$0xff]
    %v2410 = vld [vmem:[%s61 + $0x10] sm:$0xff]
    %v2411 = vld [vmem:[%s61 + $0x18] sm:$0xff]
    %v2412 = vld [vmem:[#allocation22] sm:$0x1]
    %v2414 = vlaneseq
    %v2415 = vshrl.u32 %v2414, 7
    %v2416 = vsub.s32 0, %v2415
    %v2417 = vrot.slane %v2412, %v2416
    %v2420 = vsel %vm1680, %v2034, 0
    %v2423 = vsel %vm1680, %v2039, 0
    %2425 = vmatprep.subr.mxu0 0.0
    %2426 = vmatpush1.msra.mxu0 %v2408
    %2427 = vmatprep.subr.mxu0 0.0
    %2428 = vmatpush1.msra.mxu0 %v2409
    %2429 = vmatprep.subr.mxu0 0.0
    %2430 = vmatpush1.msra.mxu0 %v2410
    %2431 = vmatprep.subr.mxu0 0.0
    %2432 = vmatpush1.msra.mxu0 %v2411
    %2433 = vmatprep.subr.mxu0 0.0
    %2434 = vmatpush1.msra.mxu0 0.0
    %2435 = vmatprep.subr.mxu0 0.0
    %2436 = vmatpush1.msra.mxu0 0.0
    %2437 = vmatprep.subr.mxu0 0.0
    %2438 = vmatpush1.msra.mxu0 0.0
    %2439 = vmatprep.subr.mxu0 0.0
    %2440 = vmatpush1.msra.mxu0 0.0
    %2441 = vmatprep.subr.mxu0 0.0
    %2442 = vmatpush1.msra.mxu0 0.0
    %2443 = vmatprep.subr.mxu0 0.0
    %2444 = vmatpush1.msra.mxu0 0.0
    %2445 = vmatprep.subr.mxu0 0.0
    %2446 = vmatpush1.msra.mxu0 0.0
    %2447 = vmatprep.subr.mxu0 0.0
    %2448 = vmatpush1.msra.mxu0 0.0
    %2449 = vmatprep.subr.mxu0 0.0
    %2450 = vmatpush1.msra.mxu0 0.0
    %2451 = vmatprep.subr.mxu0 0.0
    %2452 = vmatpush1.msra.mxu0 0.0
    %2453 = vmatprep.subr.mxu0 0.0
    %2454 = vmatpush1.msra.mxu0 0.0
    %2455 = vmatprep.subr.mxu0 0.0
    %2456 = vmatpush1.msra.mxu0 0.0
    %2457 = vmatprep.subr.mxu0 0.0
    %2458 = vmatpush1.msra.mxu0 0.0
    %2459 = vmatprep.subr.mxu0 0.0
    %2460 = vmatpush1.msra.mxu0 0.0
    %2461 = vmatprep.subr.mxu0 0.0
    %2462 = vmatpush1.msra.mxu0 0.0
    %2463 = vmatprep.subr.mxu0 0.0
    %2464 = vmatpush1.msra.mxu0 0.0
    %2465 = vmatprep.subr.mxu0 0.0
    %2466 = vmatpush1.msra.mxu0 0.0
    %2467 = vmatprep.subr.mxu0 0.0
    %2468 = vmatpush1.msra.mxu0 0.0
    %2469 = vmatprep.subr.mxu0 0.0
    %2470 = vmatpush1.msra.mxu0 0.0
    %2471 = vmatprep.subr.mxu0 0.0
    %2472 = vmatpush1.msra.mxu0 0.0
    %2473 = vmatprep.subr.mxu0 0.0
    %2474 = vmatpush1.msra.mxu0 0.0
    %2475 = vmatprep.subr.mxu0 0.0
    %2476 = vmatpush1.msra.mxu0 0.0
    %2477 = vmatprep.subr.mxu0 0.0
    %2478 = vmatpush1.msra.mxu0 0.0
    %2479 = vmatprep.subr.mxu0 0.0
    %2480 = vmatpush1.msra.mxu0 0.0
    %2481 = vmatprep.subr.mxu0 0.0
    %2482 = vmatpush1.msra.mxu0 0.0
    %2483 = vmatprep.subr.mxu0 0.0
    %2484 = vmatpush1.msra.mxu0 0.0
    %2485 = vmatprep.subr.mxu0 0.0
    %2486 = vmatpush1.msra.mxu0 0.0
    %2487 = vmatprep.subr.mxu0 0.0
    %2488 = vmatpush1.msra.mxu0 0.0
    %2489 = vmatprep.mubr.f32.mxu0 0.0
    %2490 = vmatmul.mubr.f32.gmra.mrb[0].mxu0 %v2420
    %v2491 = vpop.f32.mrb[0].mxu0
    %v2492 = vadd.f32 %v2417, %v2491
    %v2493 = vpop.f32.mrb[0].mxu0
    %2494 = vmatprep.mubr.f32.mxu0 0.0
    %2495 = vmatmul.mubr.f32.gmra.mrb[0].mxu0 %v2423
    %v2496 = vpop.f32.mrb[0].mxu0
    %v2497 = vadd.f32 %v2417, %v2496
    %v2498 = vpop.f32.mrb[0].mxu0
    %2499 = vdwg.mxu0
    %v2500 = vxor.u32 %v2492, 2147483648
    %v2501 = vxor.u32 %v2497, 2147483648
    %v2502 = vmul.f32 %v2500, 1.442695
    %v2503 = vpow.pop %v2502
    %v2504 = vmul.f32 %v2501, 1.442695
    %v2505 = vpow.pop %v2504
    %v2506 = vadd.f32 %v2503, 1.0
    %v2507 = vadd.f32 %v2505, 1.0
    %v2508 = vrcp.pop %v2506
    %v2509 = vmul.f32 1.0, %v2508
    %v2510 = vrcp.pop %v2507
    %v2511 = vmul.f32 1.0, %v2510
    %v2512 = vmul.f32 %v2492, %v2509
    %v2513 = vmul.f32 %v2497, %v2511
    %v2514 = vld [vmem:[%s65] sm:$0xff]
    %v2515 = vld [vmem:[%s65 + $0x8] sm:$0xff]
    %v2516 = vld [vmem:[%s65 + $0x10] sm:$0xff]
    %v2517 = vld [vmem:[%s65 + $0x18] sm:$0xff]
    %v2518 = vld [vmem:[#allocation24] sm:$0x1]
    %v2520 = vlaneseq
    %v2521 = vshrl.u32 %v2520, 7
    %v2522 = vsub.s32 0, %v2521
    %v2523 = vrot.slane %v2518, %v2522
    %v2526 = vsel %vm1680, %v2512, 0
    %v2529 = vsel %vm1680, %v2513, 0
    %2531 = vmatprep.subr.mxu0 0.0
    %2532 = vmatpush1.msra.mxu0 %v2514
    %2533 = vmatprep.subr.mxu0 0.0
    %2534 = vmatpush1.msra.mxu0 %v2515
    %2535 = vmatprep.subr.mxu0 0.0
    %2536 = vmatpush1.msra.mxu0 %v2516
    %2537 = vmatprep.subr.mxu0 0.0
    %2538 = vmatpush1.msra.mxu0 %v2517
    %2539 = vmatprep.subr.mxu0 0.0
    %2540 = vmatpush1.msra.mxu0 0.0
    %2541 = vmatprep.subr.mxu0 0.0
    %2542 = vmatpush1.msra.mxu0 0.0
    %2543 = vmatprep.subr.mxu0 0.0
    %2544 = vmatpush1.msra.mxu0 0.0
    %2545 = vmatprep.subr.mxu0 0.0
    %2546 = vmatpush1.msra.mxu0 0.0
    %2547 = vmatprep.subr.mxu0 0.0
    %2548 = vmatpush1.msra.mxu0 0.0
    %2549 = vmatprep.subr.mxu0 0.0
    %2550 = vmatpush1.msra.mxu0 0.0
    %2551 = vmatprep.subr.mxu0 0.0
    %2552 = vmatpush1.msra.mxu0 0.0
    %2553 = vmatprep.subr.mxu0 0.0
    %2554 = vmatpush1.msra.mxu0 0.0
    %2555 = vmatprep.subr.mxu0 0.0
    %2556 = vmatpush1.msra.mxu0 0.0
    %2557 = vmatprep.subr.mxu0 0.0
    %2558 = vmatpush1.msra.mxu0 0.0
    %2559 = vmatprep.subr.mxu0 0.0
    %2560 = vmatpush1.msra.mxu0 0.0
    %2561 = vmatprep.subr.mxu0 0.0
    %2562 = vmatpush1.msra.mxu0 0.0
    %2563 = vmatprep.subr.mxu0 0.0
    %2564 = vmatpush1.msra.mxu0 0.0
    %2565 = vmatprep.subr.mxu0 0.0
    %2566 = vmatpush1.msra.mxu0 0.0
    %2567 = vmatprep.subr.mxu0 0.0
    %2568 = vmatpush1.msra.mxu0 0.0
    %2569 = vmatprep.subr.mxu0 0.0
    %2570 = vmatpush1.msra.mxu0 0.0
    %2571 = vmatprep.subr.mxu0 0.0
    %2572 = vmatpush1.msra.mxu0 0.0
    %2573 = vmatprep.subr.mxu0 0.0
    %2574 = vmatpush1.msra.mxu0 0.0
    %2575 = vmatprep.subr.mxu0 0.0
    %2576 = vmatpush1.msra.mxu0 0.0
    %2577 = vmatprep.subr.mxu0 0.0
    %2578 = vmatpush1.msra.mxu0 0.0
    %2579 = vmatprep.subr.mxu0 0.0
    %2580 = vmatpush1.msra.mxu0 0.0
    %2581 = vmatprep.subr.mxu0 0.0
    %2582 = vmatpush1.msra.mxu0 0.0
    %2583 = vmatprep.subr.mxu0 0.0
    %2584 = vmatpush1.msra.mxu0 0.0
    %2585 = vmatprep.subr.mxu0 0.0
    %2586 = vmatpush1.msra.mxu0 0.0
    %2587 = vmatprep.subr.mxu0 0.0
    %2588 = vmatpush1.msra.mxu0 0.0
    %2589 = vmatprep.subr.mxu0 0.0
    %2590 = vmatpush1.msra.mxu0 0.0
    %2591 = vmatprep.subr.mxu0 0.0
    %2592 = vmatpush1.msra.mxu0 0.0
    %2593 = vmatprep.subr.mxu0 0.0
    %2594 = vmatpush1.msra.mxu0 0.0
    %2595 = vmatprep.mubr.f32.mxu0 0.0
    %2596 = vmatmul.mubr.f32.gmra.mrb[0].mxu0 %v2526
    %v2597 = vpop.f32.mrb[0].mxu0
    %v2598 = vadd.f32 %v2523, %v2597
    %v2599 = vpop.f32.mrb[0].mxu0
    %2600 = vmatprep.mubr.f32.mxu0 0.0
    %2601 = vmatmul.mubr.f32.gmra.mrb[0].mxu0 %v2529
    %v2602 = vpop.f32.mrb[0].mxu0
    %v2603 = vadd.f32 %v2523, %v2602
    %v2604 = vpop.f32.mrb[0].mxu0
    %2605 = vdwg.mxu0
    %v2606 = vmul.f32 %v2598, %v2400
    %v2607 = vmul.f32 %v2603, %v2405
    %v2608 = vld [vmem:[%s69] sm:$0xff]
    %v2609 = vld [vmem:[%s69 + $0x8] sm:$0xff]
    %v2610 = vld [vmem:[%s69 + $0x10] sm:$0xff]
    %v2611 = vld [vmem:[%s69 + $0x18] sm:$0xff]
    %v2612 = vld [vmem:[#allocation2] sm:$0x1]
    %v2614 = vlaneseq
    %v2615 = vshrl.u32 %v2614, 7
    %v2616 = vsub.s32 0, %v2615
    %v2617 = vrot.slane %v2612, %v2616
    %v2620 = vsel %vm1680, %v2606, 0
    %v2623 = vsel %vm1680, %v2607, 0
    %2625 = vmatprep.subr.mxu0 0.0
    %2626 = vmatpush1.msra.mxu0 %v2608
    %2627 = vmatprep.subr.mxu0 0.0
    %2628 = vmatpush1.msra.mxu0 %v2609
    %2629 = vmatprep.subr.mxu0 0.0
    %2630 = vmatpush1.msra.mxu0 %v2610
    %2631 = vmatprep.subr.mxu0 0.0
    %2632 = vmatpush1.msra.mxu0 %v2611
    %2633 = vmatprep.subr.mxu0 0.0
    %2634 = vmatpush1.msra.mxu0 0.0
    %2635 = vmatprep.subr.mxu0 0.0
    %2636 = vmatpush1.msra.mxu0 0.0
    %2637 = vmatprep.subr.mxu0 0.0
    %2638 = vmatpush1.msra.mxu0 0.0
    %2639 = vmatprep.subr.mxu0 0.0
    %2640 = vmatpush1.msra.mxu0 0.0
    %2641 = vmatprep.subr.mxu0 0.0
    %2642 = vmatpush1.msra.mxu0 0.0
    %2643 = vmatprep.subr.mxu0 0.0
    %2644 = vmatpush1.msra.mxu0 0.0
    %2645 = vmatprep.subr.mxu0 0.0
    %2646 = vmatpush1.msra.mxu0 0.0
    %2647 = vmatprep.subr.mxu0 0.0
    %2648 = vmatpush1.msra.mxu0 0.0
    %2649 = vmatprep.subr.mxu0 0.0
    %2650 = vmatpush1.msra.mxu0 0.0
    %2651 = vmatprep.subr.mxu0 0.0
    %2652 = vmatpush1.msra.mxu0 0.0
    %2653 = vmatprep.subr.mxu0 0.0
    %2654 = vmatpush1.msra.mxu0 0.0
    %2655 = vmatprep.subr.mxu0 0.0
    %2656 = vmatpush1.msra.mxu0 0.0
    %2657 = vmatprep.subr.mxu0 0.0
    %2658 = vmatpush1.msra.mxu0 0.0
    %2659 = vmatprep.subr.mxu0 0.0
    %2660 = vmatpush1.msra.mxu0 0.0
    %2661 = vmatprep.subr.mxu0 0.0
    %2662 = vmatpush1.msra.mxu0 0.0
    %2663 = vmatprep.subr.mxu0 0.0
    %2664 = vmatpush1.msra.mxu0 0.0
    %2665 = vmatprep.subr.mxu0 0.0
    %2666 = vmatpush1.msra.mxu0 0.0
    %2667 = vmatprep.subr.mxu0 0.0
    %2668 = vmatpush1.msra.mxu0 0.0
    %2669 = vmatprep.subr.mxu0 0.0
    %2670 = vmatpush1.msra.mxu0 0.0
    %2671 = vmatprep.subr.mxu0 0.0
    %2672 = vmatpush1.msra.mxu0 0.0
    %2673 = vmatprep.subr.mxu0 0.0
    %2674 = vmatpush1.msra.mxu0 0.0
    %2675 = vmatprep.subr.mxu0 0.0
    %2676 = vmatpush1.msra.mxu0 0.0
    %2677 = vmatprep.subr.mxu0 0.0
    %2678 = vmatpush1.msra.mxu0 0.0
    %2679 = vmatprep.subr.mxu0 0.0
    %2680 = vmatpush1.msra.mxu0 0.0
    %2681 = vmatprep.subr.mxu0 0.0
    %2682 = vmatpush1.msra.mxu0 0.0
    %2683 = vmatprep.subr.mxu0 0.0
    %2684 = vmatpush1.msra.mxu0 0.0
    %2685 = vmatprep.subr.mxu0 0.0
    %2686 = vmatpush1.msra.mxu0 0.0
    %2687 = vmatprep.subr.mxu0 0.0
    %2688 = vmatpush1.msra.mxu0 0.0
    %2689 = vmatprep.mubr.f32.mxu0 0.0
    %2690 = vmatmul.mubr.f32.gmra.mrb[0].mxu0 %v2620
    %v2691 = vpop.f32.mrb[0].mxu0
    %v2692 = vadd.f32 %v2617, %v2691
    %v2693 = vpop.f32.mrb[0].mxu0
    %2694 = vmatprep.mubr.f32.mxu0 0.0
    %2695 = vmatmul.mubr.f32.gmra.mrb[0].mxu0 %v2623
    %v2696 = vpop.f32.mrb[0].mxu0
    %v2697 = vadd.f32 %v2617, %v2696
    %v2698 = vpop.f32.mrb[0].mxu0
    %2699 = vdwg.mxu0
    %v2700 = vxor.u32 %v2692, 2147483648
    %v2701 = vxor.u32 %v2697, 2147483648
    %v2702 = vmul.f32 %v2700, 1.442695
    %v2703 = vpow.pop %v2702
    %v2704 = vmul.f32 %v2701, 1.442695
    %v2705 = vpow.pop %v2704
    %v2706 = vadd.f32 %v2703, 1.0
    %v2707 = vadd.f32 %v2705, 1.0
    %v2708 = vrcp.pop %v2706
    %v2709 = vmul.f32 1.0, %v2708
    %v2710 = vrcp.pop %v2707
    %v2711 = vmul.f32 1.0, %v2710
    %2713 = vset.pattern.permute.xlu0 0
    %2714 = vperm.xlu0 %2713, %v2709
    %v2715 = vpop.permute.xlu0 %2714
    %2718 = vset.pattern.permute.xlu0 0
    %2719 = vperm.xlu0 %2718, %v2711
    %v2720 = vpop.permute.xlu0 %2719
    %v2722 = vmul.f32 %v2606, %v2715
    %v2723 = vmul.f32 %v2607, %v2720
    %v2724 = vld [vmem:[%s73] sm:$0xff]
    %v2725 = vld [vmem:[%s73 + $0x8] sm:$0xff]
    %v2726 = vld [vmem:[%s73 + $0x10] sm:$0xff]
    %v2727 = vld [vmem:[%s73 + $0x18] sm:$0xff]
    %v2729 = vsel %vm1680, %v2722, 0
    %v2732 = vsel %vm1680, %v2723, 0
    %2734 = vmatprep.subr.mxu0 0.0
    %2735 = vmatpush1.msra.mxu0 %v2724
    %2736 = vmatprep.subr.mxu0 0.0
    %2737 = vmatpush1.msra.mxu0 %v2725
    %2738 = vmatprep.subr.mxu0 0.0
    %2739 = vmatpush1.msra.mxu0 %v2726
    %2740 = vmatprep.subr.mxu0 0.0
    %2741 = vmatpush1.msra.mxu0 %v2727
    %2742 = vmatprep.subr.mxu0 0.0
    %2743 = vmatpush1.msra.mxu0 0.0
    %2744 = vmatprep.subr.mxu0 0.0
    %2745 = vmatpush1.msra.mxu0 0.0
    %2746 = vmatprep.subr.mxu0 0.0
    %2747 = vmatpush1.msra.mxu0 0.0
    %2748 = vmatprep.subr.mxu0 0.0
    %2749 = vmatpush1.msra.mxu0 0.0
    %2750 = vmatprep.subr.mxu0 0.0
    %2751 = vmatpush1.msra.mxu0 0.0
    %2752 = vmatprep.subr.mxu0 0.0
    %2753 = vmatpush1.msra.mxu0 0.0
    %2754 = vmatprep.subr.mxu0 0.0
    %2755 = vmatpush1.msra.mxu0 0.0
    %2756 = vmatprep.subr.mxu0 0.0
    %2757 = vmatpush1.msra.mxu0 0.0
    %2758 = vmatprep.subr.mxu0 0.0
    %2759 = vmatpush1.msra.mxu0 0.0
    %2760 = vmatprep.subr.mxu0 0.0
    %2761 = vmatpush1.msra.mxu0 0.0
    %2762 = vmatprep.subr.mxu0 0.0
    %2763 = vmatpush1.msra.mxu0 0.0
    %2764 = vmatprep.subr.mxu0 0.0
    %2765 = vmatpush1.msra.mxu0 0.0
    %2766 = vmatprep.subr.mxu0 0.0
    %2767 = vmatpush1.msra.mxu0 0.0
    %2768 = vmatprep.subr.mxu0 0.0
    %2769 = vmatpush1.msra.mxu0 0.0
    %2770 = vmatprep.subr.mxu0 0.0
    %2771 = vmatpush1.msra.mxu0 0.0
    %2772 = vmatprep.subr.mxu0 0.0
    %2773 = vmatpush1.msra.mxu0 0.0
    %2774 = vmatprep.subr.mxu0 0.0
    %2775 = vmatpush1.msra.mxu0 0.0
    %2776 = vmatprep.subr.mxu0 0.0
    %2777 = vmatpush1.msra.mxu0 0.0
    %2778 = vmatprep.subr.mxu0 0.0
    %2779 = vmatpush1.msra.mxu0 0.0
    %2780 = vmatprep.subr.mxu0 0.0
    %2781 = vmatpush1.msra.mxu0 0.0
    %2782 = vmatprep.subr.mxu0 0.0
    %2783 = vmatpush1.msra.mxu0 0.0
    %2784 = vmatprep.subr.mxu0 0.0
    %2785 = vmatpush1.msra.mxu0 0.0
    %2786 = vmatprep.subr.mxu0 0.0
    %2787 = vmatpush1.msra.mxu0 0.0
    %2788 = vmatprep.subr.mxu0 0.0
    %2789 = vmatpush1.msra.mxu0 0.0
    %2790 = vmatprep.subr.mxu0 0.0
    %2791 = vmatpush1.msra.mxu0 0.0
    %2792 = vmatprep.subr.mxu0 0.0
    %2793 = vmatpush1.msra.mxu0 0.0
    %2794 = vmatprep.subr.mxu0 0.0
    %2795 = vmatpush1.msra.mxu0 0.0
    %2796 = vmatprep.subr.mxu0 0.0
    %2797 = vmatpush1.msra.mxu0 0.0
    %2798 = vmatprep.mubr.f32.mxu0 0.0
    %2799 = vmatmul.mubr.f32.gmra.mrb[0].mxu0 %v2729
    %v2800 = vpop.f32.mrb[0].mxu0
    %v2801 = vadd.f32 0.0, %v2800
    %v2802 = vpop.f32.mrb[0].mxu0
    %2803 = vmatprep.mubr.f32.mxu0 0.0
    %2804 = vmatmul.mubr.f32.gmra.mrb[0].mxu0 %v2732
    %v2805 = vpop.f32.mrb[0].mxu0
    %v2806 = vadd.f32 0.0, %v2805
    %v2807 = vpop.f32.mrb[0].mxu0
    %2808 = vdwg.mxu0
    %v2809 = vld [vmem:[%s75] sm:$0xff]
    %v2810 = vld [vmem:[%s75 + $0x8] sm:$0xff]
    %v2811 = vld [vmem:[%s75 + $0x10] sm:$0xff]
    %v2812 = vld [vmem:[%s75 + $0x18] sm:$0xff]
    %2813 = vmatprep.subr.mxu0 0.0
    %2814 = vmatpush1.msra.mxu0 %v2809
    %2815 = vmatprep.subr.mxu0 0.0
    %2816 = vmatpush1.msra.mxu0 %v2810
    %2817 = vmatprep.subr.mxu0 0.0
    %2818 = vmatpush1.msra.mxu0 %v2811
    %2819 = vmatprep.subr.mxu0 0.0
    %2820 = vmatpush1.msra.mxu0 %v2812
    %2821 = vmatprep.subr.mxu0 0.0
    %2822 = vmatpush1.msra.mxu0 0.0
    %2823 = vmatprep.subr.mxu0 0.0
    %2824 = vmatpush1.msra.mxu0 0.0
    %2825 = vmatprep.subr.mxu0 0.0
    %2826 = vmatpush1.msra.mxu0 0.0
    %2827 = vmatprep.subr.mxu0 0.0
    %2828 = vmatpush1.msra.mxu0 0.0
    %2829 = vmatprep.subr.mxu0 0.0
    %2830 = vmatpush1.msra.mxu0 0.0
    %2831 = vmatprep.subr.mxu0 0.0
    %2832 = vmatpush1.msra.mxu0 0.0
    %2833 = vmatprep.subr.mxu0 0.0
    %2834 = vmatpush1.msra.mxu0 0.0
    %2835 = vmatprep.subr.mxu0 0.0
    %2836 = vmatpush1.msra.mxu0 0.0
    %2837 = vmatprep.subr.mxu0 0.0
    %2838 = vmatpush1.msra.mxu0 0.0
    %2839 = vmatprep.subr.mxu0 0.0
    %2840 = vmatpush1.msra.mxu0 0.0
    %2841 = vmatprep.subr.mxu0 0.0
    %2842 = vmatpush1.msra.mxu0 0.0
    %2843 = vmatprep.subr.mxu0 0.0
    %2844 = vmatpush1.msra.mxu0 0.0
    %2845 = vmatprep.subr.mxu0 0.0
    %2846 = vmatpush1.msra.mxu0 0.0
    %2847 = vmatprep.subr.mxu0 0.0
    %2848 = vmatpush1.msra.mxu0 0.0
    %2849 = vmatprep.subr.mxu0 0.0
    %2850 = vmatpush1.msra.mxu0 0.0
    %2851 = vmatprep.subr.mxu0 0.0
    %2852 = vmatpush1.msra.mxu0 0.0
    %2853 = vmatprep.subr.mxu0 0.0
    %2854 = vmatpush1.msra.mxu0 0.0
    %2855 = vmatprep.subr.mxu0 0.0
    %2856 = vmatpush1.msra.mxu0 0.0
    %2857 = vmatprep.subr.mxu0 0.0
    %2858 = vmatpush1.msra.mxu0 0.0
    %2859 = vmatprep.subr.mxu0 0.0
    %2860 = vmatpush1.msra.mxu0 0.0
    %2861 = vmatprep.subr.mxu0 0.0
    %2862 = vmatpush1.msra.mxu0 0.0
    %2863 = vmatprep.subr.mxu0 0.0
    %2864 = vmatpush1.msra.mxu0 0.0
    %2865 = vmatprep.subr.mxu0 0.0
    %2866 = vmatpush1.msra.mxu0 0.0
    %2867 = vmatprep.subr.mxu0 0.0
    %2868 = vmatpush1.msra.mxu0 0.0
    %2869 = vmatprep.subr.mxu0 0.0
    %2870 = vmatpush1.msra.mxu0 0.0
    %2871 = vmatprep.subr.mxu0 0.0
    %2872 = vmatpush1.msra.mxu0 0.0
    %2873 = vmatprep.subr.mxu0 0.0
    %2874 = vmatpush1.msra.mxu0 0.0
    %2875 = vmatprep.subr.mxu0 0.0
    %2876 = vmatpush1.msra.mxu0 0.0
    %2877 = vmatprep.mubr.f32.mxu0 0.0
    %2878 = vmatmul.mubr.f32.gmra.mrb[0].mxu0 %v2729
    %v2879 = vpop.f32.mrb[0].mxu0
    %v2880 = vadd.f32 0.0, %v2879
    %v2881 = vpop.f32.mrb[0].mxu0
    %2882 = vmatprep.mubr.f32.mxu0 0.0
    %2883 = vmatmul.mubr.f32.gmra.mrb[0].mxu0 %v2732
    %v2884 = vpop.f32.mrb[0].mxu0
    %v2885 = vadd.f32 0.0, %v2884
    %v2886 = vpop.f32.mrb[0].mxu0
    %2887 = vdwg.mxu0
    %v2888 = vmul.f32 %v2801, %v2880
    %v2889 = vmul.f32 %v2806, %v2885
    %v2890 = vmul.f32 %v2888, 0.17677669
    %v2891 = vmul.f32 %v2889, 0.17677669
    %2892 = vmatprep.subr.mxu0 0.0
    %2893 = vmatpush1.msra.mxu0 %v530
    %2894 = vmatprep.subr.mxu0 0.0
    %2895 = vmatpush1.msra.mxu0 %v531
    %2896 = vmatprep.subr.mxu0 0.0
    %2897 = vmatpush1.msra.mxu0 %v532
    %2898 = vmatprep.subr.mxu0 0.0
    %2899 = vmatpush1.msra.mxu0 %v533
    %2900 = vmatprep.subr.mxu0 0.0
    %2901 = vmatpush1.msra.mxu0 %v534
    %2902 = vmatprep.subr.mxu0 0.0
    %2903 = vmatpush1.msra.mxu0 %v535
    %2904 = vmatprep.subr.mxu0 0.0
    %2905 = vmatpush1.msra.mxu0 %v536
    %2906 = vmatprep.subr.mxu0 0.0
    %2907 = vmatpush1.msra.mxu0 %v537
    %2908 = vmatprep.subr.mxu0 0.0
    %2909 = vmatpush1.msra.mxu0 %v538
    %2910 = vmatprep.subr.mxu0 0.0
    %2911 = vmatpush1.msra.mxu0 %v539
    %2912 = vmatprep.subr.mxu0 0.0
    %2913 = vmatpush1.msra.mxu0 %v540
    %2914 = vmatprep.subr.mxu0 0.0
    %2915 = vmatpush1.msra.mxu0 %v541
    %2916 = vmatprep.subr.mxu0 0.0
    %2917 = vmatpush1.msra.mxu0 %v542
    %2918 = vmatprep.subr.mxu0 0.0
    %2919 = vmatpush1.msra.mxu0 %v543
    %2920 = vmatprep.subr.mxu0 0.0
    %2921 = vmatpush1.msra.mxu0 %v544
    %2922 = vmatprep.subr.mxu0 0.0
    %2923 = vmatpush1.msra.mxu0 %v545
    %2924 = vmatprep.subr.mxu0 0.0
    %2925 = vmatpush1.msra.mxu0 0.0
    %2926 = vmatprep.subr.mxu0 0.0
    %2927 = vmatpush1.msra.mxu0 0.0
    %2928 = vmatprep.subr.mxu0 0.0
    %2929 = vmatpush1.msra.mxu0 0.0
    %2930 = vmatprep.subr.mxu0 0.0
    %2931 = vmatpush1.msra.mxu0 0.0
    %2932 = vmatprep.subr.mxu0 0.0
    %2933 = vmatpush1.msra.mxu0 0.0
    %2934 = vmatprep.subr.mxu0 0.0
    %2935 = vmatpush1.msra.mxu0 0.0
    %2936 = vmatprep.subr.mxu0 0.0
    %2937 = vmatpush1.msra.mxu0 0.0
    %2938 = vmatprep.subr.mxu0 0.0
    %2939 = vmatpush1.msra.mxu0 0.0
    %2940 = vmatprep.subr.mxu0 0.0
    %2941 = vmatpush1.msra.mxu0 0.0
    %2942 = vmatprep.subr.mxu0 0.0
    %2943 = vmatpush1.msra.mxu0 0.0
    %2944 = vmatprep.subr.mxu0 0.0
    %2945 = vmatpush1.msra.mxu0 0.0
    %2946 = vmatprep.subr.mxu0 0.0
    %2947 = vmatpush1.msra.mxu0 0.0
    %2948 = vmatprep.subr.mxu0 0.0
    %2949 = vmatpush1.msra.mxu0 0.0
    %2950 = vmatprep.subr.mxu0 0.0
    %2951 = vmatpush1.msra.mxu0 0.0
    %2952 = vmatprep.subr.mxu0 0.0
    %2953 = vmatpush1.msra.mxu0 0.0
    %2954 = vmatprep.subr.mxu0 0.0
    %2955 = vmatpush1.msra.mxu0 0.0
    %2956 = vmatprep.mubr.f32.mxu0 0.0
    %2957 = vmatmul.mubr.f32.gmra.mrb[0].mxu0 %v2890
    %v2958 = vpop.f32.mrb[0].mxu0
    %v2959 = vadd.f32 0.0, %v2958
    %v2960 = vpop.f32.mrb[0].mxu0
    %2961 = vmatprep.mubr.f32.mxu0 0.0
    %2962 = vmatmul.mubr.f32.gmra.mrb[0].mxu0 %v2891
    %v2963 = vpop.f32.mrb[0].mxu0
    %v2964 = vadd.f32 0.0, %v2963
    %v2965 = vpop.f32.mrb[0].mxu0
    %2966 = vdwg.mxu0
    %vm2967 = vcmp.gt.f32.partialorder %v524, 0.0
    %vm2968 = vcmp.gt.f32.partialorder %v525, 0.0
    %v2969 = vsel %vm2967, %v2959, -1e+30
    %v2970 = vsel %vm2968, %v2964, -1e+30
    %v2971 = vsel %vm1680, %v2969, -inf
    %v2972 = vsel %vm1680, %v2970, -inf
    %v2973 = vmax.f32 %v2971, %v2972
    %v2974 = vrot.slane %v2973, 4
    %v2975 = vmax.f32 %v2973, %v2974
    %v2976 = vrot.slane %v2975, 2
    %v2977 = vmax.f32 %v2975, %v2976
    %v2978 = vrot.slane %v2977, 1
    %v2979 = vmax.f32 %v2977, %v2978
    %v2980 = vsub.f32 %v2959, %v2979
    %v2981 = vsub.f32 %v2964, %v2979
    %v2982 = vmul.f32 %v2980, 1.442695
    %v2983 = vpow.pop %v2982
    %v2984 = vmul.f32 %v2981, 1.442695
    %v2985 = vpow.pop %v2984
    %v2986 = vsel %vm2967, %v2983, 0.0
    %v2987 = vsel %vm2968, %v2985, 0.0
    %v2988 = vsel %vm1680, %v2986, 0.0
    %v2989 = vsel %vm1680, %v2987, 0.0
    %v2990 = vadd.f32 %v2988, %v2989
    %v2991 = vrot.slane %v2990, 4
    %v2992 = vadd.f32 %v2990, %v2991
    %v2993 = vrot.slane %v2992, 2
    %v2994 = vadd.f32 %v2992, %v2993
    %v2995 = vrot.slane %v2994, 1
    %v2996 = vadd.f32 %v2994, %v2995
    %v2997 = vmax.f32 %v2996, 1.0
    %v2998 = vrcp.pop %v2997
    %v2999 = vmul.f32 %v2986, %v2998
    %v3000 = vmul.f32 %v2987, %v2998
    %v3002 = vsel %vm1680, %v2999, 0
    %v3005 = vsel %vm1680, %v3000, 0
    %3007 = vmatprep.subr.mxu0 0.0
    %3008 = vmatpush1.msra.mxu0 %v546
    %3009 = vmatprep.subr.mxu0 0.0
    %3010 = vmatpush1.msra.mxu0 %v547
    %3011 = vmatprep.subr.mxu0 0.0
    %3012 = vmatpush1.msra.mxu0 %v548
    %3013 = vmatprep.subr.mxu0 0.0
    %3014 = vmatpush1.msra.mxu0 %v549
    %3015 = vmatprep.subr.mxu0 0.0
    %3016 = vmatpush1.msra.mxu0 0.0
    %3017 = vmatprep.subr.mxu0 0.0
    %3018 = vmatpush1.msra.mxu0 0.0
    %3019 = vmatprep.subr.mxu0 0.0
    %3020 = vmatpush1.msra.mxu0 0.0
    %3021 = vmatprep.subr.mxu0 0.0
    %3022 = vmatpush1.msra.mxu0 0.0
    %3023 = vmatprep.subr.mxu0 0.0
    %3024 = vmatpush1.msra.mxu0 0.0
    %3025 = vmatprep.subr.mxu0 0.0
    %3026 = vmatpush1.msra.mxu0 0.0
    %3027 = vmatprep.subr.mxu0 0.0
    %3028 = vmatpush1.msra.mxu0 0.0
    %3029 = vmatprep.subr.mxu0 0.0
    %3030 = vmatpush1.msra.mxu0 0.0
    %3031 = vmatprep.subr.mxu0 0.0
    %3032 = vmatpush1.msra.mxu0 0.0
    %3033 = vmatprep.subr.mxu0 0.0
    %3034 = vmatpush1.msra.mxu0 0.0
    %3035 = vmatprep.subr.mxu0 0.0
    %3036 = vmatpush1.msra.mxu0 0.0
    %3037 = vmatprep.subr.mxu0 0.0
    %3038 = vmatpush1.msra.mxu0 0.0
    %3039 = vmatprep.subr.mxu0 0.0
    %3040 = vmatpush1.msra.mxu0 0.0
    %3041 = vmatprep.subr.mxu0 0.0
    %3042 = vmatpush1.msra.mxu0 0.0
    %3043 = vmatprep.subr.mxu0 0.0
    %3044 = vmatpush1.msra.mxu0 0.0
    %3045 = vmatprep.subr.mxu0 0.0
    %3046 = vmatpush1.msra.mxu0 0.0
    %3047 = vmatprep.subr.mxu0 0.0
    %3048 = vmatpush1.msra.mxu0 0.0
    %3049 = vmatprep.subr.mxu0 0.0
    %3050 = vmatpush1.msra.mxu0 0.0
    %3051 = vmatprep.subr.mxu0 0.0
    %3052 = vmatpush1.msra.mxu0 0.0
    %3053 = vmatprep.subr.mxu0 0.0
    %3054 = vmatpush1.msra.mxu0 0.0
    %3055 = vmatprep.subr.mxu0 0.0
    %3056 = vmatpush1.msra.mxu0 0.0
    %3057 = vmatprep.subr.mxu0 0.0
    %3058 = vmatpush1.msra.mxu0 0.0
    %3059 = vmatprep.subr.mxu0 0.0
    %3060 = vmatpush1.msra.mxu0 0.0
    %3061 = vmatprep.subr.mxu0 0.0
    %3062 = vmatpush1.msra.mxu0 0.0
    %3063 = vmatprep.subr.mxu0 0.0
    %3064 = vmatpush1.msra.mxu0 0.0
    %3065 = vmatprep.subr.mxu0 0.0
    %3066 = vmatpush1.msra.mxu0 0.0
    %3067 = vmatprep.subr.mxu0 0.0
    %3068 = vmatpush1.msra.mxu0 0.0
    %3069 = vmatprep.subr.mxu0 0.0
    %3070 = vmatpush1.msra.mxu0 0.0
    %3071 = vmatprep.mubr.f32.mxu0 0.0
    %3072 = vmatmul.mubr.f32.gmra.mrb[0].mxu0 %v3002
    %v3073 = vpop.f32.mrb[0].mxu0
    %v3074 = vadd.f32 0.0, %v3073
    %v3075 = vpop.f32.mrb[0].mxu0
    %3076 = vmatprep.mubr.f32.mxu0 0.0
    %3077 = vmatmul.mubr.f32.gmra.mrb[0].mxu0 %v3005
    %v3078 = vpop.f32.mrb[0].mxu0
    %v3079 = vadd.f32 0.0, %v3078
    %v3080 = vpop.f32.mrb[0].mxu0
    %3081 = vdwg.mxu0
    %3082 = vmatprep.subr.mxu0 0.0
    %3083 = vmatpush1.msra.mxu0 %v550
    %3084 = vmatprep.subr.mxu0 0.0
    %3085 = vmatpush1.msra.mxu0 %v551
    %3086 = vmatprep.subr.mxu0 0.0
    %3087 = vmatpush1.msra.mxu0 %v552
    %3088 = vmatprep.subr.mxu0 0.0
    %3089 = vmatpush1.msra.mxu0 %v553
    %3090 = vmatprep.subr.mxu0 0.0
    %3091 = vmatpush1.msra.mxu0 0.0
    %3092 = vmatprep.subr.mxu0 0.0
    %3093 = vmatpush1.msra.mxu0 0.0
    %3094 = vmatprep.subr.mxu0 0.0
    %3095 = vmatpush1.msra.mxu0 0.0
    %3096 = vmatprep.subr.mxu0 0.0
    %3097 = vmatpush1.msra.mxu0 0.0
    %3098 = vmatprep.subr.mxu0 0.0
    %3099 = vmatpush1.msra.mxu0 0.0
    %3100 = vmatprep.subr.mxu0 0.0
    %3101 = vmatpush1.msra.mxu0 0.0
    %3102 = vmatprep.subr.mxu0 0.0
    %3103 = vmatpush1.msra.mxu0 0.0
    %3104 = vmatprep.subr.mxu0 0.0
    %3105 = vmatpush1.msra.mxu0 0.0
    %3106 = vmatprep.subr.mxu0 0.0
    %3107 = vmatpush1.msra.mxu0 0.0
    %3108 = vmatprep.subr.mxu0 0.0
    %3109 = vmatpush1.msra.mxu0 0.0
    %3110 = vmatprep.subr.mxu0 0.0
    %3111 = vmatpush1.msra.mxu0 0.0
    %3112 = vmatprep.subr.mxu0 0.0
    %3113 = vmatpush1.msra.mxu0 0.0
    %3114 = vmatprep.subr.mxu0 0.0
    %3115 = vmatpush1.msra.mxu0 0.0
    %3116 = vmatprep.subr.mxu0 0.0
    %3117 = vmatpush1.msra.mxu0 0.0
    %3118 = vmatprep.subr.mxu0 0.0
    %3119 = vmatpush1.msra.mxu0 0.0
    %3120 = vmatprep.subr.mxu0 0.0
    %3121 = vmatpush1.msra.mxu0 0.0
    %3122 = vmatprep.subr.mxu0 0.0
    %3123 = vmatpush1.msra.mxu0 0.0
    %3124 = vmatprep.subr.mxu0 0.0
    %3125 = vmatpush1.msra.mxu0 0.0
    %3126 = vmatprep.subr.mxu0 0.0
    %3127 = vmatpush1.msra.mxu0 0.0
    %3128 = vmatprep.subr.mxu0 0.0
    %3129 = vmatpush1.msra.mxu0 0.0
    %3130 = vmatprep.subr.mxu0 0.0
    %3131 = vmatpush1.msra.mxu0 0.0
    %3132 = vmatprep.subr.mxu0 0.0
    %3133 = vmatpush1.msra.mxu0 0.0
    %3134 = vmatprep.subr.mxu0 0.0
    %3135 = vmatpush1.msra.mxu0 0.0
    %3136 = vmatprep.subr.mxu0 0.0
    %3137 = vmatpush1.msra.mxu0 0.0
    %3138 = vmatprep.subr.mxu0 0.0
    %3139 = vmatpush1.msra.mxu0 0.0
    %3140 = vmatprep.subr.mxu0 0.0
    %3141 = vmatpush1.msra.mxu0 0.0
    %3142 = vmatprep.subr.mxu0 0.0
    %3143 = vmatpush1.msra.mxu0 0.0
    %3144 = vmatprep.subr.mxu0 0.0
    %3145 = vmatpush1.msra.mxu0 0.0
    %3146 = vmatprep.mubr.f32.mxu0 0.0
    %3147 = vmatmul.mubr.f32.gmra.mrb[0].mxu0 %v2729
    %v3148 = vpop.f32.mrb[0].mxu0
    %v3149 = vadd.f32 0.0, %v3148
    %v3150 = vpop.f32.mrb[0].mxu0
    %3151 = vmatprep.mubr.f32.mxu0 0.0
    %3152 = vmatmul.mubr.f32.gmra.mrb[0].mxu0 %v2732
    %v3153 = vpop.f32.mrb[0].mxu0
    %v3154 = vadd.f32 0.0, %v3153
    %v3155 = vpop.f32.mrb[0].mxu0
    %3156 = vdwg.mxu0
    %v3157 = vmul.f32 %v3149, %v3074
    %v3158 = vmul.f32 %v3154, %v3079
    %v3159 = vld [vmem:[%s77] sm:$0xff]
    %v3160 = vld [vmem:[%s77 + $0x8] sm:$0xff]
    %v3161 = vld [vmem:[%s77 + $0x10] sm:$0xff]
    %v3162 = vld [vmem:[%s77 + $0x18] sm:$0xff]
    %v3163 = vld [vmem:[%s77 + $0x20] sm:$0xff]
    %v3164 = vld [vmem:[%s77 + $0x28] sm:$0xff]
    %v3165 = vld [vmem:[%s77 + $0x30] sm:$0xff]
    %v3166 = vld [vmem:[%s77 + $0x38] sm:$0xff]
    %v3167 = vld [vmem:[%s77 + $0x40] sm:$0xff]
    %v3168 = vld [vmem:[%s77 + $0x48] sm:$0xff]
    %v3169 = vld [vmem:[%s77 + $0x50] sm:$0xff]
    %v3170 = vld [vmem:[%s77 + $0x58] sm:$0xff]
    %v3171 = vld [vmem:[%s77 + $0x60] sm:$0xff]
    %v3172 = vld [vmem:[%s77 + $0x68] sm:$0xff]
    %v3173 = vld [vmem:[%s77 + $0x70] sm:$0xff]
    %v3174 = vld [vmem:[%s77 + $0x78] sm:$0xff]
    %3175 = vmatprep.subr.mxu0 0.0
    %3176 = vmatpush1.msra.mxu0 %v3159
    %3177 = vmatprep.subr.mxu0 0.0
    %3178 = vmatpush1.msra.mxu0 %v3160
    %3179 = vmatprep.subr.mxu0 0.0
    %3180 = vmatpush1.msra.mxu0 %v3161
    %3181 = vmatprep.subr.mxu0 0.0
    %3182 = vmatpush1.msra.mxu0 %v3162
    %3183 = vmatprep.subr.mxu0 0.0
    %3184 = vmatpush1.msra.mxu0 %v3163
    %3185 = vmatprep.subr.mxu0 0.0
    %3186 = vmatpush1.msra.mxu0 %v3164
    %3187 = vmatprep.subr.mxu0 0.0
    %3188 = vmatpush1.msra.mxu0 %v3165
    %3189 = vmatprep.subr.mxu0 0.0
    %3190 = vmatpush1.msra.mxu0 %v3166
    %3191 = vmatprep.subr.mxu0 0.0
    %3192 = vmatpush1.msra.mxu0 %v3167
    %3193 = vmatprep.subr.mxu0 0.0
    %3194 = vmatpush1.msra.mxu0 %v3168
    %3195 = vmatprep.subr.mxu0 0.0
    %3196 = vmatpush1.msra.mxu0 %v3169
    %3197 = vmatprep.subr.mxu0 0.0
    %3198 = vmatpush1.msra.mxu0 %v3170
    %3199 = vmatprep.subr.mxu0 0.0
    %3200 = vmatpush1.msra.mxu0 %v3171
    %3201 = vmatprep.subr.mxu0 0.0
    %3202 = vmatpush1.msra.mxu0 %v3172
    %3203 = vmatprep.subr.mxu0 0.0
    %3204 = vmatpush1.msra.mxu0 %v3173
    %3205 = vmatprep.subr.mxu0 0.0
    %3206 = vmatpush1.msra.mxu0 %v3174
    %3207 = vmatprep.subr.mxu0 0.0
    %3208 = vmatpush1.msra.mxu0 0.0
    %3209 = vmatprep.subr.mxu0 0.0
    %3210 = vmatpush1.msra.mxu0 0.0
    %3211 = vmatprep.subr.mxu0 0.0
    %3212 = vmatpush1.msra.mxu0 0.0
    %3213 = vmatprep.subr.mxu0 0.0
    %3214 = vmatpush1.msra.mxu0 0.0
    %3215 = vmatprep.subr.mxu0 0.0
    %3216 = vmatpush1.msra.mxu0 0.0
    %3217 = vmatprep.subr.mxu0 0.0
    %3218 = vmatpush1.msra.mxu0 0.0
    %3219 = vmatprep.subr.mxu0 0.0
    %3220 = vmatpush1.msra.mxu0 0.0
    %3221 = vmatprep.subr.mxu0 0.0
    %3222 = vmatpush1.msra.mxu0 0.0
    %3223 = vmatprep.subr.mxu0 0.0
    %3224 = vmatpush1.msra.mxu0 0.0
    %3225 = vmatprep.subr.mxu0 0.0
    %3226 = vmatpush1.msra.mxu0 0.0
    %3227 = vmatprep.subr.mxu0 0.0
    %3228 = vmatpush1.msra.mxu0 0.0
    %3229 = vmatprep.subr.mxu0 0.0
    %3230 = vmatpush1.msra.mxu0 0.0
    %3231 = vmatprep.subr.mxu0 0.0
    %3232 = vmatpush1.msra.mxu0 0.0
    %3233 = vmatprep.subr.mxu0 0.0
    %3234 = vmatpush1.msra.mxu0 0.0
    %3235 = vmatprep.subr.mxu0 0.0
    %3236 = vmatpush1.msra.mxu0 0.0
    %3237 = vmatprep.subr.mxu0 0.0
    %3238 = vmatpush1.msra.mxu0 0.0
    %3239 = vmatprep.mubr.f32.mxu0 0.0
    %3240 = vmatmul.mubr.f32.gmra.mrb[0].mxu0 %v3157
    %v3241 = vpop.f32.mrb[0].mxu0
    %v3242 = vadd.f32 0.0, %v3241
    %v3243 = vpop.f32.mrb[0].mxu0
    %3244 = vmatprep.mubr.f32.mxu0 0.0
    %3245 = vmatmul.mubr.f32.gmra.mrb[0].mxu0 %v3158
    %v3246 = vpop.f32.mrb[0].mxu0
    %v3247 = vadd.f32 0.0, %v3246
    %v3248 = vpop.f32.mrb[0].mxu0
    %3249 = vdwg.mxu0
    %v3250 = vld [vmem:[%s79] sm:$0xff]
    %v3251 = vld [vmem:[%s79 + $0x8] sm:$0xff]
    %v3252 = vld [vmem:[%s79 + $0x10] sm:$0xff]
    %v3253 = vld [vmem:[%s79 + $0x18] sm:$0xff]
    %v3254 = vld [vmem:[#allocation25] sm:$0x1]
    %v3256 = vlaneseq
    %v3257 = vshrl.u32 %v3256, 7
    %v3258 = vsub.s32 0, %v3257
    %v3259 = vrot.slane %v3254, %v3258
    %v3262 = vsel %vm1680, %v3242, 0
    %v3265 = vsel %vm1680, %v3247, 0
    %3267 = vmatprep.subr.mxu0 0.0
    %3268 = vmatpush1.msra.mxu0 %v3250
    %3269 = vmatprep.subr.mxu0 0.0
    %3270 = vmatpush1.msra.mxu0 %v3251
    %3271 = vmatprep.subr.mxu0 0.0
    %3272 = vmatpush1.msra.mxu0 %v3252
    %3273 = vmatprep.subr.mxu0 0.0
    %3274 = vmatpush1.msra.mxu0 %v3253
    %3275 = vmatprep.subr.mxu0 0.0
    %3276 = vmatpush1.msra.mxu0 0.0
    %3277 = vmatprep.subr.mxu0 0.0
    %3278 = vmatpush1.msra.mxu0 0.0
    %3279 = vmatprep.subr.mxu0 0.0
    %3280 = vmatpush1.msra.mxu0 0.0
    %3281 = vmatprep.subr.mxu0 0.0
    %3282 = vmatpush1.msra.mxu0 0.0
    %3283 = vmatprep.subr.mxu0 0.0
    %3284 = vmatpush1.msra.mxu0 0.0
    %3285 = vmatprep.subr.mxu0 0.0
    %3286 = vmatpush1.msra.mxu0 0.0
    %3287 = vmatprep.subr.mxu0 0.0
    %3288 = vmatpush1.msra.mxu0 0.0
    %3289 = vmatprep.subr.mxu0 0.0
    %3290 = vmatpush1.msra.mxu0 0.0
    %3291 = vmatprep.subr.mxu0 0.0
    %3292 = vmatpush1.msra.mxu0 0.0
    %3293 = vmatprep.subr.mxu0 0.0
    %3294 = vmatpush1.msra.mxu0 0.0
    %3295 = vmatprep.subr.mxu0 0.0
    %3296 = vmatpush1.msra.mxu0 0.0
    %3297 = vmatprep.subr.mxu0 0.0
    %3298 = vmatpush1.msra.mxu0 0.0
    %3299 = vmatprep.subr.mxu0 0.0
    %3300 = vmatpush1.msra.mxu0 0.0
    %3301 = vmatprep.subr.mxu0 0.0
    %3302 = vmatpush1.msra.mxu0 0.0
    %3303 = vmatprep.subr.mxu0 0.0
    %3304 = vmatpush1.msra.mxu0 0.0
    %3305 = vmatprep.subr.mxu0 0.0
    %3306 = vmatpush1.msra.mxu0 0.0
    %3307 = vmatprep.subr.mxu0 0.0
    %3308 = vmatpush1.msra.mxu0 0.0
    %3309 = vmatprep.subr.mxu0 0.0
    %3310 = vmatpush1.msra.mxu0 0.0
    %3311 = vmatprep.subr.mxu0 0.0
    %3312 = vmatpush1.msra.mxu0 0.0
    %3313 = vmatprep.subr.mxu0 0.0
    %3314 = vmatpush1.msra.mxu0 0.0
    %3315 = vmatprep.subr.mxu0 0.0
    %3316 = vmatpush1.msra.mxu0 0.0
    %3317 = vmatprep.subr.mxu0 0.0
    %3318 = vmatpush1.msra.mxu0 0.0
    %3319 = vmatprep.subr.mxu0 0.0
    %3320 = vmatpush1.msra.mxu0 0.0
    %3321 = vmatprep.subr.mxu0 0.0
    %3322 = vmatpush1.msra.mxu0 0.0
    %3323 = vmatprep.subr.mxu0 0.0
    %3324 = vmatpush1.msra.mxu0 0.0
    %3325 = vmatprep.subr.mxu0 0.0
    %3326 = vmatpush1.msra.mxu0 0.0
    %3327 = vmatprep.subr.mxu0 0.0
    %3328 = vmatpush1.msra.mxu0 0.0
    %3329 = vmatprep.subr.mxu0 0.0
    %3330 = vmatpush1.msra.mxu0 0.0
    %3331 = vmatprep.mubr.f32.mxu0 0.0
    %3332 = vmatmul.mubr.f32.gmra.mrb[0].mxu0 %v3262
    %v3333 = vpop.f32.mrb[0].mxu0
    %v3334 = vadd.f32 %v3259, %v3333
    %v3335 = vpop.f32.mrb[0].mxu0
    %3336 = vmatprep.mubr.f32.mxu0 0.0
    %3337 = vmatmul.mubr.f32.gmra.mrb[0].mxu0 %v3265
    %v3338 = vpop.f32.mrb[0].mxu0
    %v3339 = vadd.f32 %v3259, %v3338
    %v3340 = vpop.f32.mrb[0].mxu0
    %3341 = vdwg.mxu0
    %v3342 = vxor.u32 %v3334, 2147483648
    %v3343 = vxor.u32 %v3339, 2147483648
    %v3344 = vmul.f32 %v3342, 1.442695
    %v3345 = vpow.pop %v3344
    %v3346 = vmul.f32 %v3343, 1.442695
    %v3347 = vpow.pop %v3346
    %v3348 = vadd.f32 %v3345, 1.0
    %v3349 = vadd.f32 %v3347, 1.0
    %v3350 = vrcp.pop %v3348
    %v3351 = vmul.f32 1.0, %v3350
    %v3352 = vrcp.pop %v3349
    %v3353 = vmul.f32 1.0, %v3352
    %v3354 = vmul.f32 %v3334, %v3351
    %v3355 = vmul.f32 %v3339, %v3353
    %v3356 = vld [vmem:[%s83] sm:$0xff]
    %v3357 = vld [vmem:[%s83 + $0x8] sm:$0xff]
    %v3358 = vld [vmem:[%s83 + $0x10] sm:$0xff]
    %v3359 = vld [vmem:[%s83 + $0x18] sm:$0xff]
    %v3360 = vld [vmem:[#allocation27] sm:$0x1]
    %v3362 = vlaneseq
    %v3363 = vshrl.u32 %v3362, 7
    %v3364 = vsub.s32 0, %v3363
    %v3365 = vrot.slane %v3360, %v3364
    %v3368 = vsel %vm1680, %v3354, 0
    %v3371 = vsel %vm1680, %v3355, 0
    %3373 = vmatprep.subr.mxu0 0.0
    %3374 = vmatpush1.msra.mxu0 %v3356
    %3375 = vmatprep.subr.mxu0 0.0
    %3376 = vmatpush1.msra.mxu0 %v3357
    %3377 = vmatprep.subr.mxu0 0.0
    %3378 = vmatpush1.msra.mxu0 %v3358
    %3379 = vmatprep.subr.mxu0 0.0
    %3380 = vmatpush1.msra.mxu0 %v3359
    %3381 = vmatprep.subr.mxu0 0.0
    %3382 = vmatpush1.msra.mxu0 0.0
    %3383 = vmatprep.subr.mxu0 0.0
    %3384 = vmatpush1.msra.mxu0 0.0
    %3385 = vmatprep.subr.mxu0 0.0
    %3386 = vmatpush1.msra.mxu0 0.0
    %3387 = vmatprep.subr.mxu0 0.0
    %3388 = vmatpush1.msra.mxu0 0.0
    %3389 = vmatprep.subr.mxu0 0.0
    %3390 = vmatpush1.msra.mxu0 0.0
    %3391 = vmatprep.subr.mxu0 0.0
    %3392 = vmatpush1.msra.mxu0 0.0
    %3393 = vmatprep.subr.mxu0 0.0
    %3394 = vmatpush1.msra.mxu0 0.0
    %3395 = vmatprep.subr.mxu0 0.0
    %3396 = vmatpush1.msra.mxu0 0.0
    %3397 = vmatprep.subr.mxu0 0.0
    %3398 = vmatpush1.msra.mxu0 0.0
    %3399 = vmatprep.subr.mxu0 0.0
    %3400 = vmatpush1.msra.mxu0 0.0
    %3401 = vmatprep.subr.mxu0 0.0
    %3402 = vmatpush1.msra.mxu0 0.0
    %3403 = vmatprep.subr.mxu0 0.0
    %3404 = vmatpush1.msra.mxu0 0.0
    %3405 = vmatprep.subr.mxu0 0.0
    %3406 = vmatpush1.msra.mxu0 0.0
    %3407 = vmatprep.subr.mxu0 0.0
    %3408 = vmatpush1.msra.mxu0 0.0
    %3409 = vmatprep.subr.mxu0 0.0
    %3410 = vmatpush1.msra.mxu0 0.0
    %3411 = vmatprep.subr.mxu0 0.0
    %3412 = vmatpush1.msra.mxu0 0.0
    %3413 = vmatprep.subr.mxu0 0.0
    %3414 = vmatpush1.msra.mxu0 0.0
    %3415 = vmatprep.subr.mxu0 0.0
    %3416 = vmatpush1.msra.mxu0 0.0
    %3417 = vmatprep.subr.mxu0 0.0
    %3418 = vmatpush1.msra.mxu0 0.0
    %3419 = vmatprep.subr.mxu0 0.0
    %3420 = vmatpush1.msra.mxu0 0.0
    %3421 = vmatprep.subr.mxu0 0.0
    %3422 = vmatpush1.msra.mxu0 0.0
    %3423 = vmatprep.subr.mxu0 0.0
    %3424 = vmatpush1.msra.mxu0 0.0
    %3425 = vmatprep.subr.mxu0 0.0
    %3426 = vmatpush1.msra.mxu0 0.0
    %3427 = vmatprep.subr.mxu0 0.0
    %3428 = vmatpush1.msra.mxu0 0.0
    %3429 = vmatprep.subr.mxu0 0.0
    %3430 = vmatpush1.msra.mxu0 0.0
    %3431 = vmatprep.subr.mxu0 0.0
    %3432 = vmatpush1.msra.mxu0 0.0
    %3433 = vmatprep.subr.mxu0 0.0
    %3434 = vmatpush1.msra.mxu0 0.0
    %3435 = vmatprep.subr.mxu0 0.0
    %3436 = vmatpush1.msra.mxu0 0.0
    %3437 = vmatprep.mubr.f32.mxu0 0.0
    %3438 = vmatmul.mubr.f32.gmra.mrb[0].mxu0 %v3368
    %v3439 = vpop.f32.mrb[0].mxu0
    %v3440 = vadd.f32 %v3365, %v3439
    %v3441 = vpop.f32.mrb[0].mxu0
    %3442 = vmatprep.mubr.f32.mxu0 0.0
    %3443 = vmatmul.mubr.f32.gmra.mrb[0].mxu0 %v3371
    %v3444 = vpop.f32.mrb[0].mxu0
    %v3445 = vadd.f32 %v3365, %v3444
    %v3446 = vpop.f32.mrb[0].mxu0
    %3447 = vdwg.mxu0
    %v3448 = vld [vmem:[%s87] sm:$0xff]
    %v3449 = vld [vmem:[%s87 + $0x8] sm:$0xff]
    %v3450 = vld [vmem:[%s87 + $0x10] sm:$0xff]
    %v3451 = vld [vmem:[%s87 + $0x18] sm:$0xff]
    %v3452 = vld [vmem:[#allocation28] sm:$0x1]
    %v3454 = vlaneseq
    %v3455 = vshrl.u32 %v3454, 7
    %v3456 = vsub.s32 0, %v3455
    %v3457 = vrot.slane %v3452, %v3456
    %3459 = vmatprep.subr.mxu0 0.0
    %3460 = vmatpush1.msra.mxu0 %v3448
    %3461 = vmatprep.subr.mxu0 0.0
    %3462 = vmatpush1.msra.mxu0 %v3449
    %3463 = vmatprep.subr.mxu0 0.0
    %3464 = vmatpush1.msra.mxu0 %v3450
    %3465 = vmatprep.subr.mxu0 0.0
    %3466 = vmatpush1.msra.mxu0 %v3451
    %3467 = vmatprep.subr.mxu0 0.0
    %3468 = vmatpush1.msra.mxu0 0.0
    %3469 = vmatprep.subr.mxu0 0.0
    %3470 = vmatpush1.msra.mxu0 0.0
    %3471 = vmatprep.subr.mxu0 0.0
    %3472 = vmatpush1.msra.mxu0 0.0
    %3473 = vmatprep.subr.mxu0 0.0
    %3474 = vmatpush1.msra.mxu0 0.0
    %3475 = vmatprep.subr.mxu0 0.0
    %3476 = vmatpush1.msra.mxu0 0.0
    %3477 = vmatprep.subr.mxu0 0.0
    %3478 = vmatpush1.msra.mxu0 0.0
    %3479 = vmatprep.subr.mxu0 0.0
    %3480 = vmatpush1.msra.mxu0 0.0
    %3481 = vmatprep.subr.mxu0 0.0
    %3482 = vmatpush1.msra.mxu0 0.0
    %3483 = vmatprep.subr.mxu0 0.0
    %3484 = vmatpush1.msra.mxu0 0.0
    %3485 = vmatprep.subr.mxu0 0.0
    %3486 = vmatpush1.msra.mxu0 0.0
    %3487 = vmatprep.subr.mxu0 0.0
    %3488 = vmatpush1.msra.mxu0 0.0
    %3489 = vmatprep.subr.mxu0 0.0
    %3490 = vmatpush1.msra.mxu0 0.0
    %3491 = vmatprep.subr.mxu0 0.0
    %3492 = vmatpush1.msra.mxu0 0.0
    %3493 = vmatprep.subr.mxu0 0.0
    %3494 = vmatpush1.msra.mxu0 0.0
    %3495 = vmatprep.subr.mxu0 0.0
    %3496 = vmatpush1.msra.mxu0 0.0
    %3497 = vmatprep.subr.mxu0 0.0
    %3498 = vmatpush1.msra.mxu0 0.0
    %3499 = vmatprep.subr.mxu0 0.0
    %3500 = vmatpush1.msra.mxu0 0.0
    %3501 = vmatprep.subr.mxu0 0.0
    %3502 = vmatpush1.msra.mxu0 0.0
    %3503 = vmatprep.subr.mxu0 0.0
    %3504 = vmatpush1.msra.mxu0 0.0
    %3505 = vmatprep.subr.mxu0 0.0
    %3506 = vmatpush1.msra.mxu0 0.0
    %3507 = vmatprep.subr.mxu0 0.0
    %3508 = vmatpush1.msra.mxu0 0.0
    %3509 = vmatprep.subr.mxu0 0.0
    %3510 = vmatpush1.msra.mxu0 0.0
    %3511 = vmatprep.subr.mxu0 0.0
    %3512 = vmatpush1.msra.mxu0 0.0
    %3513 = vmatprep.subr.mxu0 0.0
    %3514 = vmatpush1.msra.mxu0 0.0
    %3515 = vmatprep.subr.mxu0 0.0
    %3516 = vmatpush1.msra.mxu0 0.0
    %3517 = vmatprep.subr.mxu0 0.0
    %3518 = vmatpush1.msra.mxu0 0.0
    %3519 = vmatprep.subr.mxu0 0.0
    %3520 = vmatpush1.msra.mxu0 0.0
    %3521 = vmatprep.subr.mxu0 0.0
    %3522 = vmatpush1.msra.mxu0 0.0
    %3523 = vmatprep.mubr.f32.mxu0 0.0
    %3524 = vmatmul.mubr.f32.gmra.mrb[0].mxu0 %v2420
    %v3525 = vpop.f32.mrb[0].mxu0
    %v3526 = vadd.f32 %v3457, %v3525
    %v3527 = vpop.f32.mrb[0].mxu0
    %3528 = vmatprep.mubr.f32.mxu0 0.0
    %3529 = vmatmul.mubr.f32.gmra.mrb[0].mxu0 %v2423
    %v3530 = vpop.f32.mrb[0].mxu0
    %v3531 = vadd.f32 %v3457, %v3530
    %v3532 = vpop.f32.mrb[0].mxu0
    %3533 = vdwg.mxu0
    %v3534 = vxor.u32 %v3526, 2147483648
    %v3535 = vxor.u32 %v3531, 2147483648
    %v3536 = vmul.f32 %v3534, 1.442695
    %v3537 = vpow.pop %v3536
    %v3538 = vmul.f32 %v3535, 1.442695
    %v3539 = vpow.pop %v3538
    %v3540 = vadd.f32 %v3537, 1.0
    %v3541 = vadd.f32 %v3539, 1.0
    %v3542 = vrcp.pop %v3540
    %v3543 = vmul.f32 1.0, %v3542
    %v3544 = vrcp.pop %v3541
    %v3545 = vmul.f32 1.0, %v3544
    %v3546 = vmul.f32 %v3526, %v3543
    %v3547 = vmul.f32 %v3531, %v3545
    %v3548 = vld [vmem:[%s91] sm:$0xff]
    %v3549 = vld [vmem:[%s91 + $0x8] sm:$0xff]
    %v3550 = vld [vmem:[%s91 + $0x10] sm:$0xff]
    %v3551 = vld [vmem:[%s91 + $0x18] sm:$0xff]
    %v3552 = vld [vmem:[#allocation3] sm:$0x1]
    %v3554 = vlaneseq
    %v3555 = vshrl.u32 %v3554, 7
    %v3556 = vsub.s32 0, %v3555
    %v3557 = vrot.slane %v3552, %v3556
    %v3560 = vsel %vm1680, %v3546, 0
    %v3563 = vsel %vm1680, %v3547, 0
    %3565 = vmatprep.subr.mxu0 0.0
    %3566 = vmatpush1.msra.mxu0 %v3548
    %3567 = vmatprep.subr.mxu0 0.0
    %3568 = vmatpush1.msra.mxu0 %v3549
    %3569 = vmatprep.subr.mxu0 0.0
    %3570 = vmatpush1.msra.mxu0 %v3550
    %3571 = vmatprep.subr.mxu0 0.0
    %3572 = vmatpush1.msra.mxu0 %v3551
    %3573 = vmatprep.subr.mxu0 0.0
    %3574 = vmatpush1.msra.mxu0 0.0
    %3575 = vmatprep.subr.mxu0 0.0
    %3576 = vmatpush1.msra.mxu0 0.0
    %3577 = vmatprep.subr.mxu0 0.0
    %3578 = vmatpush1.msra.mxu0 0.0
    %3579 = vmatprep.subr.mxu0 0.0
    %3580 = vmatpush1.msra.mxu0 0.0
    %3581 = vmatprep.subr.mxu0 0.0
    %3582 = vmatpush1.msra.mxu0 0.0
    %3583 = vmatprep.subr.mxu0 0.0
    %3584 = vmatpush1.msra.mxu0 0.0
    %3585 = vmatprep.subr.mxu0 0.0
    %3586 = vmatpush1.msra.mxu0 0.0
    %3587 = vmatprep.subr.mxu0 0.0
    %3588 = vmatpush1.msra.mxu0 0.0
    %3589 = vmatprep.subr.mxu0 0.0
    %3590 = vmatpush1.msra.mxu0 0.0
    %3591 = vmatprep.subr.mxu0 0.0
    %3592 = vmatpush1.msra.mxu0 0.0
    %3593 = vmatprep.subr.mxu0 0.0
    %3594 = vmatpush1.msra.mxu0 0.0
    %3595 = vmatprep.subr.mxu0 0.0
    %3596 = vmatpush1.msra.mxu0 0.0
    %3597 = vmatprep.subr.mxu0 0.0
    %3598 = vmatpush1.msra.mxu0 0.0
    %3599 = vmatprep.subr.mxu0 0.0
    %3600 = vmatpush1.msra.mxu0 0.0
    %3601 = vmatprep.subr.mxu0 0.0
    %3602 = vmatpush1.msra.mxu0 0.0
    %3603 = vmatprep.subr.mxu0 0.0
    %3604 = vmatpush1.msra.mxu0 0.0
    %3605 = vmatprep.subr.mxu0 0.0
    %3606 = vmatpush1.msra.mxu0 0.0
    %3607 = vmatprep.subr.mxu0 0.0
    %3608 = vmatpush1.msra.mxu0 0.0
    %3609 = vmatprep.subr.mxu0 0.0
    %3610 = vmatpush1.msra.mxu0 0.0
    %3611 = vmatprep.subr.mxu0 0.0
    %3612 = vmatpush1.msra.mxu0 0.0
    %3613 = vmatprep.subr.mxu0 0.0
    %3614 = vmatpush1.msra.mxu0 0.0
    %3615 = vmatprep.subr.mxu0 0.0
    %3616 = vmatpush1.msra.mxu0 0.0
    %3617 = vmatprep.subr.mxu0 0.0
    %3618 = vmatpush1.msra.mxu0 0.0
    %3619 = vmatprep.subr.mxu0 0.0
    %3620 = vmatpush1.msra.mxu0 0.0
    %3621 = vmatprep.subr.mxu0 0.0
    %3622 = vmatpush1.msra.mxu0 0.0
    %3623 = vmatprep.subr.mxu0 0.0
    %3624 = vmatpush1.msra.mxu0 0.0
    %3625 = vmatprep.subr.mxu0 0.0
    %3626 = vmatpush1.msra.mxu0 0.0
    %3627 = vmatprep.subr.mxu0 0.0
    %3628 = vmatpush1.msra.mxu0 0.0
    %3629 = vmatprep.mubr.f32.mxu0 0.0
    %3630 = vmatmul.mubr.f32.gmra.mrb[0].mxu0 %v3560
    %v3631 = vpop.f32.mrb[0].mxu0
    %v3632 = vadd.f32 %v3557, %v3631
    %v3633 = vpop.f32.mrb[0].mxu0
    %3634 = vmatprep.mubr.f32.mxu0 0.0
    %3635 = vmatmul.mubr.f32.gmra.mrb[0].mxu0 %v3563
    %v3636 = vpop.f32.mrb[0].mxu0
    %v3637 = vadd.f32 %v3557, %v3636
    %v3638 = vpop.f32.mrb[0].mxu0
    %3639 = vdwg.mxu0
    %v3640 = vld [vmem:[%s95] sm:$0xff]
    %v3641 = vld [vmem:[%s95 + $0x8] sm:$0xff]
    %v3642 = vld [vmem:[%s95 + $0x10] sm:$0xff]
    %v3643 = vld [vmem:[%s95 + $0x18] sm:$0xff]
    %v3644 = vld [vmem:[#allocation30] sm:$0x1]
    %v3646 = vlaneseq
    %v3647 = vshrl.u32 %v3646, 7
    %v3648 = vsub.s32 0, %v3647
    %v3649 = vrot.slane %v3644, %v3648
    %v3652 = vsel %vm1680, %v2400, 0
    %v3655 = vsel %vm1680, %v2405, 0
    %3657 = vmatprep.subr.mxu0 0.0
    %3658 = vmatpush1.msra.mxu0 %v3640
    %3659 = vmatprep.subr.mxu0 0.0
    %3660 = vmatpush1.msra.mxu0 %v3641
    %3661 = vmatprep.subr.mxu0 0.0
    %3662 = vmatpush1.msra.mxu0 %v3642
    %3663 = vmatprep.subr.mxu0 0.0
    %3664 = vmatpush1.msra.mxu0 %v3643
    %3665 = vmatprep.subr.mxu0 0.0
    %3666 = vmatpush1.msra.mxu0 0.0
    %3667 = vmatprep.subr.mxu0 0.0
    %3668 = vmatpush1.msra.mxu0 0.0
    %3669 = vmatprep.subr.mxu0 0.0
    %3670 = vmatpush1.msra.mxu0 0.0
    %3671 = vmatprep.subr.mxu0 0.0
    %3672 = vmatpush1.msra.mxu0 0.0
    %3673 = vmatprep.subr.mxu0 0.0
    %3674 = vmatpush1.msra.mxu0 0.0
    %3675 = vmatprep.subr.mxu0 0.0
    %3676 = vmatpush1.msra.mxu0 0.0
    %3677 = vmatprep.subr.mxu0 0.0
    %3678 = vmatpush1.msra.mxu0 0.0
    %3679 = vmatprep.subr.mxu0 0.0
    %3680 = vmatpush1.msra.mxu0 0.0
    %3681 = vmatprep.subr.mxu0 0.0
    %3682 = vmatpush1.msra.mxu0 0.0
    %3683 = vmatprep.subr.mxu0 0.0
    %3684 = vmatpush1.msra.mxu0 0.0
    %3685 = vmatprep.subr.mxu0 0.0
    %3686 = vmatpush1.msra.mxu0 0.0
    %3687 = vmatprep.subr.mxu0 0.0
    %3688 = vmatpush1.msra.mxu0 0.0
    %3689 = vmatprep.subr.mxu0 0.0
    %3690 = vmatpush1.msra.mxu0 0.0
    %3691 = vmatprep.subr.mxu0 0.0
    %3692 = vmatpush1.msra.mxu0 0.0
    %3693 = vmatprep.subr.mxu0 0.0
    %3694 = vmatpush1.msra.mxu0 0.0
    %3695 = vmatprep.subr.mxu0 0.0
    %3696 = vmatpush1.msra.mxu0 0.0
    %3697 = vmatprep.subr.mxu0 0.0
    %3698 = vmatpush1.msra.mxu0 0.0
    %3699 = vmatprep.subr.mxu0 0.0
    %3700 = vmatpush1.msra.mxu0 0.0
    %3701 = vmatprep.subr.mxu0 0.0
    %3702 = vmatpush1.msra.mxu0 0.0
    %3703 = vmatprep.subr.mxu0 0.0
    %3704 = vmatpush1.msra.mxu0 0.0
    %3705 = vmatprep.subr.mxu0 0.0
    %3706 = vmatpush1.msra.mxu0 0.0
    %3707 = vmatprep.subr.mxu0 0.0
    %3708 = vmatpush1.msra.mxu0 0.0
    %3709 = vmatprep.subr.mxu0 0.0
    %3710 = vmatpush1.msra.mxu0 0.0
    %3711 = vmatprep.subr.mxu0 0.0
    %3712 = vmatpush1.msra.mxu0 0.0
    %3713 = vmatprep.subr.mxu0 0.0
    %3714 = vmatpush1.msra.mxu0 0.0
    %3715 = vmatprep.subr.mxu0 0.0
    %3716 = vmatpush1.msra.mxu0 0.0
    %3717 = vmatprep.subr.mxu0 0.0
    %3718 = vmatpush1.msra.mxu0 0.0
    %3719 = vmatprep.subr.mxu0 0.0
    %3720 = vmatpush1.msra.mxu0 0.0
    %3721 = vmatprep.mubr.f32.mxu0 0.0
    %3722 = vmatmul.mubr.f32.gmra.mrb[0].mxu0 %v3652
    %v3723 = vpop.f32.mrb[0].mxu0
    %v3724 = vadd.f32 %v3649, %v3723
    %v3725 = vpop.f32.mrb[0].mxu0
    %3726 = vmatprep.mubr.f32.mxu0 0.0
    %3727 = vmatmul.mubr.f32.gmra.mrb[0].mxu0 %v3655
    %v3728 = vpop.f32.mrb[0].mxu0
    %v3729 = vadd.f32 %v3649, %v3728
    %v3730 = vpop.f32.mrb[0].mxu0
    %3731 = vdwg.mxu0
    %v3732 = vxor.u32 %v3724, 2147483648
    %v3733 = vxor.u32 %v3729, 2147483648
    %v3734 = vmul.f32 %v3732, 1.442695
    %v3735 = vpow.pop %v3734
    %v3736 = vmul.f32 %v3733, 1.442695
    %v3737 = vpow.pop %v3736
    %v3738 = vadd.f32 %v3735, 1.0
    %v3739 = vadd.f32 %v3737, 1.0
    %v3740 = vrcp.pop %v3738
    %v3741 = vmul.f32 1.0, %v3740
    %v3742 = vrcp.pop %v3739
    %v3743 = vmul.f32 1.0, %v3742
    %v3744 = vmul.f32 %v3724, %v3741
    %v3745 = vmul.f32 %v3729, %v3743
    %v3746 = vld [vmem:[%s99] sm:$0xff]
    %v3747 = vld [vmem:[%s99 + $0x8] sm:$0xff]
    %v3748 = vld [vmem:[%s99 + $0x10] sm:$0xff]
    %v3749 = vld [vmem:[%s99 + $0x18] sm:$0xff]
    %v3750 = vld [vmem:[#allocation4] sm:$0x1]
    %v3752 = vlaneseq
    %v3753 = vshrl.u32 %v3752, 7
    %v3754 = vsub.s32 0, %v3753
    %v3755 = vrot.slane %v3750, %v3754
    %v3758 = vsel %vm1680, %v3744, 0
    %v3761 = vsel %vm1680, %v3745, 0
    %3763 = vmatprep.subr.mxu0 0.0
    %3764 = vmatpush1.msra.mxu0 %v3746
    %3765 = vmatprep.subr.mxu0 0.0
    %3766 = vmatpush1.msra.mxu0 %v3747
    %3767 = vmatprep.subr.mxu0 0.0
    %3768 = vmatpush1.msra.mxu0 %v3748
    %3769 = vmatprep.subr.mxu0 0.0
    %3770 = vmatpush1.msra.mxu0 %v3749
    %3771 = vmatprep.subr.mxu0 0.0
    %3772 = vmatpush1.msra.mxu0 0.0
    %3773 = vmatprep.subr.mxu0 0.0
    %3774 = vmatpush1.msra.mxu0 0.0
    %3775 = vmatprep.subr.mxu0 0.0
    %3776 = vmatpush1.msra.mxu0 0.0
    %3777 = vmatprep.subr.mxu0 0.0
    %3778 = vmatpush1.msra.mxu0 0.0
    %3779 = vmatprep.subr.mxu0 0.0
    %3780 = vmatpush1.msra.mxu0 0.0
    %3781 = vmatprep.subr.mxu0 0.0
    %3782 = vmatpush1.msra.mxu0 0.0
    %3783 = vmatprep.subr.mxu0 0.0
    %3784 = vmatpush1.msra.mxu0 0.0
    %3785 = vmatprep.subr.mxu0 0.0
    %3786 = vmatpush1.msra.mxu0 0.0
    %3787 = vmatprep.subr.mxu0 0.0
    %3788 = vmatpush1.msra.mxu0 0.0
    %3789 = vmatprep.subr.mxu0 0.0
    %3790 = vmatpush1.msra.mxu0 0.0
    %3791 = vmatprep.subr.mxu0 0.0
    %3792 = vmatpush1.msra.mxu0 0.0
    %3793 = vmatprep.subr.mxu0 0.0
    %3794 = vmatpush1.msra.mxu0 0.0
    %3795 = vmatprep.subr.mxu0 0.0
    %3796 = vmatpush1.msra.mxu0 0.0
    %3797 = vmatprep.subr.mxu0 0.0
    %3798 = vmatpush1.msra.mxu0 0.0
    %3799 = vmatprep.subr.mxu0 0.0
    %3800 = vmatpush1.msra.mxu0 0.0
    %3801 = vmatprep.subr.mxu0 0.0
    %3802 = vmatpush1.msra.mxu0 0.0
    %3803 = vmatprep.subr.mxu0 0.0
    %3804 = vmatpush1.msra.mxu0 0.0
    %3805 = vmatprep.subr.mxu0 0.0
    %3806 = vmatpush1.msra.mxu0 0.0
    %3807 = vmatprep.subr.mxu0 0.0
    %3808 = vmatpush1.msra.mxu0 0.0
    %3809 = vmatprep.subr.mxu0 0.0
    %3810 = vmatpush1.msra.mxu0 0.0
    %3811 = vmatprep.subr.mxu0 0.0
    %3812 = vmatpush1.msra.mxu0 0.0
    %3813 = vmatprep.subr.mxu0 0.0
    %3814 = vmatpush1.msra.mxu0 0.0
    %3815 = vmatprep.subr.mxu0 0.0
    %3816 = vmatpush1.msra.mxu0 0.0
    %3817 = vmatprep.subr.mxu0 0.0
    %3818 = vmatpush1.msra.mxu0 0.0
    %3819 = vmatprep.subr.mxu0 0.0
    %3820 = vmatpush1.msra.mxu0 0.0
    %3821 = vmatprep.subr.mxu0 0.0
    %3822 = vmatpush1.msra.mxu0 0.0
    %3823 = vmatprep.subr.mxu0 0.0
    %3824 = vmatpush1.msra.mxu0 0.0
    %3825 = vmatprep.subr.mxu0 0.0
    %3826 = vmatpush1.msra.mxu0 0.0
    %3827 = vmatprep.mubr.f32.mxu0 0.0
    %3828 = vmatmul.mubr.f32.gmra.mrb[0].mxu0 %v3758
    %v3829 = vpop.f32.mrb[0].mxu0
    %v3830 = vadd.f32 %v3755, %v3829
    %v3831 = vpop.f32.mrb[0].mxu0
    %3832 = vmatprep.mubr.f32.mxu0 0.0
    %3833 = vmatmul.mubr.f32.gmra.mrb[0].mxu0 %v3761
    %v3834 = vpop.f32.mrb[0].mxu0
    %v3835 = vadd.f32 %v3755, %v3834
    %v3836 = vpop.f32.mrb[0].mxu0
    %3837 = vdwg.mxu0
    %v3838 = vmul.f32 %v3632, %v3830
    %v3839 = vmul.f32 %v3637, %v3835
    %3841 = vset.pattern.permute.xlu0 0
    %3842 = vperm.xlu0 %3841, %v3838
    %v3843 = vpop.permute.xlu0 %3842
    %3846 = vset.pattern.permute.xlu0 0
    %3847 = vperm.xlu0 %3846, %v3839
    %v3848 = vpop.permute.xlu0 %3847
    %v3850 = vmul.f32 %v769, %v3843
    %v3851 = vmul.f32 %v771, %v3848
    %3852 = vmatprep.subr.mxu0 0.0
    %3853 = vmatpush1.msra.mxu0 %v3850
    %3854 = vmatprep.subr.mxu0 0.0
    %3855 = vmatpush1.msra.mxu0 %v3851
    %3856 = vmatprep.subr.mxu0 0.0
    %3857 = vmatpush1.msra.mxu0 0.0
    %3858 = vmatprep.subr.mxu0 0.0
    %3859 = vmatpush1.msra.mxu0 0.0
    %3860 = vmatprep.subr.mxu0 0.0
    %3861 = vmatpush1.msra.mxu0 0.0
    %3862 = vmatprep.subr.mxu0 0.0
    %3863 = vmatpush1.msra.mxu0 0.0
    %3864 = vmatprep.subr.mxu0 0.0
    %3865 = vmatpush1.msra.mxu0 0.0
    %3866 = vmatprep.subr.mxu0 0.0
    %3867 = vmatpush1.msra.mxu0 0.0
    %3868 = vmatprep.subr.mxu0 0.0
    %3869 = vmatpush1.msra.mxu0 0.0
    %3870 = vmatprep.subr.mxu0 0.0
    %3871 = vmatpush1.msra.mxu0 0.0
    %3872 = vmatprep.subr.mxu0 0.0
    %3873 = vmatpush1.msra.mxu0 0.0
    %3874 = vmatprep.subr.mxu0 0.0
    %3875 = vmatpush1.msra.mxu0 0.0
    %3876 = vmatprep.subr.mxu0 0.0
    %3877 = vmatpush1.msra.mxu0 0.0
    %3878 = vmatprep.subr.mxu0 0.0
    %3879 = vmatpush1.msra.mxu0 0.0
    %3880 = vmatprep.subr.mxu0 0.0
    %3881 = vmatpush1.msra.mxu0 0.0
    %3882 = vmatprep.subr.mxu0 0.0
    %3883 = vmatpush1.msra.mxu0 0.0
    %3884 = vmatprep.subr.mxu0 0.0
    %3885 = vmatpush1.msra.mxu0 0.0
    %3886 = vmatprep.subr.mxu0 0.0
    %3887 = vmatpush1.msra.mxu0 0.0
    %3888 = vmatprep.subr.mxu0 0.0
    %3889 = vmatpush1.msra.mxu0 0.0
    %3890 = vmatprep.subr.mxu0 0.0
    %3891 = vmatpush1.msra.mxu0 0.0
    %3892 = vmatprep.subr.mxu0 0.0
    %3893 = vmatpush1.msra.mxu0 0.0
    %3894 = vmatprep.subr.mxu0 0.0
    %3895 = vmatpush1.msra.mxu0 0.0
    %3896 = vmatprep.subr.mxu0 0.0
    %3897 = vmatpush1.msra.mxu0 0.0
    %3898 = vmatprep.subr.mxu0 0.0
    %3899 = vmatpush1.msra.mxu0 0.0
    %3900 = vmatprep.subr.mxu0 0.0
    %3901 = vmatpush1.msra.mxu0 0.0
    %3902 = vmatprep.subr.mxu0 0.0
    %3903 = vmatpush1.msra.mxu0 0.0
    %3904 = vmatprep.subr.mxu0 0.0
    %3905 = vmatpush1.msra.mxu0 0.0
    %3906 = vmatprep.subr.mxu0 0.0
    %3907 = vmatpush1.msra.mxu0 0.0
    %3908 = vmatprep.subr.mxu0 0.0
    %3909 = vmatpush1.msra.mxu0 0.0
    %3910 = vmatprep.subr.mxu0 0.0
    %3911 = vmatpush1.msra.mxu0 0.0
    %3912 = vmatprep.subr.mxu0 0.0
    %3913 = vmatpush1.msra.mxu0 0.0
    %3914 = vmatprep.subr.mxu0 0.0
    %3915 = vmatpush1.msra.mxu0 0.0
    %3916 = vmatprep.mubr.f32.mxu0 0.0
    %3917 = vmatmul.mubr.f32.gmra.mrb[0].mxu0 %v1051
    %v3918 = vpop.f32.mrb[0].mxu0
    %v3919 = vadd.f32 0.0, %v3918
    %v3920 = vpop.f32.mrb[0].mxu0
    %3921 = vdwg.mxu0
    %v3922 = vmul.f32 %v3919, %v565
    %v3923 = vmul.f32 %v515, 0.2
    %v3924 = vmul.f32 %v514, 0.8
    %v3925 = vadd.f32 %v3923, %v3924
    %v3926 = vadd.f32 %v3925, %v3922
    %3927 = vmatprep.subr.mxu0 0.0
    %3928 = vmatpush1.msra.mxu0 %v3440
    %3929 = vmatprep.subr.mxu0 0.0
    %3930 = vmatpush1.msra.mxu0 %v3445
    %3931 = vmatprep.subr.mxu0 0.0
    %3932 = vmatpush1.msra.mxu0 0.0
    %3933 = vmatprep.subr.mxu0 0.0
    %3934 = vmatpush1.msra.mxu0 0.0
    %3935 = vmatprep.subr.mxu0 0.0
    %3936 = vmatpush1.msra.mxu0 0.0
    %3937 = vmatprep.subr.mxu0 0.0
    %3938 = vmatpush1.msra.mxu0 0.0
    %3939 = vmatprep.subr.mxu0 0.0
    %3940 = vmatpush1.msra.mxu0 0.0
    %3941 = vmatprep.subr.mxu0 0.0
    %3942 = vmatpush1.msra.mxu0 0.0
    %3943 = vmatprep.subr.mxu0 0.0
    %3944 = vmatpush1.msra.mxu0 0.0
    %3945 = vmatprep.subr.mxu0 0.0
    %3946 = vmatpush1.msra.mxu0 0.0
    %3947 = vmatprep.subr.mxu0 0.0
    %3948 = vmatpush1.msra.mxu0 0.0
    %3949 = vmatprep.subr.mxu0 0.0
    %3950 = vmatpush1.msra.mxu0 0.0
    %3951 = vmatprep.subr.mxu0 0.0
    %3952 = vmatpush1.msra.mxu0 0.0
    %3953 = vmatprep.subr.mxu0 0.0
    %3954 = vmatpush1.msra.mxu0 0.0
    %3955 = vmatprep.subr.mxu0 0.0
    %3956 = vmatpush1.msra.mxu0 0.0
    %3957 = vmatprep.subr.mxu0 0.0
    %3958 = vmatpush1.msra.mxu0 0.0
    %3959 = vmatprep.subr.mxu0 0.0
    %3960 = vmatpush1.msra.mxu0 0.0
    %3961 = vmatprep.subr.mxu0 0.0
    %3962 = vmatpush1.msra.mxu0 0.0
    %3963 = vmatprep.subr.mxu0 0.0
    %3964 = vmatpush1.msra.mxu0 0.0
    %3965 = vmatprep.subr.mxu0 0.0
    %3966 = vmatpush1.msra.mxu0 0.0
    %3967 = vmatprep.subr.mxu0 0.0
    %3968 = vmatpush1.msra.mxu0 0.0
    %3969 = vmatprep.subr.mxu0 0.0
    %3970 = vmatpush1.msra.mxu0 0.0
    %3971 = vmatprep.subr.mxu0 0.0
    %3972 = vmatpush1.msra.mxu0 0.0
    %3973 = vmatprep.subr.mxu0 0.0
    %3974 = vmatpush1.msra.mxu0 0.0
    %3975 = vmatprep.subr.mxu0 0.0
    %3976 = vmatpush1.msra.mxu0 0.0
    %3977 = vmatprep.subr.mxu0 0.0
    %3978 = vmatpush1.msra.mxu0 0.0
    %3979 = vmatprep.subr.mxu0 0.0
    %3980 = vmatpush1.msra.mxu0 0.0
    %3981 = vmatprep.subr.mxu0 0.0
    %3982 = vmatpush1.msra.mxu0 0.0
    %3983 = vmatprep.subr.mxu0 0.0
    %3984 = vmatpush1.msra.mxu0 0.0
    %3985 = vmatprep.subr.mxu0 0.0
    %3986 = vmatpush1.msra.mxu0 0.0
    %3987 = vmatprep.subr.mxu0 0.0
    %3988 = vmatpush1.msra.mxu0 0.0
    %3989 = vmatprep.subr.mxu0 0.0
    %3990 = vmatpush1.msra.mxu0 0.0
    %3991 = vmatprep.mubr.f32.mxu0 0.0
    %3992 = vmatmul.mubr.f32.gmra.mrb[0].mxu0 %v1051
    %v3993 = vpop.f32.mrb[0].mxu0
    %v3994 = vadd.f32 0.0, %v3993
    %v3995 = vpop.f32.mrb[0].mxu0
    %3996 = vdwg.mxu0
    %v3997 = vmul.f32 %v3994, %v565
    %v3998 = vld [vmem:[#allocation31] sm:$0xff]
    %v3999 = vld [vmem:[#allocation31 + $0x8] sm:$0xff]
    %v4000 = vld [vmem:[#allocation31 + $0x10] sm:$0xff]
    %v4001 = vld [vmem:[#allocation31 + $0x18] sm:$0xff]
    %v4002 = vld [vmem:[#allocation33] sm:$0xff]
    %v4004 = vsel %vm566, %v516, 0
    %4006 = vmatprep.subr.mxu0 0.0
    %4007 = vmatpush1.msra.mxu0 %v4002
    %4008 = vmatprep.subr.mxu0 0.0
    %4009 = vmatpush1.msra.mxu0 0.0
    %4010 = vmatprep.subr.mxu0 0.0
    %4011 = vmatpush1.msra.mxu0 0.0
    %4012 = vmatprep.subr.mxu0 0.0
    %4013 = vmatpush1.msra.mxu0 0.0
    %4014 = vmatprep.subr.mxu0 0.0
    %4015 = vmatpush1.msra.mxu0 0.0
    %4016 = vmatprep.subr.mxu0 0.0
    %4017 = vmatpush1.msra.mxu0 0.0
    %4018 = vmatprep.subr.mxu0 0.0
    %4019 = vmatpush1.msra.mxu0 0.0
    %4020 = vmatprep.subr.mxu0 0.0
    %4021 = vmatpush1.msra.mxu0 0.0
    %4022 = vmatprep.subr.mxu0 0.0
    %4023 = vmatpush1.msra.mxu0 0.0
    %4024 = vmatprep.subr.mxu0 0.0
    %4025 = vmatpush1.msra.mxu0 0.0
    %4026 = vmatprep.subr.mxu0 0.0
    %4027 = vmatpush1.msra.mxu0 0.0
    %4028 = vmatprep.subr.mxu0 0.0
    %4029 = vmatpush1.msra.mxu0 0.0
    %4030 = vmatprep.subr.mxu0 0.0
    %4031 = vmatpush1.msra.mxu0 0.0
    %4032 = vmatprep.subr.mxu0 0.0
    %4033 = vmatpush1.msra.mxu0 0.0
    %4034 = vmatprep.subr.mxu0 0.0
    %4035 = vmatpush1.msra.mxu0 0.0
    %4036 = vmatprep.subr.mxu0 0.0
    %4037 = vmatpush1.msra.mxu0 0.0
    %4038 = vmatprep.subr.mxu0 0.0
    %4039 = vmatpush1.msra.mxu0 0.0
    %4040 = vmatprep.subr.mxu0 0.0
    %4041 = vmatpush1.msra.mxu0 0.0
    %4042 = vmatprep.subr.mxu0 0.0
    %4043 = vmatpush1.msra.mxu0 0.0
    %4044 = vmatprep.subr.mxu0 0.0
    %4045 = vmatpush1.msra.mxu0 0.0
    %4046 = vmatprep.subr.mxu0 0.0
    %4047 = vmatpush1.msra.mxu0 0.0
    %4048 = vmatprep.subr.mxu0 0.0
    %4049 = vmatpush1.msra.mxu0 0.0
    %4050 = vmatprep.subr.mxu0 0.0
    %4051 = vmatpush1.msra.mxu0 0.0
    %4052 = vmatprep.subr.mxu0 0.0
    %4053 = vmatpush1.msra.mxu0 0.0
    %4054 = vmatprep.subr.mxu0 0.0
    %4055 = vmatpush1.msra.mxu0 0.0
    %4056 = vmatprep.subr.mxu0 0.0
    %4057 = vmatpush1.msra.mxu0 0.0
    %4058 = vmatprep.subr.mxu0 0.0
    %4059 = vmatpush1.msra.mxu0 0.0
    %4060 = vmatprep.subr.mxu0 0.0
    %4061 = vmatpush1.msra.mxu0 0.0
    %4062 = vmatprep.subr.mxu0 0.0
    %4063 = vmatpush1.msra.mxu0 0.0
    %4064 = vmatprep.subr.mxu0 0.0
    %4065 = vmatpush1.msra.mxu0 0.0
    %4066 = vmatprep.subr.mxu0 0.0
    %4067 = vmatpush1.msra.mxu0 0.0
    %4068 = vmatprep.subr.mxu0 0.0
    %4069 = vmatpush1.msra.mxu0 0.0
    %4070 = vmatprep.mubr.f32.mxu0 0.0
    %4071 = vmatmul.mubr.f32.gmra.mrb[0].mxu0 %v4004
    %v4072 = vpop.f32.mrb[0].mxu0
    %v4073 = vadd.f32 0.0, %v4072
    %v4074 = vpop.f32.mrb[0].mxu0
    %4075 = vdwg.mxu0
    %v4077 = vsel %vm1680, %v513, 0
    %4079 = vmatprep.subr.mxu0 0.0
    %4080 = vmatpush1.msra.mxu0 %v3998
    %4081 = vmatprep.subr.mxu0 0.0
    %4082 = vmatpush1.msra.mxu0 %v3999
    %4083 = vmatprep.subr.mxu0 0.0
    %4084 = vmatpush1.msra.mxu0 %v4000
    %4085 = vmatprep.subr.mxu0 0.0
    %4086 = vmatpush1.msra.mxu0 %v4001
    %4087 = vmatprep.subr.mxu0 0.0
    %4088 = vmatpush1.msra.mxu0 0.0
    %4089 = vmatprep.subr.mxu0 0.0
    %4090 = vmatpush1.msra.mxu0 0.0
    %4091 = vmatprep.subr.mxu0 0.0
    %4092 = vmatpush1.msra.mxu0 0.0
    %4093 = vmatprep.subr.mxu0 0.0
    %4094 = vmatpush1.msra.mxu0 0.0
    %4095 = vmatprep.subr.mxu0 0.0
    %4096 = vmatpush1.msra.mxu0 0.0
    %4097 = vmatprep.subr.mxu0 0.0
    %4098 = vmatpush1.msra.mxu0 0.0
    %4099 = vmatprep.subr.mxu0 0.0
    %4100 = vmatpush1.msra.mxu0 0.0
    %4101 = vmatprep.subr.mxu0 0.0
    %4102 = vmatpush1.msra.mxu0 0.0
    %4103 = vmatprep.subr.mxu0 0.0
    %4104 = vmatpush1.msra.mxu0 0.0
    %4105 = vmatprep.subr.mxu0 0.0
    %4106 = vmatpush1.msra.mxu0 0.0
    %4107 = vmatprep.subr.mxu0 0.0
    %4108 = vmatpush1.msra.mxu0 0.0
    %4109 = vmatprep.subr.mxu0 0.0
    %4110 = vmatpush1.msra.mxu0 0.0
    %4111 = vmatprep.subr.mxu0 0.0
    %4112 = vmatpush1.msra.mxu0 0.0
    %4113 = vmatprep.subr.mxu0 0.0
    %4114 = vmatpush1.msra.mxu0 0.0
    %4115 = vmatprep.subr.mxu0 0.0
    %4116 = vmatpush1.msra.mxu0 0.0
    %4117 = vmatprep.subr.mxu0 0.0
    %4118 = vmatpush1.msra.mxu0 0.0
    %4119 = vmatprep.subr.mxu0 0.0
    %4120 = vmatpush1.msra.mxu0 0.0
    %4121 = vmatprep.subr.mxu0 0.0
    %4122 = vmatpush1.msra.mxu0 0.0
    %4123 = vmatprep.subr.mxu0 0.0
    %4124 = vmatpush1.msra.mxu0 0.0
    %4125 = vmatprep.subr.mxu0 0.0
    %4126 = vmatpush1.msra.mxu0 0.0
    %4127 = vmatprep.subr.mxu0 0.0
    %4128 = vmatpush1.msra.mxu0 0.0
    %4129 = vmatprep.subr.mxu0 0.0
    %4130 = vmatpush1.msra.mxu0 0.0
    %4131 = vmatprep.subr.mxu0 0.0
    %4132 = vmatpush1.msra.mxu0 0.0
    %4133 = vmatprep.subr.mxu0 0.0
    %4134 = vmatpush1.msra.mxu0 0.0
    %4135 = vmatprep.subr.mxu0 0.0
    %4136 = vmatpush1.msra.mxu0 0.0
    %4137 = vmatprep.subr.mxu0 0.0
    %4138 = vmatpush1.msra.mxu0 0.0
    %4139 = vmatprep.subr.mxu0 0.0
    %4140 = vmatpush1.msra.mxu0 0.0
    %4141 = vmatprep.subr.mxu0 0.0
    %4142 = vmatpush1.msra.mxu0 0.0
    %4143 = vmatprep.mubr.f32.mxu0 0.0
    %4144 = vmatmul.mubr.f32.gmra.mrb[0].mxu0 %v4077
    %v4145 = vpop.f32.mrb[0].mxu0
    %v4146 = vadd.f32 %v4073, %v4145
    %v4147 = vpop.f32.mrb[0].mxu0
    %4148 = vdwg.mxu0
    %v4149 = vld [vmem:[#allocation34] sm:$0xff]
    %v4150 = vld [vmem:[#allocation34 + $0x8] sm:$0xff]
    %v4151 = vld [vmem:[#allocation34 + $0x10] sm:$0xff]
    %v4152 = vld [vmem:[#allocation34 + $0x18] sm:$0xff]
    %v4154 = vsel %vm1680, %v3997, 0
    %4156 = vmatprep.subr.mxu0 0.0
    %4157 = vmatpush1.msra.mxu0 %v4149
    %4158 = vmatprep.subr.mxu0 0.0
    %4159 = vmatpush1.msra.mxu0 %v4150
    %4160 = vmatprep.subr.mxu0 0.0
    %4161 = vmatpush1.msra.mxu0 %v4151
    %4162 = vmatprep.subr.mxu0 0.0
    %4163 = vmatpush1.msra.mxu0 %v4152
    %4164 = vmatprep.subr.mxu0 0.0
    %4165 = vmatpush1.msra.mxu0 0.0
    %4166 = vmatprep.subr.mxu0 0.0
    %4167 = vmatpush1.msra.mxu0 0.0
    %4168 = vmatprep.subr.mxu0 0.0
    %4169 = vmatpush1.msra.mxu0 0.0
    %4170 = vmatprep.subr.mxu0 0.0
    %4171 = vmatpush1.msra.mxu0 0.0
    %4172 = vmatprep.subr.mxu0 0.0
    %4173 = vmatpush1.msra.mxu0 0.0
    %4174 = vmatprep.subr.mxu0 0.0
    %4175 = vmatpush1.msra.mxu0 0.0
    %4176 = vmatprep.subr.mxu0 0.0
    %4177 = vmatpush1.msra.mxu0 0.0
    %4178 = vmatprep.subr.mxu0 0.0
    %4179 = vmatpush1.msra.mxu0 0.0
    %4180 = vmatprep.subr.mxu0 0.0
    %4181 = vmatpush1.msra.mxu0 0.0
    %4182 = vmatprep.subr.mxu0 0.0
    %4183 = vmatpush1.msra.mxu0 0.0
    %4184 = vmatprep.subr.mxu0 0.0
    %4185 = vmatpush1.msra.mxu0 0.0
    %4186 = vmatprep.subr.mxu0 0.0
    %4187 = vmatpush1.msra.mxu0 0.0
    %4188 = vmatprep.subr.mxu0 0.0
    %4189 = vmatpush1.msra.mxu0 0.0
    %4190 = vmatprep.subr.mxu0 0.0
    %4191 = vmatpush1.msra.mxu0 0.0
    %4192 = vmatprep.subr.mxu0 0.0
    %4193 = vmatpush1.msra.mxu0 0.0
    %4194 = vmatprep.subr.mxu0 0.0
    %4195 = vmatpush1.msra.mxu0 0.0
    %4196 = vmatprep.subr.mxu0 0.0
    %4197 = vmatpush1.msra.mxu0 0.0
    %4198 = vmatprep.subr.mxu0 0.0
    %4199 = vmatpush1.msra.mxu0 0.0
    %4200 = vmatprep.subr.mxu0 0.0
    %4201 = vmatpush1.msra.mxu0 0.0
    %4202 = vmatprep.subr.mxu0 0.0
    %4203 = vmatpush1.msra.mxu0 0.0
    %4204 = vmatprep.subr.mxu0 0.0
    %4205 = vmatpush1.msra.mxu0 0.0
    %4206 = vmatprep.subr.mxu0 0.0
    %4207 = vmatpush1.msra.mxu0 0.0
    %4208 = vmatprep.subr.mxu0 0.0
    %4209 = vmatpush1.msra.mxu0 0.0
    %4210 = vmatprep.subr.mxu0 0.0
    %4211 = vmatpush1.msra.mxu0 0.0
    %4212 = vmatprep.subr.mxu0 0.0
    %4213 = vmatpush1.msra.mxu0 0.0
    %4214 = vmatprep.subr.mxu0 0.0
    %4215 = vmatpush1.msra.mxu0 0.0
    %4216 = vmatprep.subr.mxu0 0.0
    %4217 = vmatpush1.msra.mxu0 0.0
    %4218 = vmatprep.subr.mxu0 0.0
    %4219 = vmatpush1.msra.mxu0 0.0
    %4220 = vmatprep.mubr.f32.mxu0 0.0
    %4221 = vmatmul.mubr.f32.gmra.mrb[0].mxu0 %v4154
    %v4222 = vpop.f32.mrb[0].mxu0
    %v4223 = vadd.f32 0.0, %v4222
    %v4224 = vpop.f32.mrb[0].mxu0
    %4225 = vdwg.mxu0
    %v4226 = vadd.f32 %v4146, %v4223
    %v4227 = vld [vmem:[#allocation36] sm:$0x1]
    %v4229 = vlaneseq
    %v4230 = vshrl.u32 %v4229, 7
    %v4231 = vsub.s32 0, %v4230
    %v4232 = vrot.slane %v4227, %v4231
    %v4234 = vadd.f32 %v4226, %v4232
    %v4235 = vxor.u32 %v4234, 2147483648
    %v4236 = vmul.f32 %v4235, 1.442695
    %v4237 = vpow.pop %v4236
    %v4238 = vadd.f32 %v4237, 1.0
    %v4239 = vrcp.pop %v4238
    %v4240 = vmul.f32 1.0, %v4239
    %v4241 = vmul.f32 %v4234, %v4240
    %v4242 = vld [vmem:[#allocation37] sm:$0xff]
    %v4243 = vld [vmem:[#allocation37 + $0x8] sm:$0xff]
    %v4244 = vld [vmem:[#allocation37 + $0x10] sm:$0xff]
    %v4245 = vld [vmem:[#allocation37 + $0x18] sm:$0xff]
    %v4246 = vld [vmem:[#allocation39] sm:$0x1]
    %v4248 = vlaneseq
    %v4249 = vshrl.u32 %v4248, 7
    %v4250 = vsub.s32 0, %v4249
    %v4251 = vrot.slane %v4246, %v4250
    %v4254 = vsel %vm1680, %v4241, 0
    %4256 = vmatprep.subr.mxu0 0.0
    %4257 = vmatpush1.msra.mxu0 %v4242
    %4258 = vmatprep.subr.mxu0 0.0
    %4259 = vmatpush1.msra.mxu0 %v4243
    %4260 = vmatprep.subr.mxu0 0.0
    %4261 = vmatpush1.msra.mxu0 %v4244
    %4262 = vmatprep.subr.mxu0 0.0
    %4263 = vmatpush1.msra.mxu0 %v4245
    %4264 = vmatprep.subr.mxu0 0.0
    %4265 = vmatpush1.msra.mxu0 0.0
    %4266 = vmatprep.subr.mxu0 0.0
    %4267 = vmatpush1.msra.mxu0 0.0
    %4268 = vmatprep.subr.mxu0 0.0
    %4269 = vmatpush1.msra.mxu0 0.0
    %4270 = vmatprep.subr.mxu0 0.0
    %4271 = vmatpush1.msra.mxu0 0.0
    %4272 = vmatprep.subr.mxu0 0.0
    %4273 = vmatpush1.msra.mxu0 0.0
    %4274 = vmatprep.subr.mxu0 0.0
    %4275 = vmatpush1.msra.mxu0 0.0
    %4276 = vmatprep.subr.mxu0 0.0
    %4277 = vmatpush1.msra.mxu0 0.0
    %4278 = vmatprep.subr.mxu0 0.0
    %4279 = vmatpush1.msra.mxu0 0.0
    %4280 = vmatprep.subr.mxu0 0.0
    %4281 = vmatpush1.msra.mxu0 0.0
    %4282 = vmatprep.subr.mxu0 0.0
    %4283 = vmatpush1.msra.mxu0 0.0
    %4284 = vmatprep.subr.mxu0 0.0
    %4285 = vmatpush1.msra.mxu0 0.0
    %4286 = vmatprep.subr.mxu0 0.0
    %4287 = vmatpush1.msra.mxu0 0.0
    %4288 = vmatprep.subr.mxu0 0.0
    %4289 = vmatpush1.msra.mxu0 0.0
    %4290 = vmatprep.subr.mxu0 0.0
    %4291 = vmatpush1.msra.mxu0 0.0
    %4292 = vmatprep.subr.mxu0 0.0
    %4293 = vmatpush1.msra.mxu0 0.0
    %4294 = vmatprep.subr.mxu0 0.0
    %4295 = vmatpush1.msra.mxu0 0.0
    %4296 = vmatprep.subr.mxu0 0.0
    %4297 = vmatpush1.msra.mxu0 0.0
    %4298 = vmatprep.subr.mxu0 0.0
    %4299 = vmatpush1.msra.mxu0 0.0
    %4300 = vmatprep.subr.mxu0 0.0
    %4301 = vmatpush1.msra.mxu0 0.0
    %4302 = vmatprep.subr.mxu0 0.0
    %4303 = vmatpush1.msra.mxu0 0.0
    %4304 = vmatprep.subr.mxu0 0.0
    %4305 = vmatpush1.msra.mxu0 0.0
    %4306 = vmatprep.subr.mxu0 0.0
    %4307 = vmatpush1.msra.mxu0 0.0
    %4308 = vmatprep.subr.mxu0 0.0
    %4309 = vmatpush1.msra.mxu0 0.0
    %4310 = vmatprep.subr.mxu0 0.0
    %4311 = vmatpush1.msra.mxu0 0.0
    %4312 = vmatprep.subr.mxu0 0.0
    %4313 = vmatpush1.msra.mxu0 0.0
    %4314 = vmatprep.subr.mxu0 0.0
    %4315 = vmatpush1.msra.mxu0 0.0
    %4316 = vmatprep.subr.mxu0 0.0
    %4317 = vmatpush1.msra.mxu0 0.0
    %4318 = vmatprep.subr.mxu0 0.0
    %4319 = vmatpush1.msra.mxu0 0.0
    %4320 = vmatprep.mubr.f32.mxu0 0.0
    %4321 = vmatmul.mubr.f32.gmra.mrb[0].mxu0 %v4254
    %v4322 = vpop.f32.mrb[0].mxu0
    %v4323 = vadd.f32 %v4251, %v4322
    %v4324 = vpop.f32.mrb[0].mxu0
    %4325 = vdwg.mxu0
    %v4326 = vmul.f32 %v513, 0.2
    %v4327 = vmul.f32 %v4323, 0.8
    %v4328 = vadd.f32 %v4326, %v4327
    %v4330 = vsel %vm733, %v3926, 0
    %v4333 = vsel %vm797, %v558, 0
    %4335 = vmatprep.subr.mxu0 0.0
    %4336 = vmatpush1.msra.mxu0 %v4333
    %4337 = vmatprep.subr.mxu0 0.0
    %4338 = vmatpush1.msra.mxu0 0.0
    %4339 = vmatprep.subr.mxu0 0.0
    %4340 = vmatpush1.msra.mxu0 0.0
    %4341 = vmatprep.subr.mxu0 0.0
    %4342 = vmatpush1.msra.mxu0 0.0
    %4343 = vmatprep.subr.mxu0 0.0
    %4344 = vmatpush1.msra.mxu0 0.0
    %4345 = vmatprep.subr.mxu0 0.0
    %4346 = vmatpush1.msra.mxu0 0.0
    %4347 = vmatprep.subr.mxu0 0.0
    %4348 = vmatpush1.msra.mxu0 0.0
    %4349 = vmatprep.subr.mxu0 0.0
    %4350 = vmatpush1.msra.mxu0 0.0
    %4351 = vmatprep.subr.mxu0 0.0
    %4352 = vmatpush1.msra.mxu0 0.0
    %4353 = vmatprep.subr.mxu0 0.0
    %4354 = vmatpush1.msra.mxu0 0.0
    %4355 = vmatprep.subr.mxu0 0.0
    %4356 = vmatpush1.msra.mxu0 0.0
    %4357 = vmatprep.subr.mxu0 0.0
    %4358 = vmatpush1.msra.mxu0 0.0
    %4359 = vmatprep.subr.mxu0 0.0
    %4360 = vmatpush1.msra.mxu0 0.0
    %4361 = vmatprep.subr.mxu0 0.0
    %4362 = vmatpush1.msra.mxu0 0.0
    %4363 = vmatprep.subr.mxu0 0.0
    %4364 = vmatpush1.msra.mxu0 0.0
    %4365 = vmatprep.subr.mxu0 0.0
    %4366 = vmatpush1.msra.mxu0 0.0
    %4367 = vmatprep.subr.mxu0 0.0
    %4368 = vmatpush1.msra.mxu0 0.0
    %4369 = vmatprep.subr.mxu0 0.0
    %4370 = vmatpush1.msra.mxu0 0.0
    %4371 = vmatprep.subr.mxu0 0.0
    %4372 = vmatpush1.msra.mxu0 0.0
    %4373 = vmatprep.subr.mxu0 0.0
    %4374 = vmatpush1.msra.mxu0 0.0
    %4375 = vmatprep.subr.mxu0 0.0
    %4376 = vmatpush1.msra.mxu0 0.0
    %4377 = vmatprep.subr.mxu0 0.0
    %4378 = vmatpush1.msra.mxu0 0.0
    %4379 = vmatprep.subr.mxu0 0.0
    %4380 = vmatpush1.msra.mxu0 0.0
    %4381 = vmatprep.subr.mxu0 0.0
    %4382 = vmatpush1.msra.mxu0 0.0
    %4383 = vmatprep.subr.mxu0 0.0
    %4384 = vmatpush1.msra.mxu0 0.0
    %4385 = vmatprep.subr.mxu0 0.0
    %4386 = vmatpush1.msra.mxu0 0.0
    %4387 = vmatprep.subr.mxu0 0.0
    %4388 = vmatpush1.msra.mxu0 0.0
    %4389 = vmatprep.subr.mxu0 0.0
    %4390 = vmatpush1.msra.mxu0 0.0
    %4391 = vmatprep.subr.mxu0 0.0
    %4392 = vmatpush1.msra.mxu0 0.0
    %4393 = vmatprep.subr.mxu0 0.0
    %4394 = vmatpush1.msra.mxu0 0.0
    %4395 = vmatprep.subr.mxu0 0.0
    %4396 = vmatpush1.msra.mxu0 0.0
    %4397 = vmatprep.subr.mxu0 0.0
    %4398 = vmatpush1.msra.mxu0 0.0
    %4399 = vmatprep.mubr.f32.mxu0 0.0
    %4400 = vmatmul.mubr.f32.gmra.mrb[0].mxu0 %v4330
    %v4401 = vpop.f32.mrb[0].mxu0
    %v4402 = vadd.f32 0.0, %v4401
    %v4403 = vpop.f32.mrb[0].mxu0
    %4404 = vdwg.mxu0
    %v4406 = vsel %vm1680, %v4328, 0
    %4408 = vmatprep.subr.mxu0 0.0
    %4409 = vmatpush1.msra.mxu0 %v554
    %4410 = vmatprep.subr.mxu0 0.0
    %4411 = vmatpush1.msra.mxu0 %v555
    %4412 = vmatprep.subr.mxu0 0.0
    %4413 = vmatpush1.msra.mxu0 %v556
    %4414 = vmatprep.subr.mxu0 0.0
    %4415 = vmatpush1.msra.mxu0 %v557
    %4416 = vmatprep.subr.mxu0 0.0
    %4417 = vmatpush1.msra.mxu0 0.0
    %4418 = vmatprep.subr.mxu0 0.0
    %4419 = vmatpush1.msra.mxu0 0.0
    %4420 = vmatprep.subr.mxu0 0.0
    %4421 = vmatpush1.msra.mxu0 0.0
    %4422 = vmatprep.subr.mxu0 0.0
    %4423 = vmatpush1.msra.mxu0 0.0
    %4424 = vmatprep.subr.mxu0 0.0
    %4425 = vmatpush1.msra.mxu0 0.0
    %4426 = vmatprep.subr.mxu0 0.0
    %4427 = vmatpush1.msra.mxu0 0.0
    %4428 = vmatprep.subr.mxu0 0.0
    %4429 = vmatpush1.msra.mxu0 0.0
    %4430 = vmatprep.subr.mxu0 0.0
    %4431 = vmatpush1.msra.mxu0 0.0
    %4432 = vmatprep.subr.mxu0 0.0
    %4433 = vmatpush1.msra.mxu0 0.0
    %4434 = vmatprep.subr.mxu0 0.0
    %4435 = vmatpush1.msra.mxu0 0.0
    %4436 = vmatprep.subr.mxu0 0.0
    %4437 = vmatpush1.msra.mxu0 0.0
    %4438 = vmatprep.subr.mxu0 0.0
    %4439 = vmatpush1.msra.mxu0 0.0
    %4440 = vmatprep.subr.mxu0 0.0
    %4441 = vmatpush1.msra.mxu0 0.0
    %4442 = vmatprep.subr.mxu0 0.0
    %4443 = vmatpush1.msra.mxu0 0.0
    %4444 = vmatprep.subr.mxu0 0.0
    %4445 = vmatpush1.msra.mxu0 0.0
    %4446 = vmatprep.subr.mxu0 0.0
    %4447 = vmatpush1.msra.mxu0 0.0
    %4448 = vmatprep.subr.mxu0 0.0
    %4449 = vmatpush1.msra.mxu0 0.0
    %4450 = vmatprep.subr.mxu0 0.0
    %4451 = vmatpush1.msra.mxu0 0.0
    %4452 = vmatprep.subr.mxu0 0.0
    %4453 = vmatpush1.msra.mxu0 0.0
    %4454 = vmatprep.subr.mxu0 0.0
    %4455 = vmatpush1.msra.mxu0 0.0
    %4456 = vmatprep.subr.mxu0 0.0
    %4457 = vmatpush1.msra.mxu0 0.0
    %4458 = vmatprep.subr.mxu0 0.0
    %4459 = vmatpush1.msra.mxu0 0.0
    %4460 = vmatprep.subr.mxu0 0.0
    %4461 = vmatpush1.msra.mxu0 0.0
    %4462 = vmatprep.subr.mxu0 0.0
    %4463 = vmatpush1.msra.mxu0 0.0
    %4464 = vmatprep.subr.mxu0 0.0
    %4465 = vmatpush1.msra.mxu0 0.0
    %4466 = vmatprep.subr.mxu0 0.0
    %4467 = vmatpush1.msra.mxu0 0.0
    %4468 = vmatprep.subr.mxu0 0.0
    %4469 = vmatpush1.msra.mxu0 0.0
    %4470 = vmatprep.subr.mxu0 0.0
    %4471 = vmatpush1.msra.mxu0 0.0
    %4472 = vmatprep.mubr.f32.mxu0 0.0
    %4473 = vmatmul.mubr.f32.gmra.mrb[0].mxu0 %v4406
    %v4474 = vpop.f32.mrb[0].mxu0
    %v4475 = vadd.f32 %v4402, %v4474
    %v4476 = vpop.f32.mrb[0].mxu0
    %4477 = vdwg.mxu0
    %4478 = vst [vmem:[%s115] sm:$0xff] %v4475
    // Predicated region
    $region322: #{pta_egnn_forward.1} parent=1 // pred_check
      _
    $region323: #{pta_egnn_forward.1} parent=1 // pred_check_branch
      %4480 = sbr.rel (0) target = $region325
    $region324: #{pta_egnn_forward.1} parent=1 // pred_region
      _
    $region325: #{pta_egnn_forward.1} parent=1 // pred_fallthru
      _
    // Predicated region
    $region326: #{pta_egnn_forward.1} parent=1 // pred_check
      _
    $region327: #{pta_egnn_forward.1} parent=1 // pred_check_branch
      %4482 = sbr.rel (0) target = $region329
    $region328: #{pta_egnn_forward.1} parent=1 // pred_region
      _
    $region329: #{pta_egnn_forward.1} parent=1 // pred_fallthru
      _
    %4483 = vsyncpa [#allocation6], 1
    %4484 = vsyncpa [#allocation8], 1
    %4485 = vsyncpa [#allocation11], 1
    %4486 = vsyncpa [#allocation14], 1
    %4487 = vsyncpa [#allocation17], 1
    %4488 = vsyncpa [#allocation20], 1
    %4489 = vsyncpa [#allocation23], 1
    %4490 = vsyncpa [#allocation26], 1
    %4491 = vsyncpa [#allocation29], 1
    %4492 = vsyncpa [#allocation32], 1
    %4493 = vsyncpa [#allocation35], 1
    %4494 = vsyncpa [#allocation38], 1

</llo_original>
